<compile_context>
chip_gen: v7x
topology: tpu7x:2x2x1
jax: 0.10.0
libtpu: 0.0.40
codegen_flags: <defaults>
</compile_context>

<pallas_src>
import jax
import jax.numpy as jnp
from jax.experimental import pallas as pl
from jax.experimental.pallas import tpu as pltpu


CP = 128     # lane width for activations / conv channels (all Cout <= 96)
CIN1 = 8     # compact lane width for the single-channel network input
HALO = 8     # sublane-aligned halo, >= max conv half-width (K=9 -> pad 4)


def _round_up(x, m):
    return ((x + m - 1) // m) * m


# ---------------------------------------------------------------------------
# Fused forward kernel: conv stack + dense1 + dense2, activations in VMEM.
# ---------------------------------------------------------------------------
def _make_kernel(TB, L, LC, LP):
    """Builds the kernel for a batch tile of TB rows, true seq length L,
    padded center length LC (multiple of 8), scratch length LP = LC + 16."""
    M = TB * LC   # rows per batched conv matmul

    def kernel(x_ref,
               w1_ref, b1_ref, w2_ref, b2_ref,
               w3_ref, b3_ref, w4_ref, b4_ref,
               wd1_ref, bd1_ref, wd2_ref, bd2_ref,
               o_ref, act_ref):
        # Zero only the (aligned) halo rows each step; the center rows are
        # fully rewritten (all 128 lanes) by every layer.
        act_ref[:, 0:HALO, :] = jnp.zeros((TB, HALO, CP), jnp.float32)
        act_ref[:, HALO + LC:LP, :] = jnp.zeros((TB, LP - HALO - LC, CP),
                                                jnp.float32)

        def conv(in_ref, w_ref, b_ref, op_dtype):
            """Batched "same" Conv1d + ReLU over the whole (TB, LC) tile.

            Fused im2col: K shifted (TB*LC, Cin) x (Cin, CP) matmuls on the
            MXU, accumulated in f32.  Halo rows supply the zero padding;
            zero-padded weight rows neutralize channels >= Cin."""
            K, cin, _ = w_ref.shape
            p = (K - 1) // 2
            acc = jnp.zeros((M, CP), jnp.float32)
            for k in range(K):
                s = HALO - p + k                       # static shifted window
                xk = in_ref[:, s:s + LC, :].reshape(M, cin).astype(op_dtype)
                acc += jnp.dot(xk, w_ref[k], preferred_element_type=jnp.float32)
            out = jnp.maximum(acc + b_ref[...], 0.0)   # bias (1,CP) + ReLU
            if LC != L:
                # Rows beyond the true seq length must stay exactly zero so
                # they act as ConstantPad1d zeros for the next layer.
                row = jax.lax.broadcasted_iota(jnp.int32, (M, 1), 0)
                out = jnp.where((row % LC) < L, out, 0.0)
            return out

        # conv1: Cin=1, compact 8-lane input, f32 operands (accuracy is free
        # at this size).  conv2..4: read & rewrite the scratch center, bf16
        # operands with f32 accumulation.
        h = conv(x_ref, w1_ref, b1_ref, jnp.float32)
        act_ref[:, HALO:HALO + LC, :] = h.reshape(TB, LC, CP)
        for w_ref, b_ref in ((w2_ref, b2_ref), (w3_ref, b3_ref),
                             (w4_ref, b4_ref)):
            h = conv(act_ref, w_ref, b_ref, jnp.bfloat16)
            act_ref[:, HALO:HALO + LC, :] = h.reshape(TB, LC, CP)

        # dense1: the torch channel-major flatten (index = c*L + l) is folded
        # into wd1's (L, CP, OP1) layout, so dense1 is a sum over sequence
        # positions of (TB, CP) @ (CP, OP1) matmuls (M = TB rows each).
        OP1 = wd1_ref.shape[2]
        acc1 = jnp.zeros((TB, OP1), jnp.float32)
        for l in range(L):
            xl = act_ref[:, HALO + l, :].astype(jnp.bfloat16)      # (TB, CP)
            acc1 += jnp.dot(xl, wd1_ref[l], preferred_element_type=jnp.float32)
        y1 = jnp.maximum(acc1 + bd1_ref[...], 0.0)                 # ReLU, f32

        # dense2 fused epilogue: Linear(6L -> 35), kept in f32 (35-wide).
        y2 = jnp.dot(y1, wd2_ref[...],
                     preferred_element_type=jnp.float32) + bd2_ref[...]
        o_ref[0] = y2.astype(o_ref.dtype)

    return kernel


# ---------------------------------------------------------------------------
# Wrapper: batch-tiled grid (>= 2 steps when B > 1), resident weights.
# ---------------------------------------------------------------------------
def generator_b_forward(kp, x):
    """x: (B, 1, L) f32 -> (B, 35) f32 using the fused Pallas kernel."""
    B, _, L = x.shape
    LC = _round_up(L, 8)          # sublane-aligned center length
    LP = LC + 2 * HALO            # scratch length (8-row halos both sides)
    OP1 = kp["wd1"].shape[2]
    OP2 = kp["wd2"].shape[1]

    # Batch tile: guarantee >= 2 grid steps whenever B > 1 (both v7x
    # TensorCores busy); raise TB for large B so the conv matmul M = TB*LC
    # fills the MXU (M=256 matches the 256-row MXU on v6e/v7x).
    if B >= 32:
        TB = 16
    elif B >= 16:
        TB = 8
    else:
        TB = max(1, (B + 1) // 2)
    ngrid = -(-B // TB)
    BP = ngrid * TB

    # Compact channels-last input: 8 lanes (channel 0 real), zero halos.
    xp = jnp.zeros((BP, LP, CIN1), jnp.float32)
    xp = xp.at[:B, HALO:HALO + L, 0].set(x[:, 0, :].astype(jnp.float32))

    const3 = lambda i: (0, 0, 0)
    const2 = lambda i: (0, 0)
    in_specs = [pl.BlockSpec((TB, LP, CIN1), lambda i: (i, 0, 0))]
    args = [xp]
    for w, b in kp["conv"]:
        in_specs += [pl.BlockSpec(w.shape, const3), pl.BlockSpec(b.shape, const2)]
        args += [w, b]
    in_specs += [pl.BlockSpec(kp["wd1"].shape, const3),
                 pl.BlockSpec(kp["bd1"].shape, const2),
                 pl.BlockSpec(kp["wd2"].shape, const2),
                 pl.BlockSpec(kp["bd2"].shape, const2)]
    args += [kp["wd1"], kp["bd1"], kp["wd2"], kp["bd2"]]

    # Advisory cost estimate so XLA schedules the surrounding glue sensibly.
    conv_cfg = ((1, 24, 9), (24, 48, 7), (48, 72, 5), (72, 96, 3))
    flops = sum(2 * B * L * ci * k * co for ci, co, k in conv_cfg)
    flops += 2 * B * (96 * L) * (6 * L) + 2 * B * (6 * L) * 35
    bytes_accessed = sum(int(a.size) * a.dtype.itemsize for a in args)
    bytes_accessed += BP * OP2 * 4

    out = pl.pallas_call(
        _make_kernel(TB, L, LC, LP),
        out_shape=jax.ShapeDtypeStruct((ngrid, TB, OP2), jnp.float32),
        grid=(ngrid,),
        in_specs=in_specs,
        out_specs=pl.BlockSpec((1, TB, OP2), lambda i: (i, 0, 0)),
        scratch_shapes=[pltpu.VMEM((TB, LP, CP), jnp.float32)],
        compiler_params=pltpu.CompilerParams(
            dimension_semantics=("parallel",),
            vmem_limit_bytes=8 * 1024 * 1024),
        cost_estimate=pl.CostEstimate(flops=flops, transcendentals=0,
                                      bytes_accessed=bytes_accessed),
    )(*args)
    return out.reshape(BP, OP2)[:B, :35]


# ---------------------------------------------------------------------------
# Parameters: raw (PyTorch layout) + one-time kernel-layout preparation.
# ---------------------------------------------------------------------------
def init_params(key, seq_length):
    """Raw parameters in PyTorch layouts (Conv1d/Linear default-style init)."""
    conv_cfg = ((1, 24, 9), (24, 48, 7), (48, 72, 5), (72, 96, 3))
    conv = []
    for cin, cout, k in conv_cfg:
        key, kw, kb = jax.random.split(key, 3)
        s = 1.0 / float(cin * k) ** 0.5
        conv.append((jax.random.uniform(kw, (cout, cin, k), jnp.float32, -s, s),
                     jax.random.uniform(kb, (cout,), jnp.float32, -s, s)))
    in1, out1 = 96 * seq_length, 6 * seq_length
    key, kw1, kb1, kw2, kb2 = jax.random.split(key, 5)
    s1 = 1.0 / float(in1) ** 0.5
    dense1 = (jax.random.uniform(kw1, (out1, in1), jnp.float32, -s1, s1),
              jax.random.uniform(kb1, (out1,), jnp.float32, -s1, s1))
    s2 = 1.0 / float(out1) ** 0.5
    dense2 = (jax.random.uniform(kw2, (35, out1), jnp.float32, -s2, s2),
              jax.random.uniform(kb2, (35,), jnp.float32, -s2, s2))
    return {"conv": conv, "dense1": dense1, "dense2": dense2}, key


def prepare_params(raw, seq_length):
    """One-time pad / transpose / cast to the kernel layout (never re-done
    per forward pass).  conv1 + dense2 stay f32; conv2-4 + dense1 are bf16."""
    L = seq_length
    kconv = []
    for idx, (w, b) in enumerate(raw["conv"]):
        cout, cin, k = w.shape
        cinp = CIN1 if idx == 0 else CP
        wdt = jnp.float32 if idx == 0 else jnp.bfloat16
        wt = jnp.transpose(w, (2, 1, 0))                        # (K, Cin, Cout)
        wp = jnp.zeros((k, cinp, CP), jnp.float32).at[:, :cin, :cout].set(wt)
        bp = jnp.zeros((1, CP), jnp.float32).at[0, :cout].set(b)
        kconv.append((wp.astype(wdt), bp))

    w1, b1 = raw["dense1"]
    out1 = w1.shape[0]
    OP1 = _round_up(out1, 128)
    # torch flatten index is c*L + l (channel-major); fold it into the layout.
    w1p = jnp.transpose(w1.reshape(out1, 96, L), (2, 1, 0))     # (L, 96, out1)
    wd1 = jnp.zeros((L, CP, OP1), jnp.float32).at[:, :96, :out1].set(w1p)
    bd1 = jnp.zeros((1, OP1), jnp.float32).at[0, :out1].set(b1)

    w2, b2 = raw["dense2"]
    out2 = w2.shape[0]
    OP2 = _round_up(out2, 128)
    wd2 = jnp.zeros((OP1, OP2), jnp.float32).at[:out1, :out2].set(w2.T)
    bd2 = jnp.zeros((1, OP2), jnp.float32).at[0, :out2].set(b2)

    return {"conv": kconv,
            "wd1": wd1.astype(jnp.bfloat16), "bd1": bd1,
            "wd2": wd2, "bd2": bd2}          # wd2 stays f32 (35-wide epilogue)


# ---------------------------------------------------------------------------
# Plain-JAX f32 reference (mirrors the PyTorch module) for a sanity check.
# ---------------------------------------------------------------------------
def reference_forward(raw, x):
    h = x.astype(jnp.float32)
    for (w, b) in raw["conv"]:
        cout, cin, k = w.shape
        p = (k - 1) // 2
        L = h.shape[2]
        hp = jnp.pad(h, ((0, 0), (0, 0), (p, p)))
        acc = jnp.broadcast_to(b[None, :, None],
                               (h.shape[0], cout, L)).astype(jnp.float32)
        for t in range(k):
            acc = acc + jnp.einsum('bcl,oc->bol', hp[:, :, t:t + L], w[:, :, t])
        h = jnp.maximum(acc, 0.0)
    flat = h.reshape(h.shape[0], -1)                 # channel-major, as torch
    w1, b1 = raw["dense1"]
    h1 = jnp.maximum(flat @ w1.T + b1, 0.0)
    w2, b2 = raw["dense2"]
    return (h1 @ w2.T + b2).reshape(-1, 35)


if __name__ == "__main__":
    appliance_length = 16    # seq_length
    mains_length = 16        # stored by the torch module but unused in forward
    batch = 2

    key = jax.random.PRNGKey(0)
    raw, key = init_params(key, appliance_length)
    kparams = prepare_params(raw, appliance_length)

    key, kx = jax.random.split(key)
    x = jax.random.normal(kx, (batch, 1, appliance_length), jnp.float32)

    fwd = jax.jit(generator_b_forward)
    out = jax.block_until_ready(fwd(kparams, x))

    assert out.shape == (batch, 35), out.shape
    assert out.dtype == jnp.float32

    # Sanity check vs. the plain-JAX f32 reference (conv2-4 / dense1 matmuls
    # use bf16 operands with f32 accumulation, hence the loose tolerance).
    ref = reference_forward(raw, x)
    rel_err = float(jnp.max(jnp.abs(out - ref)) / (jnp.max(jnp.abs(ref)) + 1e-8))
    assert rel_err < 0.1, f"relative error too large: {rel_err}"

    print("KERNEL_OK")
</pallas_src>

<mosaic_0001>
module attributes {stable_mosaic.version = 11 : i64} {
  func.func @kernel(%arg0: i32, %arg1: memref<1x32x8xf32, #tpu.memory_space<vmem>>, %arg2: memref<9x8x128xf32, #tpu.memory_space<vmem>>, %arg3: memref<1x128xf32, #tpu.memory_space<vmem>>, %arg4: memref<7x128x128xbf16, #tpu.memory_space<vmem>>, %arg5: memref<1x128xf32, #tpu.memory_space<vmem>>, %arg6: memref<5x128x128xbf16, #tpu.memory_space<vmem>>, %arg7: memref<1x128xf32, #tpu.memory_space<vmem>>, %arg8: memref<3x128x128xbf16, #tpu.memory_space<vmem>>, %arg9: memref<1x128xf32, #tpu.memory_space<vmem>>, %arg10: memref<16x128x128xbf16, #tpu.memory_space<vmem>>, %arg11: memref<1x128xf32, #tpu.memory_space<vmem>>, %arg12: memref<128x128xf32, #tpu.memory_space<vmem>>, %arg13: memref<1x128xf32, #tpu.memory_space<vmem>>, %arg14: memref<1x1x128xf32, #tpu.memory_space<vmem>>, %arg15: memref<1x32x128xf32, #tpu.memory_space<vmem>>) attributes {dimension_semantics = [#tpu.dimension_semantics<parallel>], iteration_bounds = array<i64: 2>, scalar_prefetch = 0 : i64, scratch_operands = 1 : i64, tpu.core_type = #tpu.core_type<tc>, window_params = [{transform_indices = @transform_0, window_bounds = array<i64: 1, 32, 8>}, {pipeline_mode = #tpu.pipeline_mode<synchronous>, transform_indices = @transform_1, window_bounds = array<i64: 9, 8, 128>}, {pipeline_mode = #tpu.pipeline_mode<synchronous>, transform_indices = @transform_2, window_bounds = array<i64: 1, 128>}, {pipeline_mode = #tpu.pipeline_mode<synchronous>, transform_indices = @transform_3, window_bounds = array<i64: 7, 128, 128>}, {pipeline_mode = #tpu.pipeline_mode<synchronous>, transform_indices = @transform_4, window_bounds = array<i64: 1, 128>}, {pipeline_mode = #tpu.pipeline_mode<synchronous>, transform_indices = @transform_5, window_bounds = array<i64: 5, 128, 128>}, {pipeline_mode = #tpu.pipeline_mode<synchronous>, transform_indices = @transform_6, window_bounds = array<i64: 1, 128>}, {pipeline_mode = #tpu.pipeline_mode<synchronous>, transform_indices = @transform_7, window_bounds = array<i64: 3, 128, 128>}, {pipeline_mode = #tpu.pipeline_mode<synchronous>, transform_indices = @transform_8, window_bounds = array<i64: 1, 128>}, {pipeline_mode = #tpu.pipeline_mode<synchronous>, transform_indices = @transform_9, window_bounds = array<i64: 16, 128, 128>}, {pipeline_mode = #tpu.pipeline_mode<synchronous>, transform_indices = @transform_10, window_bounds = array<i64: 1, 128>}, {pipeline_mode = #tpu.pipeline_mode<synchronous>, transform_indices = @transform_11, window_bounds = array<i64: 128, 128>}, {pipeline_mode = #tpu.pipeline_mode<synchronous>, transform_indices = @transform_12, window_bounds = array<i64: 1, 128>}, {transform_indices = @transform_13, window_bounds = array<i64: 1, 1, 128>}]} {
    %cst = arith.constant 0.000000e+00 : f32
    %0 = vector.broadcast %cst : f32 to vector<1x8x128xf32>
    %c0 = arith.constant 0 : index
    %c0_0 = arith.constant 0 : index
    %c0_1 = arith.constant 0 : index
    %1 = vector.load %arg15[%c0, %c0_0, %c0_1] : memref<1x32x128xf32, #tpu.memory_space<vmem>>, vector<1x8x128xf32>
    tpu.vector_store %arg15[%c0, %c0_0, %c0_1], %0 {strides = array<i32>} : memref<1x32x128xf32, #tpu.memory_space<vmem>>, vector<1x8x128xf32>,
    %cst_2 = arith.constant 0.000000e+00 : f32
    %2 = vector.broadcast %cst_2 : f32 to vector<1x8x128xf32>
    %c0_3 = arith.constant 0 : index
    %c24 = arith.constant 24 : index
    %c0_4 = arith.constant 0 : index
    %3 = vector.load %arg15[%c0_3, %c24, %c0_4] : memref<1x32x128xf32, #tpu.memory_space<vmem>>, vector<1x8x128xf32>
    tpu.vector_store %arg15[%c0_3, %c24, %c0_4], %2 {strides = array<i32>} : memref<1x32x128xf32, #tpu.memory_space<vmem>>, vector<1x8x128xf32>,
    %cst_5 = arith.constant 0.000000e+00 : f32
    %4 = vector.broadcast %cst_5 : f32 to vector<16x128xf32>
    %c0_6 = arith.constant 0 : index
    %c4 = arith.constant 4 : index
    %c0_7 = arith.constant 0 : index
    %5 = vector.load %arg1[%c0_6, %c4, %c0_7] : memref<1x32x8xf32, #tpu.memory_space<vmem>>, vector<1x16x8xf32>
    %6 = vector.shape_cast %5 : vector<1x16x8xf32> to vector<16x8xf32>
    %c0_8 = arith.constant 0 : index
    %c0_9 = arith.constant 0 : index
    %c0_10 = arith.constant 0 : index
    %7 = vector.load %arg2[%c0_8, %c0_9, %c0_10] : memref<9x8x128xf32, #tpu.memory_space<vmem>>, vector<1x8x128xf32>
    %8 = vector.shape_cast %7 : vector<1x8x128xf32> to vector<8x128xf32>
    %cst_11 = arith.constant dense<0.000000e+00> : vector<16x128xf32>
    %9 = tpu.matmul %6, %8, %cst_11 {dimension_numbers = #tpu.dot_dimension_numbers<[1], [0], [0], [1], [0, 0, 1, 1], [], []>} : vector<16x8xf32>, vector<8x128xf32>, vector<16x128xf32> -> vector<16x128xf32>
    %10 = arith.addf %4, %9 : vector<16x128xf32>
    %c0_12 = arith.constant 0 : index
    %c5 = arith.constant 5 : index
    %c0_13 = arith.constant 0 : index
    %11 = vector.load %arg1[%c0_12, %c5, %c0_13] : memref<1x32x8xf32, #tpu.memory_space<vmem>>, vector<1x16x8xf32>
    %12 = vector.shape_cast %11 : vector<1x16x8xf32> to vector<16x8xf32>
    %c1 = arith.constant 1 : index
    %c0_14 = arith.constant 0 : index
    %c0_15 = arith.constant 0 : index
    %13 = vector.load %arg2[%c1, %c0_14, %c0_15] : memref<9x8x128xf32, #tpu.memory_space<vmem>>, vector<1x8x128xf32>
    %14 = vector.shape_cast %13 : vector<1x8x128xf32> to vector<8x128xf32>
    %cst_16 = arith.constant dense<0.000000e+00> : vector<16x128xf32>
    %15 = tpu.matmul %12, %14, %cst_16 {dimension_numbers = #tpu.dot_dimension_numbers<[1], [0], [0], [1], [0, 0, 1, 1], [], []>} : vector<16x8xf32>, vector<8x128xf32>, vector<16x128xf32> -> vector<16x128xf32>
    %16 = arith.addf %10, %15 : vector<16x128xf32>
    %c0_17 = arith.constant 0 : index
    %c6 = arith.constant 6 : index
    %c0_18 = arith.constant 0 : index
    %17 = vector.load %arg1[%c0_17, %c6, %c0_18] : memref<1x32x8xf32, #tpu.memory_space<vmem>>, vector<1x16x8xf32>
    %18 = vector.shape_cast %17 : vector<1x16x8xf32> to vector<16x8xf32>
    %c2 = arith.constant 2 : index
    %c0_19 = arith.constant 0 : index
    %c0_20 = arith.constant 0 : index
    %19 = vector.load %arg2[%c2, %c0_19, %c0_20] : memref<9x8x128xf32, #tpu.memory_space<vmem>>, vector<1x8x128xf32>
    %20 = vector.shape_cast %19 : vector<1x8x128xf32> to vector<8x128xf32>
    %cst_21 = arith.constant dense<0.000000e+00> : vector<16x128xf32>
    %21 = tpu.matmul %18, %20, %cst_21 {dimension_numbers = #tpu.dot_dimension_numbers<[1], [0], [0], [1], [0, 0, 1, 1], [], []>} : vector<16x8xf32>, vector<8x128xf32>, vector<16x128xf32> -> vector<16x128xf32>
    %22 = arith.addf %16, %21 : vector<16x128xf32>
    %c0_22 = arith.constant 0 : index
    %c7 = arith.constant 7 : index
    %c0_23 = arith.constant 0 : index
    %23 = vector.load %arg1[%c0_22, %c7, %c0_23] : memref<1x32x8xf32, #tpu.memory_space<vmem>>, vector<1x16x8xf32>
    %24 = vector.shape_cast %23 : vector<1x16x8xf32> to vector<16x8xf32>
    %c3 = arith.constant 3 : index
    %c0_24 = arith.constant 0 : index
    %c0_25 = arith.constant 0 : index
    %25 = vector.load %arg2[%c3, %c0_24, %c0_25] : memref<9x8x128xf32, #tpu.memory_space<vmem>>, vector<1x8x128xf32>
    %26 = vector.shape_cast %25 : vector<1x8x128xf32> to vector<8x128xf32>
    %cst_26 = arith.constant dense<0.000000e+00> : vector<16x128xf32>
    %27 = tpu.matmul %24, %26, %cst_26 {dimension_numbers = #tpu.dot_dimension_numbers<[1], [0], [0], [1], [0, 0, 1, 1], [], []>} : vector<16x8xf32>, vector<8x128xf32>, vector<16x128xf32> -> vector<16x128xf32>
    %28 = arith.addf %22, %27 : vector<16x128xf32>
    %c0_27 = arith.constant 0 : index
    %c8 = arith.constant 8 : index
    %c0_28 = arith.constant 0 : index
    %29 = vector.load %arg1[%c0_27, %c8, %c0_28] : memref<1x32x8xf32, #tpu.memory_space<vmem>>, vector<1x16x8xf32>
    %30 = vector.shape_cast %29 : vector<1x16x8xf32> to vector<16x8xf32>
    %c4_29 = arith.constant 4 : index
    %c0_30 = arith.constant 0 : index
    %c0_31 = arith.constant 0 : index
    %31 = vector.load %arg2[%c4_29, %c0_30, %c0_31] : memref<9x8x128xf32, #tpu.memory_space<vmem>>, vector<1x8x128xf32>
    %32 = vector.shape_cast %31 : vector<1x8x128xf32> to vector<8x128xf32>
    %cst_32 = arith.constant dense<0.000000e+00> : vector<16x128xf32>
    %33 = tpu.matmul %30, %32, %cst_32 {dimension_numbers = #tpu.dot_dimension_numbers<[1], [0], [0], [1], [0, 0, 1, 1], [], []>} : vector<16x8xf32>, vector<8x128xf32>, vector<16x128xf32> -> vector<16x128xf32>
    %34 = arith.addf %28, %33 : vector<16x128xf32>
    %c0_33 = arith.constant 0 : index
    %c9 = arith.constant 9 : index
    %c0_34 = arith.constant 0 : index
    %35 = vector.load %arg1[%c0_33, %c9, %c0_34] : memref<1x32x8xf32, #tpu.memory_space<vmem>>, vector<1x16x8xf32>
    %36 = vector.shape_cast %35 : vector<1x16x8xf32> to vector<16x8xf32>
    %c5_35 = arith.constant 5 : index
    %c0_36 = arith.constant 0 : index
    %c0_37 = arith.constant 0 : index
    %37 = vector.load %arg2[%c5_35, %c0_36, %c0_37] : memref<9x8x128xf32, #tpu.memory_space<vmem>>, vector<1x8x128xf32>
    %38 = vector.shape_cast %37 : vector<1x8x128xf32> to vector<8x128xf32>
    %cst_38 = arith.constant dense<0.000000e+00> : vector<16x128xf32>
    %39 = tpu.matmul %36, %38, %cst_38 {dimension_numbers = #tpu.dot_dimension_numbers<[1], [0], [0], [1], [0, 0, 1, 1], [], []>} : vector<16x8xf32>, vector<8x128xf32>, vector<16x128xf32> -> vector<16x128xf32>
    %40 = arith.addf %34, %39 : vector<16x128xf32>
    %c0_39 = arith.constant 0 : index
    %c10 = arith.constant 10 : index
    %c0_40 = arith.constant 0 : index
    %41 = vector.load %arg1[%c0_39, %c10, %c0_40] : memref<1x32x8xf32, #tpu.memory_space<vmem>>, vector<1x16x8xf32>
    %42 = vector.shape_cast %41 : vector<1x16x8xf32> to vector<16x8xf32>
    %c6_41 = arith.constant 6 : index
    %c0_42 = arith.constant 0 : index
    %c0_43 = arith.constant 0 : index
    %43 = vector.load %arg2[%c6_41, %c0_42, %c0_43] : memref<9x8x128xf32, #tpu.memory_space<vmem>>, vector<1x8x128xf32>
    %44 = vector.shape_cast %43 : vector<1x8x128xf32> to vector<8x128xf32>
    %cst_44 = arith.constant dense<0.000000e+00> : vector<16x128xf32>
    %45 = tpu.matmul %42, %44, %cst_44 {dimension_numbers = #tpu.dot_dimension_numbers<[1], [0], [0], [1], [0, 0, 1, 1], [], []>} : vector<16x8xf32>, vector<8x128xf32>, vector<16x128xf32> -> vector<16x128xf32>
    %46 = arith.addf %40, %45 : vector<16x128xf32>
    %c0_45 = arith.constant 0 : index
    %c11 = arith.constant 11 : index
    %c0_46 = arith.constant 0 : index
    %47 = vector.load %arg1[%c0_45, %c11, %c0_46] : memref<1x32x8xf32, #tpu.memory_space<vmem>>, vector<1x16x8xf32>
    %48 = vector.shape_cast %47 : vector<1x16x8xf32> to vector<16x8xf32>
    %c7_47 = arith.constant 7 : index
    %c0_48 = arith.constant 0 : index
    %c0_49 = arith.constant 0 : index
    %49 = vector.load %arg2[%c7_47, %c0_48, %c0_49] : memref<9x8x128xf32, #tpu.memory_space<vmem>>, vector<1x8x128xf32>
    %50 = vector.shape_cast %49 : vector<1x8x128xf32> to vector<8x128xf32>
    %cst_50 = arith.constant dense<0.000000e+00> : vector<16x128xf32>
    %51 = tpu.matmul %48, %50, %cst_50 {dimension_numbers = #tpu.dot_dimension_numbers<[1], [0], [0], [1], [0, 0, 1, 1], [], []>} : vector<16x8xf32>, vector<8x128xf32>, vector<16x128xf32> -> vector<16x128xf32>
    %52 = arith.addf %46, %51 : vector<16x128xf32>
    %c0_51 = arith.constant 0 : index
    %c12 = arith.constant 12 : index
    %c0_52 = arith.constant 0 : index
    %53 = vector.load %arg1[%c0_51, %c12, %c0_52] : memref<1x32x8xf32, #tpu.memory_space<vmem>>, vector<1x16x8xf32>
    %54 = vector.shape_cast %53 : vector<1x16x8xf32> to vector<16x8xf32>
    %c8_53 = arith.constant 8 : index
    %c0_54 = arith.constant 0 : index
    %c0_55 = arith.constant 0 : index
    %55 = vector.load %arg2[%c8_53, %c0_54, %c0_55] : memref<9x8x128xf32, #tpu.memory_space<vmem>>, vector<1x8x128xf32>
    %56 = vector.shape_cast %55 : vector<1x8x128xf32> to vector<8x128xf32>
    %cst_56 = arith.constant dense<0.000000e+00> : vector<16x128xf32>
    %57 = tpu.matmul %54, %56, %cst_56 {dimension_numbers = #tpu.dot_dimension_numbers<[1], [0], [0], [1], [0, 0, 1, 1], [], []>} : vector<16x8xf32>, vector<8x128xf32>, vector<16x128xf32> -> vector<16x128xf32>
    %58 = arith.addf %52, %57 : vector<16x128xf32>
    %c0_57 = arith.constant 0 : index
    %c0_58 = arith.constant 0 : index
    %59 = vector.load %arg3[%c0_57, %c0_58] : memref<1x128xf32, #tpu.memory_space<vmem>>, vector<1x128xf32>
    %60 = vector.broadcast %59 : vector<1x128xf32> to vector<16x128xf32>
    %61 = arith.addf %58, %60 : vector<16x128xf32>
    %cst_59 = arith.constant 0.000000e+00 : f32
    %62 = vector.broadcast %cst_59 : f32 to vector<16x128xf32>
    %63 = arith.maximumf %61, %62 : vector<16x128xf32>
    %64 = vector.shape_cast %63 : vector<16x128xf32> to vector<1x16x128xf32>
    %c0_60 = arith.constant 0 : index
    %c8_61 = arith.constant 8 : index
    %c0_62 = arith.constant 0 : index
    %65 = vector.load %arg15[%c0_60, %c8_61, %c0_62] : memref<1x32x128xf32, #tpu.memory_space<vmem>>, vector<1x16x128xf32>
    tpu.vector_store %arg15[%c0_60, %c8_61, %c0_62], %64 {strides = array<i32>} : memref<1x32x128xf32, #tpu.memory_space<vmem>>, vector<1x16x128xf32>,
    %cst_63 = arith.constant 0.000000e+00 : f32
    %66 = vector.broadcast %cst_63 : f32 to vector<16x128xf32>
    %c0_64 = arith.constant 0 : index
    %c5_65 = arith.constant 5 : index
    %c0_66 = arith.constant 0 : index
    %67 = vector.load %arg15[%c0_64, %c5_65, %c0_66] : memref<1x32x128xf32, #tpu.memory_space<vmem>>, vector<1x16x128xf32>
    %68 = vector.shape_cast %67 : vector<1x16x128xf32> to vector<16x128xf32>
    %69 = arith.truncf %68 : vector<16x128xf32> to vector<16x128xbf16>
    %c0_67 = arith.constant 0 : index
    %c0_68 = arith.constant 0 : index
    %c0_69 = arith.constant 0 : index
    %70 = vector.load %arg4[%c0_67, %c0_68, %c0_69] : memref<7x128x128xbf16, #tpu.memory_space<vmem>>, vector<1x128x128xbf16>
    %71 = vector.shape_cast %70 : vector<1x128x128xbf16> to vector<128x128xbf16>
    %cst_70 = arith.constant dense<0.000000e+00> : vector<16x128xf32>
    %72 = tpu.matmul %69, %71, %cst_70 {dimension_numbers = #tpu.dot_dimension_numbers<[1], [0], [0], [1], [0, 0, 1, 1], [], []>} : vector<16x128xbf16>, vector<128x128xbf16>, vector<16x128xf32> -> vector<16x128xf32>
    %73 = arith.addf %66, %72 : vector<16x128xf32>
    %c0_71 = arith.constant 0 : index
    %c6_72 = arith.constant 6 : index
    %c0_73 = arith.constant 0 : index
    %74 = vector.load %arg15[%c0_71, %c6_72, %c0_73] : memref<1x32x128xf32, #tpu.memory_space<vmem>>, vector<1x16x128xf32>
    %75 = vector.shape_cast %74 : vector<1x16x128xf32> to vector<16x128xf32>
    %76 = arith.truncf %75 : vector<16x128xf32> to vector<16x128xbf16>
    %c1_74 = arith.constant 1 : index
    %c0_75 = arith.constant 0 : index
    %c0_76 = arith.constant 0 : index
    %77 = vector.load %arg4[%c1_74, %c0_75, %c0_76] : memref<7x128x128xbf16, #tpu.memory_space<vmem>>, vector<1x128x128xbf16>
    %78 = vector.shape_cast %77 : vector<1x128x128xbf16> to vector<128x128xbf16>
    %cst_77 = arith.constant dense<0.000000e+00> : vector<16x128xf32>
    %79 = tpu.matmul %76, %78, %cst_77 {dimension_numbers = #tpu.dot_dimension_numbers<[1], [0], [0], [1], [0, 0, 1, 1], [], []>} : vector<16x128xbf16>, vector<128x128xbf16>, vector<16x128xf32> -> vector<16x128xf32>
    %80 = arith.addf %73, %79 : vector<16x128xf32>
    %c0_78 = arith.constant 0 : index
    %c7_79 = arith.constant 7 : index
    %c0_80 = arith.constant 0 : index
    %81 = vector.load %arg15[%c0_78, %c7_79, %c0_80] : memref<1x32x128xf32, #tpu.memory_space<vmem>>, vector<1x16x128xf32>
    %82 = vector.shape_cast %81 : vector<1x16x128xf32> to vector<16x128xf32>
    %83 = arith.truncf %82 : vector<16x128xf32> to vector<16x128xbf16>
    %c2_81 = arith.constant 2 : index
    %c0_82 = arith.constant 0 : index
    %c0_83 = arith.constant 0 : index
    %84 = vector.load %arg4[%c2_81, %c0_82, %c0_83] : memref<7x128x128xbf16, #tpu.memory_space<vmem>>, vector<1x128x128xbf16>
    %85 = vector.shape_cast %84 : vector<1x128x128xbf16> to vector<128x128xbf16>
    %cst_84 = arith.constant dense<0.000000e+00> : vector<16x128xf32>
    %86 = tpu.matmul %83, %85, %cst_84 {dimension_numbers = #tpu.dot_dimension_numbers<[1], [0], [0], [1], [0, 0, 1, 1], [], []>} : vector<16x128xbf16>, vector<128x128xbf16>, vector<16x128xf32> -> vector<16x128xf32>
    %87 = arith.addf %80, %86 : vector<16x128xf32>
    %c0_85 = arith.constant 0 : index
    %c8_86 = arith.constant 8 : index
    %c0_87 = arith.constant 0 : index
    %88 = vector.load %arg15[%c0_85, %c8_86, %c0_87] : memref<1x32x128xf32, #tpu.memory_space<vmem>>, vector<1x16x128xf32>
    %89 = vector.shape_cast %88 : vector<1x16x128xf32> to vector<16x128xf32>
    %90 = arith.truncf %89 : vector<16x128xf32> to vector<16x128xbf16>
    %c3_88 = arith.constant 3 : index
    %c0_89 = arith.constant 0 : index
    %c0_90 = arith.constant 0 : index
    %91 = vector.load %arg4[%c3_88, %c0_89, %c0_90] : memref<7x128x128xbf16, #tpu.memory_space<vmem>>, vector<1x128x128xbf16>
    %92 = vector.shape_cast %91 : vector<1x128x128xbf16> to vector<128x128xbf16>
    %cst_91 = arith.constant dense<0.000000e+00> : vector<16x128xf32>
    %93 = tpu.matmul %90, %92, %cst_91 {dimension_numbers = #tpu.dot_dimension_numbers<[1], [0], [0], [1], [0, 0, 1, 1], [], []>} : vector<16x128xbf16>, vector<128x128xbf16>, vector<16x128xf32> -> vector<16x128xf32>
    %94 = arith.addf %87, %93 : vector<16x128xf32>
    %c0_92 = arith.constant 0 : index
    %c9_93 = arith.constant 9 : index
    %c0_94 = arith.constant 0 : index
    %95 = vector.load %arg15[%c0_92, %c9_93, %c0_94] : memref<1x32x128xf32, #tpu.memory_space<vmem>>, vector<1x16x128xf32>
    %96 = vector.shape_cast %95 : vector<1x16x128xf32> to vector<16x128xf32>
    %97 = arith.truncf %96 : vector<16x128xf32> to vector<16x128xbf16>
    %c4_95 = arith.constant 4 : index
    %c0_96 = arith.constant 0 : index
    %c0_97 = arith.constant 0 : index
    %98 = vector.load %arg4[%c4_95, %c0_96, %c0_97] : memref<7x128x128xbf16, #tpu.memory_space<vmem>>, vector<1x128x128xbf16>
    %99 = vector.shape_cast %98 : vector<1x128x128xbf16> to vector<128x128xbf16>
    %cst_98 = arith.constant dense<0.000000e+00> : vector<16x128xf32>
    %100 = tpu.matmul %97, %99, %cst_98 {dimension_numbers = #tpu.dot_dimension_numbers<[1], [0], [0], [1], [0, 0, 1, 1], [], []>} : vector<16x128xbf16>, vector<128x128xbf16>, vector<16x128xf32> -> vector<16x128xf32>
    %101 = arith.addf %94, %100 : vector<16x128xf32>
    %c0_99 = arith.constant 0 : index
    %c10_100 = arith.constant 10 : index
    %c0_101 = arith.constant 0 : index
    %102 = vector.load %arg15[%c0_99, %c10_100, %c0_101] : memref<1x32x128xf32, #tpu.memory_space<vmem>>, vector<1x16x128xf32>
    %103 = vector.shape_cast %102 : vector<1x16x128xf32> to vector<16x128xf32>
    %104 = arith.truncf %103 : vector<16x128xf32> to vector<16x128xbf16>
    %c5_102 = arith.constant 5 : index
    %c0_103 = arith.constant 0 : index
    %c0_104 = arith.constant 0 : index
    %105 = vector.load %arg4[%c5_102, %c0_103, %c0_104] : memref<7x128x128xbf16, #tpu.memory_space<vmem>>, vector<1x128x128xbf16>
    %106 = vector.shape_cast %105 : vector<1x128x128xbf16> to vector<128x128xbf16>
    %cst_105 = arith.constant dense<0.000000e+00> : vector<16x128xf32>
    %107 = tpu.matmul %104, %106, %cst_105 {dimension_numbers = #tpu.dot_dimension_numbers<[1], [0], [0], [1], [0, 0, 1, 1], [], []>} : vector<16x128xbf16>, vector<128x128xbf16>, vector<16x128xf32> -> vector<16x128xf32>
    %108 = arith.addf %101, %107 : vector<16x128xf32>
    %c0_106 = arith.constant 0 : index
    %c11_107 = arith.constant 11 : index
    %c0_108 = arith.constant 0 : index
    %109 = vector.load %arg15[%c0_106, %c11_107, %c0_108] : memref<1x32x128xf32, #tpu.memory_space<vmem>>, vector<1x16x128xf32>
    %110 = vector.shape_cast %109 : vector<1x16x128xf32> to vector<16x128xf32>
    %111 = arith.truncf %110 : vector<16x128xf32> to vector<16x128xbf16>
    %c6_109 = arith.constant 6 : index
    %c0_110 = arith.constant 0 : index
    %c0_111 = arith.constant 0 : index
    %112 = vector.load %arg4[%c6_109, %c0_110, %c0_111] : memref<7x128x128xbf16, #tpu.memory_space<vmem>>, vector<1x128x128xbf16>
    %113 = vector.shape_cast %112 : vector<1x128x128xbf16> to vector<128x128xbf16>
    %cst_112 = arith.constant dense<0.000000e+00> : vector<16x128xf32>
    %114 = tpu.matmul %111, %113, %cst_112 {dimension_numbers = #tpu.dot_dimension_numbers<[1], [0], [0], [1], [0, 0, 1, 1], [], []>} : vector<16x128xbf16>, vector<128x128xbf16>, vector<16x128xf32> -> vector<16x128xf32>
    %115 = arith.addf %108, %114 : vector<16x128xf32>
    %c0_113 = arith.constant 0 : index
    %c0_114 = arith.constant 0 : index
    %116 = vector.load %arg5[%c0_113, %c0_114] : memref<1x128xf32, #tpu.memory_space<vmem>>, vector<1x128xf32>
    %117 = vector.broadcast %116 : vector<1x128xf32> to vector<16x128xf32>
    %118 = arith.addf %115, %117 : vector<16x128xf32>
    %cst_115 = arith.constant 0.000000e+00 : f32
    %119 = vector.broadcast %cst_115 : f32 to vector<16x128xf32>
    %120 = arith.maximumf %118, %119 : vector<16x128xf32>
    %121 = vector.shape_cast %120 : vector<16x128xf32> to vector<1x16x128xf32>
    %c0_116 = arith.constant 0 : index
    %c8_117 = arith.constant 8 : index
    %c0_118 = arith.constant 0 : index
    %122 = vector.load %arg15[%c0_116, %c8_117, %c0_118] : memref<1x32x128xf32, #tpu.memory_space<vmem>>, vector<1x16x128xf32>
    tpu.vector_store %arg15[%c0_116, %c8_117, %c0_118], %121 {strides = array<i32>} : memref<1x32x128xf32, #tpu.memory_space<vmem>>, vector<1x16x128xf32>,
    %cst_119 = arith.constant 0.000000e+00 : f32
    %123 = vector.broadcast %cst_119 : f32 to vector<16x128xf32>
    %c0_120 = arith.constant 0 : index
    %c6_121 = arith.constant 6 : index
    %c0_122 = arith.constant 0 : index
    %124 = vector.load %arg15[%c0_120, %c6_121, %c0_122] : memref<1x32x128xf32, #tpu.memory_space<vmem>>, vector<1x16x128xf32>
    %125 = vector.shape_cast %124 : vector<1x16x128xf32> to vector<16x128xf32>
    %126 = arith.truncf %125 : vector<16x128xf32> to vector<16x128xbf16>
    %c0_123 = arith.constant 0 : index
    %c0_124 = arith.constant 0 : index
    %c0_125 = arith.constant 0 : index
    %127 = vector.load %arg6[%c0_123, %c0_124, %c0_125] : memref<5x128x128xbf16, #tpu.memory_space<vmem>>, vector<1x128x128xbf16>
    %128 = vector.shape_cast %127 : vector<1x128x128xbf16> to vector<128x128xbf16>
    %cst_126 = arith.constant dense<0.000000e+00> : vector<16x128xf32>
    %129 = tpu.matmul %126, %128, %cst_126 {dimension_numbers = #tpu.dot_dimension_numbers<[1], [0], [0], [1], [0, 0, 1, 1], [], []>} : vector<16x128xbf16>, vector<128x128xbf16>, vector<16x128xf32> -> vector<16x128xf32>
    %130 = arith.addf %123, %129 : vector<16x128xf32>
    %c0_127 = arith.constant 0 : index
    %c7_128 = arith.constant 7 : index
    %c0_129 = arith.constant 0 : index
    %131 = vector.load %arg15[%c0_127, %c7_128, %c0_129] : memref<1x32x128xf32, #tpu.memory_space<vmem>>, vector<1x16x128xf32>
    %132 = vector.shape_cast %131 : vector<1x16x128xf32> to vector<16x128xf32>
    %133 = arith.truncf %132 : vector<16x128xf32> to vector<16x128xbf16>
    %c1_130 = arith.constant 1 : index
    %c0_131 = arith.constant 0 : index
    %c0_132 = arith.constant 0 : index
    %134 = vector.load %arg6[%c1_130, %c0_131, %c0_132] : memref<5x128x128xbf16, #tpu.memory_space<vmem>>, vector<1x128x128xbf16>
    %135 = vector.shape_cast %134 : vector<1x128x128xbf16> to vector<128x128xbf16>
    %cst_133 = arith.constant dense<0.000000e+00> : vector<16x128xf32>
    %136 = tpu.matmul %133, %135, %cst_133 {dimension_numbers = #tpu.dot_dimension_numbers<[1], [0], [0], [1], [0, 0, 1, 1], [], []>} : vector<16x128xbf16>, vector<128x128xbf16>, vector<16x128xf32> -> vector<16x128xf32>
    %137 = arith.addf %130, %136 : vector<16x128xf32>
    %c0_134 = arith.constant 0 : index
    %c8_135 = arith.constant 8 : index
    %c0_136 = arith.constant 0 : index
    %138 = vector.load %arg15[%c0_134, %c8_135, %c0_136] : memref<1x32x128xf32, #tpu.memory_space<vmem>>, vector<1x16x128xf32>
    %139 = vector.shape_cast %138 : vector<1x16x128xf32> to vector<16x128xf32>
    %140 = arith.truncf %139 : vector<16x128xf32> to vector<16x128xbf16>
    %c2_137 = arith.constant 2 : index
    %c0_138 = arith.constant 0 : index
    %c0_139 = arith.constant 0 : index
    %141 = vector.load %arg6[%c2_137, %c0_138, %c0_139] : memref<5x128x128xbf16, #tpu.memory_space<vmem>>, vector<1x128x128xbf16>
    %142 = vector.shape_cast %141 : vector<1x128x128xbf16> to vector<128x128xbf16>
    %cst_140 = arith.constant dense<0.000000e+00> : vector<16x128xf32>
    %143 = tpu.matmul %140, %142, %cst_140 {dimension_numbers = #tpu.dot_dimension_numbers<[1], [0], [0], [1], [0, 0, 1, 1], [], []>} : vector<16x128xbf16>, vector<128x128xbf16>, vector<16x128xf32> -> vector<16x128xf32>
    %144 = arith.addf %137, %143 : vector<16x128xf32>
    %c0_141 = arith.constant 0 : index
    %c9_142 = arith.constant 9 : index
    %c0_143 = arith.constant 0 : index
    %145 = vector.load %arg15[%c0_141, %c9_142, %c0_143] : memref<1x32x128xf32, #tpu.memory_space<vmem>>, vector<1x16x128xf32>
    %146 = vector.shape_cast %145 : vector<1x16x128xf32> to vector<16x128xf32>
    %147 = arith.truncf %146 : vector<16x128xf32> to vector<16x128xbf16>
    %c3_144 = arith.constant 3 : index
    %c0_145 = arith.constant 0 : index
    %c0_146 = arith.constant 0 : index
    %148 = vector.load %arg6[%c3_144, %c0_145, %c0_146] : memref<5x128x128xbf16, #tpu.memory_space<vmem>>, vector<1x128x128xbf16>
    %149 = vector.shape_cast %148 : vector<1x128x128xbf16> to vector<128x128xbf16>
    %cst_147 = arith.constant dense<0.000000e+00> : vector<16x128xf32>
    %150 = tpu.matmul %147, %149, %cst_147 {dimension_numbers = #tpu.dot_dimension_numbers<[1], [0], [0], [1], [0, 0, 1, 1], [], []>} : vector<16x128xbf16>, vector<128x128xbf16>, vector<16x128xf32> -> vector<16x128xf32>
    %151 = arith.addf %144, %150 : vector<16x128xf32>
    %c0_148 = arith.constant 0 : index
    %c10_149 = arith.constant 10 : index
    %c0_150 = arith.constant 0 : index
    %152 = vector.load %arg15[%c0_148, %c10_149, %c0_150] : memref<1x32x128xf32, #tpu.memory_space<vmem>>, vector<1x16x128xf32>
    %153 = vector.shape_cast %152 : vector<1x16x128xf32> to vector<16x128xf32>
    %154 = arith.truncf %153 : vector<16x128xf32> to vector<16x128xbf16>
    %c4_151 = arith.constant 4 : index
    %c0_152 = arith.constant 0 : index
    %c0_153 = arith.constant 0 : index
    %155 = vector.load %arg6[%c4_151, %c0_152, %c0_153] : memref<5x128x128xbf16, #tpu.memory_space<vmem>>, vector<1x128x128xbf16>
    %156 = vector.shape_cast %155 : vector<1x128x128xbf16> to vector<128x128xbf16>
    %cst_154 = arith.constant dense<0.000000e+00> : vector<16x128xf32>
    %157 = tpu.matmul %154, %156, %cst_154 {dimension_numbers = #tpu.dot_dimension_numbers<[1], [0], [0], [1], [0, 0, 1, 1], [], []>} : vector<16x128xbf16>, vector<128x128xbf16>, vector<16x128xf32> -> vector<16x128xf32>
    %158 = arith.addf %151, %157 : vector<16x128xf32>
    %c0_155 = arith.constant 0 : index
    %c0_156 = arith.constant 0 : index
    %159 = vector.load %arg7[%c0_155, %c0_156] : memref<1x128xf32, #tpu.memory_space<vmem>>, vector<1x128xf32>
    %160 = vector.broadcast %159 : vector<1x128xf32> to vector<16x128xf32>
    %161 = arith.addf %158, %160 : vector<16x128xf32>
    %cst_157 = arith.constant 0.000000e+00 : f32
    %162 = vector.broadcast %cst_157 : f32 to vector<16x128xf32>
    %163 = arith.maximumf %161, %162 : vector<16x128xf32>
    %164 = vector.shape_cast %163 : vector<16x128xf32> to vector<1x16x128xf32>
    %c0_158 = arith.constant 0 : index
    %c8_159 = arith.constant 8 : index
    %c0_160 = arith.constant 0 : index
    %165 = vector.load %arg15[%c0_158, %c8_159, %c0_160] : memref<1x32x128xf32, #tpu.memory_space<vmem>>, vector<1x16x128xf32>
    tpu.vector_store %arg15[%c0_158, %c8_159, %c0_160], %164 {strides = array<i32>} : memref<1x32x128xf32, #tpu.memory_space<vmem>>, vector<1x16x128xf32>,
    %cst_161 = arith.constant 0.000000e+00 : f32
    %166 = vector.broadcast %cst_161 : f32 to vector<16x128xf32>
    %c0_162 = arith.constant 0 : index
    %c7_163 = arith.constant 7 : index
    %c0_164 = arith.constant 0 : index
    %167 = vector.load %arg15[%c0_162, %c7_163, %c0_164] : memref<1x32x128xf32, #tpu.memory_space<vmem>>, vector<1x16x128xf32>
    %168 = vector.shape_cast %167 : vector<1x16x128xf32> to vector<16x128xf32>
    %169 = arith.truncf %168 : vector<16x128xf32> to vector<16x128xbf16>
    %c0_165 = arith.constant 0 : index
    %c0_166 = arith.constant 0 : index
    %c0_167 = arith.constant 0 : index
    %170 = vector.load %arg8[%c0_165, %c0_166, %c0_167] : memref<3x128x128xbf16, #tpu.memory_space<vmem>>, vector<1x128x128xbf16>
    %171 = vector.shape_cast %170 : vector<1x128x128xbf16> to vector<128x128xbf16>
    %cst_168 = arith.constant dense<0.000000e+00> : vector<16x128xf32>
    %172 = tpu.matmul %169, %171, %cst_168 {dimension_numbers = #tpu.dot_dimension_numbers<[1], [0], [0], [1], [0, 0, 1, 1], [], []>} : vector<16x128xbf16>, vector<128x128xbf16>, vector<16x128xf32> -> vector<16x128xf32>
    %173 = arith.addf %166, %172 : vector<16x128xf32>
    %c0_169 = arith.constant 0 : index
    %c8_170 = arith.constant 8 : index
    %c0_171 = arith.constant 0 : index
    %174 = vector.load %arg15[%c0_169, %c8_170, %c0_171] : memref<1x32x128xf32, #tpu.memory_space<vmem>>, vector<1x16x128xf32>
    %175 = vector.shape_cast %174 : vector<1x16x128xf32> to vector<16x128xf32>
    %176 = arith.truncf %175 : vector<16x128xf32> to vector<16x128xbf16>
    %c1_172 = arith.constant 1 : index
    %c0_173 = arith.constant 0 : index
    %c0_174 = arith.constant 0 : index
    %177 = vector.load %arg8[%c1_172, %c0_173, %c0_174] : memref<3x128x128xbf16, #tpu.memory_space<vmem>>, vector<1x128x128xbf16>
    %178 = vector.shape_cast %177 : vector<1x128x128xbf16> to vector<128x128xbf16>
    %cst_175 = arith.constant dense<0.000000e+00> : vector<16x128xf32>
    %179 = tpu.matmul %176, %178, %cst_175 {dimension_numbers = #tpu.dot_dimension_numbers<[1], [0], [0], [1], [0, 0, 1, 1], [], []>} : vector<16x128xbf16>, vector<128x128xbf16>, vector<16x128xf32> -> vector<16x128xf32>
    %180 = arith.addf %173, %179 : vector<16x128xf32>
    %c0_176 = arith.constant 0 : index
    %c9_177 = arith.constant 9 : index
    %c0_178 = arith.constant 0 : index
    %181 = vector.load %arg15[%c0_176, %c9_177, %c0_178] : memref<1x32x128xf32, #tpu.memory_space<vmem>>, vector<1x16x128xf32>
    %182 = vector.shape_cast %181 : vector<1x16x128xf32> to vector<16x128xf32>
    %183 = arith.truncf %182 : vector<16x128xf32> to vector<16x128xbf16>
    %c2_179 = arith.constant 2 : index
    %c0_180 = arith.constant 0 : index
    %c0_181 = arith.constant 0 : index
    %184 = vector.load %arg8[%c2_179, %c0_180, %c0_181] : memref<3x128x128xbf16, #tpu.memory_space<vmem>>, vector<1x128x128xbf16>
    %185 = vector.shape_cast %184 : vector<1x128x128xbf16> to vector<128x128xbf16>
    %cst_182 = arith.constant dense<0.000000e+00> : vector<16x128xf32>
    %186 = tpu.matmul %183, %185, %cst_182 {dimension_numbers = #tpu.dot_dimension_numbers<[1], [0], [0], [1], [0, 0, 1, 1], [], []>} : vector<16x128xbf16>, vector<128x128xbf16>, vector<16x128xf32> -> vector<16x128xf32>
    %187 = arith.addf %180, %186 : vector<16x128xf32>
    %c0_183 = arith.constant 0 : index
    %c0_184 = arith.constant 0 : index
    %188 = vector.load %arg9[%c0_183, %c0_184] : memref<1x128xf32, #tpu.memory_space<vmem>>, vector<1x128xf32>
    %189 = vector.broadcast %188 : vector<1x128xf32> to vector<16x128xf32>
    %190 = arith.addf %187, %189 : vector<16x128xf32>
    %cst_185 = arith.constant 0.000000e+00 : f32
    %191 = vector.broadcast %cst_185 : f32 to vector<16x128xf32>
    %192 = arith.maximumf %190, %191 : vector<16x128xf32>
    %193 = vector.shape_cast %192 : vector<16x128xf32> to vector<1x16x128xf32>
    %c0_186 = arith.constant 0 : index
    %c8_187 = arith.constant 8 : index
    %c0_188 = arith.constant 0 : index
    %194 = vector.load %arg15[%c0_186, %c8_187, %c0_188] : memref<1x32x128xf32, #tpu.memory_space<vmem>>, vector<1x16x128xf32>
    tpu.vector_store %arg15[%c0_186, %c8_187, %c0_188], %193 {strides = array<i32>} : memref<1x32x128xf32, #tpu.memory_space<vmem>>, vector<1x16x128xf32>,
    %cst_189 = arith.constant 0.000000e+00 : f32
    %195 = vector.broadcast %cst_189 : f32 to vector<1x128xf32>
    %c0_190 = arith.constant 0 : index
    %c8_191 = arith.constant 8 : index
    %c0_192 = arith.constant 0 : index
    %196 = vector.load %arg15[%c0_190, %c8_191, %c0_192] : memref<1x32x128xf32, #tpu.memory_space<vmem>>, vector<1x1x128xf32>
    %197 = vector.shape_cast %196 : vector<1x1x128xf32> to vector<1x128xf32>
    %198 = arith.truncf %197 : vector<1x128xf32> to vector<1x128xbf16>
    %c0_193 = arith.constant 0 : index
    %c0_194 = arith.constant 0 : index
    %c0_195 = arith.constant 0 : index
    %199 = vector.load %arg10[%c0_193, %c0_194, %c0_195] : memref<16x128x128xbf16, #tpu.memory_space<vmem>>, vector<1x128x128xbf16>
    %200 = vector.shape_cast %199 : vector<1x128x128xbf16> to vector<128x128xbf16>
    %cst_196 = arith.constant dense<0.000000e+00> : vector<1x128xf32>
    %201 = tpu.matmul %198, %200, %cst_196 {dimension_numbers = #tpu.dot_dimension_numbers<[1], [0], [0], [1], [0, 0, 1, 1], [], []>} : vector<1x128xbf16>, vector<128x128xbf16>, vector<1x128xf32> -> vector<1x128xf32>
    %202 = arith.addf %195, %201 : vector<1x128xf32>
    %c0_197 = arith.constant 0 : index
    %c9_198 = arith.constant 9 : index
    %c0_199 = arith.constant 0 : index
    %203 = vector.load %arg15[%c0_197, %c9_198, %c0_199] : memref<1x32x128xf32, #tpu.memory_space<vmem>>, vector<1x1x128xf32>
    %204 = vector.shape_cast %203 : vector<1x1x128xf32> to vector<1x128xf32>
    %205 = arith.truncf %204 : vector<1x128xf32> to vector<1x128xbf16>
    %c1_200 = arith.constant 1 : index
    %c0_201 = arith.constant 0 : index
    %c0_202 = arith.constant 0 : index
    %206 = vector.load %arg10[%c1_200, %c0_201, %c0_202] : memref<16x128x128xbf16, #tpu.memory_space<vmem>>, vector<1x128x128xbf16>
    %207 = vector.shape_cast %206 : vector<1x128x128xbf16> to vector<128x128xbf16>
    %cst_203 = arith.constant dense<0.000000e+00> : vector<1x128xf32>
    %208 = tpu.matmul %205, %207, %cst_203 {dimension_numbers = #tpu.dot_dimension_numbers<[1], [0], [0], [1], [0, 0, 1, 1], [], []>} : vector<1x128xbf16>, vector<128x128xbf16>, vector<1x128xf32> -> vector<1x128xf32>
    %209 = arith.addf %202, %208 : vector<1x128xf32>
    %c0_204 = arith.constant 0 : index
    %c10_205 = arith.constant 10 : index
    %c0_206 = arith.constant 0 : index
    %210 = vector.load %arg15[%c0_204, %c10_205, %c0_206] : memref<1x32x128xf32, #tpu.memory_space<vmem>>, vector<1x1x128xf32>
    %211 = vector.shape_cast %210 : vector<1x1x128xf32> to vector<1x128xf32>
    %212 = arith.truncf %211 : vector<1x128xf32> to vector<1x128xbf16>
    %c2_207 = arith.constant 2 : index
    %c0_208 = arith.constant 0 : index
    %c0_209 = arith.constant 0 : index
    %213 = vector.load %arg10[%c2_207, %c0_208, %c0_209] : memref<16x128x128xbf16, #tpu.memory_space<vmem>>, vector<1x128x128xbf16>
    %214 = vector.shape_cast %213 : vector<1x128x128xbf16> to vector<128x128xbf16>
    %cst_210 = arith.constant dense<0.000000e+00> : vector<1x128xf32>
    %215 = tpu.matmul %212, %214, %cst_210 {dimension_numbers = #tpu.dot_dimension_numbers<[1], [0], [0], [1], [0, 0, 1, 1], [], []>} : vector<1x128xbf16>, vector<128x128xbf16>, vector<1x128xf32> -> vector<1x128xf32>
    %216 = arith.addf %209, %215 : vector<1x128xf32>
    %c0_211 = arith.constant 0 : index
    %c11_212 = arith.constant 11 : index
    %c0_213 = arith.constant 0 : index
    %217 = vector.load %arg15[%c0_211, %c11_212, %c0_213] : memref<1x32x128xf32, #tpu.memory_space<vmem>>, vector<1x1x128xf32>
    %218 = vector.shape_cast %217 : vector<1x1x128xf32> to vector<1x128xf32>
    %219 = arith.truncf %218 : vector<1x128xf32> to vector<1x128xbf16>
    %c3_214 = arith.constant 3 : index
    %c0_215 = arith.constant 0 : index
    %c0_216 = arith.constant 0 : index
    %220 = vector.load %arg10[%c3_214, %c0_215, %c0_216] : memref<16x128x128xbf16, #tpu.memory_space<vmem>>, vector<1x128x128xbf16>
    %221 = vector.shape_cast %220 : vector<1x128x128xbf16> to vector<128x128xbf16>
    %cst_217 = arith.constant dense<0.000000e+00> : vector<1x128xf32>
    %222 = tpu.matmul %219, %221, %cst_217 {dimension_numbers = #tpu.dot_dimension_numbers<[1], [0], [0], [1], [0, 0, 1, 1], [], []>} : vector<1x128xbf16>, vector<128x128xbf16>, vector<1x128xf32> -> vector<1x128xf32>
    %223 = arith.addf %216, %222 : vector<1x128xf32>
    %c0_218 = arith.constant 0 : index
    %c12_219 = arith.constant 12 : index
    %c0_220 = arith.constant 0 : index
    %224 = vector.load %arg15[%c0_218, %c12_219, %c0_220] : memref<1x32x128xf32, #tpu.memory_space<vmem>>, vector<1x1x128xf32>
    %225 = vector.shape_cast %224 : vector<1x1x128xf32> to vector<1x128xf32>
    %226 = arith.truncf %225 : vector<1x128xf32> to vector<1x128xbf16>
    %c4_221 = arith.constant 4 : index
    %c0_222 = arith.constant 0 : index
    %c0_223 = arith.constant 0 : index
    %227 = vector.load %arg10[%c4_221, %c0_222, %c0_223] : memref<16x128x128xbf16, #tpu.memory_space<vmem>>, vector<1x128x128xbf16>
    %228 = vector.shape_cast %227 : vector<1x128x128xbf16> to vector<128x128xbf16>
    %cst_224 = arith.constant dense<0.000000e+00> : vector<1x128xf32>
    %229 = tpu.matmul %226, %228, %cst_224 {dimension_numbers = #tpu.dot_dimension_numbers<[1], [0], [0], [1], [0, 0, 1, 1], [], []>} : vector<1x128xbf16>, vector<128x128xbf16>, vector<1x128xf32> -> vector<1x128xf32>
    %230 = arith.addf %223, %229 : vector<1x128xf32>
    %c0_225 = arith.constant 0 : index
    %c13 = arith.constant 13 : index
    %c0_226 = arith.constant 0 : index
    %231 = vector.load %arg15[%c0_225, %c13, %c0_226] : memref<1x32x128xf32, #tpu.memory_space<vmem>>, vector<1x1x128xf32>
    %232 = vector.shape_cast %231 : vector<1x1x128xf32> to vector<1x128xf32>
    %233 = arith.truncf %232 : vector<1x128xf32> to vector<1x128xbf16>
    %c5_227 = arith.constant 5 : index
    %c0_228 = arith.constant 0 : index
    %c0_229 = arith.constant 0 : index
    %234 = vector.load %arg10[%c5_227, %c0_228, %c0_229] : memref<16x128x128xbf16, #tpu.memory_space<vmem>>, vector<1x128x128xbf16>
    %235 = vector.shape_cast %234 : vector<1x128x128xbf16> to vector<128x128xbf16>
    %cst_230 = arith.constant dense<0.000000e+00> : vector<1x128xf32>
    %236 = tpu.matmul %233, %235, %cst_230 {dimension_numbers = #tpu.dot_dimension_numbers<[1], [0], [0], [1], [0, 0, 1, 1], [], []>} : vector<1x128xbf16>, vector<128x128xbf16>, vector<1x128xf32> -> vector<1x128xf32>
    %237 = arith.addf %230, %236 : vector<1x128xf32>
    %c0_231 = arith.constant 0 : index
    %c14 = arith.constant 14 : index
    %c0_232 = arith.constant 0 : index
    %238 = vector.load %arg15[%c0_231, %c14, %c0_232] : memref<1x32x128xf32, #tpu.memory_space<vmem>>, vector<1x1x128xf32>
    %239 = vector.shape_cast %238 : vector<1x1x128xf32> to vector<1x128xf32>
    %240 = arith.truncf %239 : vector<1x128xf32> to vector<1x128xbf16>
    %c6_233 = arith.constant 6 : index
    %c0_234 = arith.constant 0 : index
    %c0_235 = arith.constant 0 : index
    %241 = vector.load %arg10[%c6_233, %c0_234, %c0_235] : memref<16x128x128xbf16, #tpu.memory_space<vmem>>, vector<1x128x128xbf16>
    %242 = vector.shape_cast %241 : vector<1x128x128xbf16> to vector<128x128xbf16>
    %cst_236 = arith.constant dense<0.000000e+00> : vector<1x128xf32>
    %243 = tpu.matmul %240, %242, %cst_236 {dimension_numbers = #tpu.dot_dimension_numbers<[1], [0], [0], [1], [0, 0, 1, 1], [], []>} : vector<1x128xbf16>, vector<128x128xbf16>, vector<1x128xf32> -> vector<1x128xf32>
    %244 = arith.addf %237, %243 : vector<1x128xf32>
    %c0_237 = arith.constant 0 : index
    %c15 = arith.constant 15 : index
    %c0_238 = arith.constant 0 : index
    %245 = vector.load %arg15[%c0_237, %c15, %c0_238] : memref<1x32x128xf32, #tpu.memory_space<vmem>>, vector<1x1x128xf32>
    %246 = vector.shape_cast %245 : vector<1x1x128xf32> to vector<1x128xf32>
    %247 = arith.truncf %246 : vector<1x128xf32> to vector<1x128xbf16>
    %c7_239 = arith.constant 7 : index
    %c0_240 = arith.constant 0 : index
    %c0_241 = arith.constant 0 : index
    %248 = vector.load %arg10[%c7_239, %c0_240, %c0_241] : memref<16x128x128xbf16, #tpu.memory_space<vmem>>, vector<1x128x128xbf16>
    %249 = vector.shape_cast %248 : vector<1x128x128xbf16> to vector<128x128xbf16>
    %cst_242 = arith.constant dense<0.000000e+00> : vector<1x128xf32>
    %250 = tpu.matmul %247, %249, %cst_242 {dimension_numbers = #tpu.dot_dimension_numbers<[1], [0], [0], [1], [0, 0, 1, 1], [], []>} : vector<1x128xbf16>, vector<128x128xbf16>, vector<1x128xf32> -> vector<1x128xf32>
    %251 = arith.addf %244, %250 : vector<1x128xf32>
    %c0_243 = arith.constant 0 : index
    %c16 = arith.constant 16 : index
    %c0_244 = arith.constant 0 : index
    %252 = vector.load %arg15[%c0_243, %c16, %c0_244] : memref<1x32x128xf32, #tpu.memory_space<vmem>>, vector<1x1x128xf32>
    %253 = vector.shape_cast %252 : vector<1x1x128xf32> to vector<1x128xf32>
    %254 = arith.truncf %253 : vector<1x128xf32> to vector<1x128xbf16>
    %c8_245 = arith.constant 8 : index
    %c0_246 = arith.constant 0 : index
    %c0_247 = arith.constant 0 : index
    %255 = vector.load %arg10[%c8_245, %c0_246, %c0_247] : memref<16x128x128xbf16, #tpu.memory_space<vmem>>, vector<1x128x128xbf16>
    %256 = vector.shape_cast %255 : vector<1x128x128xbf16> to vector<128x128xbf16>
    %cst_248 = arith.constant dense<0.000000e+00> : vector<1x128xf32>
    %257 = tpu.matmul %254, %256, %cst_248 {dimension_numbers = #tpu.dot_dimension_numbers<[1], [0], [0], [1], [0, 0, 1, 1], [], []>} : vector<1x128xbf16>, vector<128x128xbf16>, vector<1x128xf32> -> vector<1x128xf32>
    %258 = arith.addf %251, %257 : vector<1x128xf32>
    %c0_249 = arith.constant 0 : index
    %c17 = arith.constant 17 : index
    %c0_250 = arith.constant 0 : index
    %259 = vector.load %arg15[%c0_249, %c17, %c0_250] : memref<1x32x128xf32, #tpu.memory_space<vmem>>, vector<1x1x128xf32>
    %260 = vector.shape_cast %259 : vector<1x1x128xf32> to vector<1x128xf32>
    %261 = arith.truncf %260 : vector<1x128xf32> to vector<1x128xbf16>
    %c9_251 = arith.constant 9 : index
    %c0_252 = arith.constant 0 : index
    %c0_253 = arith.constant 0 : index
    %262 = vector.load %arg10[%c9_251, %c0_252, %c0_253] : memref<16x128x128xbf16, #tpu.memory_space<vmem>>, vector<1x128x128xbf16>
    %263 = vector.shape_cast %262 : vector<1x128x128xbf16> to vector<128x128xbf16>
    %cst_254 = arith.constant dense<0.000000e+00> : vector<1x128xf32>
    %264 = tpu.matmul %261, %263, %cst_254 {dimension_numbers = #tpu.dot_dimension_numbers<[1], [0], [0], [1], [0, 0, 1, 1], [], []>} : vector<1x128xbf16>, vector<128x128xbf16>, vector<1x128xf32> -> vector<1x128xf32>
    %265 = arith.addf %258, %264 : vector<1x128xf32>
    %c0_255 = arith.constant 0 : index
    %c18 = arith.constant 18 : index
    %c0_256 = arith.constant 0 : index
    %266 = vector.load %arg15[%c0_255, %c18, %c0_256] : memref<1x32x128xf32, #tpu.memory_space<vmem>>, vector<1x1x128xf32>
    %267 = vector.shape_cast %266 : vector<1x1x128xf32> to vector<1x128xf32>
    %268 = arith.truncf %267 : vector<1x128xf32> to vector<1x128xbf16>
    %c10_257 = arith.constant 10 : index
    %c0_258 = arith.constant 0 : index
    %c0_259 = arith.constant 0 : index
    %269 = vector.load %arg10[%c10_257, %c0_258, %c0_259] : memref<16x128x128xbf16, #tpu.memory_space<vmem>>, vector<1x128x128xbf16>
    %270 = vector.shape_cast %269 : vector<1x128x128xbf16> to vector<128x128xbf16>
    %cst_260 = arith.constant dense<0.000000e+00> : vector<1x128xf32>
    %271 = tpu.matmul %268, %270, %cst_260 {dimension_numbers = #tpu.dot_dimension_numbers<[1], [0], [0], [1], [0, 0, 1, 1], [], []>} : vector<1x128xbf16>, vector<128x128xbf16>, vector<1x128xf32> -> vector<1x128xf32>
    %272 = arith.addf %265, %271 : vector<1x128xf32>
    %c0_261 = arith.constant 0 : index
    %c19 = arith.constant 19 : index
    %c0_262 = arith.constant 0 : index
    %273 = vector.load %arg15[%c0_261, %c19, %c0_262] : memref<1x32x128xf32, #tpu.memory_space<vmem>>, vector<1x1x128xf32>
    %274 = vector.shape_cast %273 : vector<1x1x128xf32> to vector<1x128xf32>
    %275 = arith.truncf %274 : vector<1x128xf32> to vector<1x128xbf16>
    %c11_263 = arith.constant 11 : index
    %c0_264 = arith.constant 0 : index
    %c0_265 = arith.constant 0 : index
    %276 = vector.load %arg10[%c11_263, %c0_264, %c0_265] : memref<16x128x128xbf16, #tpu.memory_space<vmem>>, vector<1x128x128xbf16>
    %277 = vector.shape_cast %276 : vector<1x128x128xbf16> to vector<128x128xbf16>
    %cst_266 = arith.constant dense<0.000000e+00> : vector<1x128xf32>
    %278 = tpu.matmul %275, %277, %cst_266 {dimension_numbers = #tpu.dot_dimension_numbers<[1], [0], [0], [1], [0, 0, 1, 1], [], []>} : vector<1x128xbf16>, vector<128x128xbf16>, vector<1x128xf32> -> vector<1x128xf32>
    %279 = arith.addf %272, %278 : vector<1x128xf32>
    %c0_267 = arith.constant 0 : index
    %c20 = arith.constant 20 : index
    %c0_268 = arith.constant 0 : index
    %280 = vector.load %arg15[%c0_267, %c20, %c0_268] : memref<1x32x128xf32, #tpu.memory_space<vmem>>, vector<1x1x128xf32>
    %281 = vector.shape_cast %280 : vector<1x1x128xf32> to vector<1x128xf32>
    %282 = arith.truncf %281 : vector<1x128xf32> to vector<1x128xbf16>
    %c12_269 = arith.constant 12 : index
    %c0_270 = arith.constant 0 : index
    %c0_271 = arith.constant 0 : index
    %283 = vector.load %arg10[%c12_269, %c0_270, %c0_271] : memref<16x128x128xbf16, #tpu.memory_space<vmem>>, vector<1x128x128xbf16>
    %284 = vector.shape_cast %283 : vector<1x128x128xbf16> to vector<128x128xbf16>
    %cst_272 = arith.constant dense<0.000000e+00> : vector<1x128xf32>
    %285 = tpu.matmul %282, %284, %cst_272 {dimension_numbers = #tpu.dot_dimension_numbers<[1], [0], [0], [1], [0, 0, 1, 1], [], []>} : vector<1x128xbf16>, vector<128x128xbf16>, vector<1x128xf32> -> vector<1x128xf32>
    %286 = arith.addf %279, %285 : vector<1x128xf32>
    %c0_273 = arith.constant 0 : index
    %c21 = arith.constant 21 : index
    %c0_274 = arith.constant 0 : index
    %287 = vector.load %arg15[%c0_273, %c21, %c0_274] : memref<1x32x128xf32, #tpu.memory_space<vmem>>, vector<1x1x128xf32>
    %288 = vector.shape_cast %287 : vector<1x1x128xf32> to vector<1x128xf32>
    %289 = arith.truncf %288 : vector<1x128xf32> to vector<1x128xbf16>
    %c13_275 = arith.constant 13 : index
    %c0_276 = arith.constant 0 : index
    %c0_277 = arith.constant 0 : index
    %290 = vector.load %arg10[%c13_275, %c0_276, %c0_277] : memref<16x128x128xbf16, #tpu.memory_space<vmem>>, vector<1x128x128xbf16>
    %291 = vector.shape_cast %290 : vector<1x128x128xbf16> to vector<128x128xbf16>
    %cst_278 = arith.constant dense<0.000000e+00> : vector<1x128xf32>
    %292 = tpu.matmul %289, %291, %cst_278 {dimension_numbers = #tpu.dot_dimension_numbers<[1], [0], [0], [1], [0, 0, 1, 1], [], []>} : vector<1x128xbf16>, vector<128x128xbf16>, vector<1x128xf32> -> vector<1x128xf32>
    %293 = arith.addf %286, %292 : vector<1x128xf32>
    %c0_279 = arith.constant 0 : index
    %c22 = arith.constant 22 : index
    %c0_280 = arith.constant 0 : index
    %294 = vector.load %arg15[%c0_279, %c22, %c0_280] : memref<1x32x128xf32, #tpu.memory_space<vmem>>, vector<1x1x128xf32>
    %295 = vector.shape_cast %294 : vector<1x1x128xf32> to vector<1x128xf32>
    %296 = arith.truncf %295 : vector<1x128xf32> to vector<1x128xbf16>
    %c14_281 = arith.constant 14 : index
    %c0_282 = arith.constant 0 : index
    %c0_283 = arith.constant 0 : index
    %297 = vector.load %arg10[%c14_281, %c0_282, %c0_283] : memref<16x128x128xbf16, #tpu.memory_space<vmem>>, vector<1x128x128xbf16>
    %298 = vector.shape_cast %297 : vector<1x128x128xbf16> to vector<128x128xbf16>
    %cst_284 = arith.constant dense<0.000000e+00> : vector<1x128xf32>
    %299 = tpu.matmul %296, %298, %cst_284 {dimension_numbers = #tpu.dot_dimension_numbers<[1], [0], [0], [1], [0, 0, 1, 1], [], []>} : vector<1x128xbf16>, vector<128x128xbf16>, vector<1x128xf32> -> vector<1x128xf32>
    %300 = arith.addf %293, %299 : vector<1x128xf32>
    %c0_285 = arith.constant 0 : index
    %c23 = arith.constant 23 : index
    %c0_286 = arith.constant 0 : index
    %301 = vector.load %arg15[%c0_285, %c23, %c0_286] : memref<1x32x128xf32, #tpu.memory_space<vmem>>, vector<1x1x128xf32>
    %302 = vector.shape_cast %301 : vector<1x1x128xf32> to vector<1x128xf32>
    %303 = arith.truncf %302 : vector<1x128xf32> to vector<1x128xbf16>
    %c15_287 = arith.constant 15 : index
    %c0_288 = arith.constant 0 : index
    %c0_289 = arith.constant 0 : index
    %304 = vector.load %arg10[%c15_287, %c0_288, %c0_289] : memref<16x128x128xbf16, #tpu.memory_space<vmem>>, vector<1x128x128xbf16>
    %305 = vector.shape_cast %304 : vector<1x128x128xbf16> to vector<128x128xbf16>
    %cst_290 = arith.constant dense<0.000000e+00> : vector<1x128xf32>
    %306 = tpu.matmul %303, %305, %cst_290 {dimension_numbers = #tpu.dot_dimension_numbers<[1], [0], [0], [1], [0, 0, 1, 1], [], []>} : vector<1x128xbf16>, vector<128x128xbf16>, vector<1x128xf32> -> vector<1x128xf32>
    %307 = arith.addf %300, %306 : vector<1x128xf32>
    %c0_291 = arith.constant 0 : index
    %c0_292 = arith.constant 0 : index
    %308 = vector.load %arg11[%c0_291, %c0_292] : memref<1x128xf32, #tpu.memory_space<vmem>>, vector<1x128xf32>
    %309 = arith.addf %307, %308 : vector<1x128xf32>
    %cst_293 = arith.constant 0.000000e+00 : f32
    %310 = vector.broadcast %cst_293 : f32 to vector<1x128xf32>
    %311 = arith.maximumf %309, %310 : vector<1x128xf32>
    %c0_294 = arith.constant 0 : index
    %c0_295 = arith.constant 0 : index
    %312 = vector.load %arg12[%c0_294, %c0_295] : memref<128x128xf32, #tpu.memory_space<vmem>>, vector<128x128xf32>
    %cst_296 = arith.constant dense<0.000000e+00> : vector<1x128xf32>
    %313 = tpu.matmul %311, %312, %cst_296 {dimension_numbers = #tpu.dot_dimension_numbers<[1], [0], [0], [1], [0, 0, 1, 1], [], []>} : vector<1x128xf32>, vector<128x128xf32>, vector<1x128xf32> -> vector<1x128xf32>
    %c0_297 = arith.constant 0 : index
    %c0_298 = arith.constant 0 : index
    %314 = vector.load %arg13[%c0_297, %c0_298] : memref<1x128xf32, #tpu.memory_space<vmem>>, vector<1x128xf32>
    %315 = arith.addf %313, %314 : vector<1x128xf32>
    %c0_299 = arith.constant 0 : index
    %c0_300 = arith.constant 0 : index
    %c0_301 = arith.constant 0 : index
    %316 = vector.load %arg14[%c0_299, %c0_300, %c0_301] : memref<1x1x128xf32, #tpu.memory_space<vmem>>, vector<1x1x128xf32>
    %317 = vector.shape_cast %316 : vector<1x1x128xf32> to vector<1x128xf32>
    %318 = vector.shape_cast %315 : vector<1x128xf32> to vector<1x1x128xf32>
    tpu.vector_store %arg14[%c0_299, %c0_300, %c0_301], %318 {strides = array<i32>} : memref<1x1x128xf32, #tpu.memory_space<vmem>>, vector<1x1x128xf32>,
    return
  }
  func.func @transform_0(%arg0: i32) -> (i32, i32, i32) {
    %c0_i32 = arith.constant 0 : i32
    %c0_i32_0 = arith.constant 0 : i32
    %c0_i32_1 = arith.constant 0 : i32
    return %arg0, %c0_i32, %c0_i32_0 : i32, i32, i32
  }
  func.func @transform_1(%arg0: i32) -> (i32, i32, i32) {
    %c0_i32 = arith.constant 0 : i32
    %c0_i32_0 = arith.constant 0 : i32
    %c0_i32_1 = arith.constant 0 : i32
    %c0_i32_2 = arith.constant 0 : i32
    return %c0_i32, %c0_i32_0, %c0_i32_1 : i32, i32, i32
  }
  func.func @transform_2(%arg0: i32) -> (i32, i32) {
    %c0_i32 = arith.constant 0 : i32
    %c0_i32_0 = arith.constant 0 : i32
    %c0_i32_1 = arith.constant 0 : i32
    return %c0_i32, %c0_i32_0 : i32, i32
  }
  func.func @transform_3(%arg0: i32) -> (i32, i32, i32) {
    %c0_i32 = arith.constant 0 : i32
    %c0_i32_0 = arith.constant 0 : i32
    %c0_i32_1 = arith.constant 0 : i32
    %c0_i32_2 = arith.constant 0 : i32
    return %c0_i32, %c0_i32_0, %c0_i32_1 : i32, i32, i32
  }
  func.func @transform_4(%arg0: i32) -> (i32, i32) {
    %c0_i32 = arith.constant 0 : i32
    %c0_i32_0 = arith.constant 0 : i32
    %c0_i32_1 = arith.constant 0 : i32
    return %c0_i32, %c0_i32_0 : i32, i32
  }
  func.func @transform_5(%arg0: i32) -> (i32, i32, i32) {
    %c0_i32 = arith.constant 0 : i32
    %c0_i32_0 = arith.constant 0 : i32
    %c0_i32_1 = arith.constant 0 : i32
    %c0_i32_2 = arith.constant 0 : i32
    return %c0_i32, %c0_i32_0, %c0_i32_1 : i32, i32, i32
  }
  func.func @transform_6(%arg0: i32) -> (i32, i32) {
    %c0_i32 = arith.constant 0 : i32
    %c0_i32_0 = arith.constant 0 : i32
    %c0_i32_1 = arith.constant 0 : i32
    return %c0_i32, %c0_i32_0 : i32, i32
  }
  func.func @transform_7(%arg0: i32) -> (i32, i32, i32) {
    %c0_i32 = arith.constant 0 : i32
    %c0_i32_0 = arith.constant 0 : i32
    %c0_i32_1 = arith.constant 0 : i32
    %c0_i32_2 = arith.constant 0 : i32
    return %c0_i32, %c0_i32_0, %c0_i32_1 : i32, i32, i32
  }
  func.func @transform_8(%arg0: i32) -> (i32, i32) {
    %c0_i32 = arith.constant 0 : i32
    %c0_i32_0 = arith.constant 0 : i32
    %c0_i32_1 = arith.constant 0 : i32
    return %c0_i32, %c0_i32_0 : i32, i32
  }
  func.func @transform_9(%arg0: i32) -> (i32, i32, i32) {
    %c0_i32 = arith.constant 0 : i32
    %c0_i32_0 = arith.constant 0 : i32
    %c0_i32_1 = arith.constant 0 : i32
    %c0_i32_2 = arith.constant 0 : i32
    return %c0_i32, %c0_i32_0, %c0_i32_1 : i32, i32, i32
  }
  func.func @transform_10(%arg0: i32) -> (i32, i32) {
    %c0_i32 = arith.constant 0 : i32
    %c0_i32_0 = arith.constant 0 : i32
    %c0_i32_1 = arith.constant 0 : i32
    return %c0_i32, %c0_i32_0 : i32, i32
  }
  func.func @transform_11(%arg0: i32) -> (i32, i32) {
    %c0_i32 = arith.constant 0 : i32
    %c0_i32_0 = arith.constant 0 : i32
    %c0_i32_1 = arith.constant 0 : i32
    return %c0_i32, %c0_i32_0 : i32, i32
  }
  func.func @transform_12(%arg0: i32) -> (i32, i32) {
    %c0_i32 = arith.constant 0 : i32
    %c0_i32_0 = arith.constant 0 : i32
    %c0_i32_1 = arith.constant 0 : i32
    return %c0_i32, %c0_i32_0 : i32, i32
  }
  func.func @transform_13(%arg0: i32) -> (i32, i32, i32) {
    %c0_i32 = arith.constant 0 : i32
    %c0_i32_0 = arith.constant 0 : i32
    %c0_i32_1 = arith.constant 0 : i32
    return %arg0, %c0_i32, %c0_i32_0 : i32, i32, i32
  }
}

</mosaic_0001>

<llo_original>
// kernel: generator_b_forward.1
$region0: #{generator_b_forward.1}
  #allocation0 [shape = 'u32[]', space=smem, size = 0x4, offset = 0x4, fixed_abs, tag = 'smem constant byte address 0x4 - core index']
  #allocation1 [shape = 'u32[144,128]{1,0:T(1,128)}', space=vmem, size = 0x12000, scoped, tag = 'internal scratch']
  #allocation2 [shape = 'f32[1,32,128]{2,1,0:T(8,128)}', space=vmem, size = 0x4000, scoped, tag = 'scratch operand']
  %s0 = inlined_call_operand.vmem [shape: f32[2,32,8], index: 0, kind: input, shape index: {}]
  %s1 = inlined_call_operand.hbm [shape: f32[9,8,128], index: 1, kind: input, shape index: {}]
  %s2 = inlined_call_operand.vmem [shape: f32[1,128], index: 2, kind: input, shape index: {}]
  %s3 = inlined_call_operand.hbm [shape: bf16[7,128,128], index: 3, kind: input, shape index: {}]
  %s4 = inlined_call_operand.vmem [shape: f32[1,128], index: 4, kind: input, shape index: {}]
  %s5 = inlined_call_operand.hbm [shape: bf16[5,128,128], index: 5, kind: input, shape index: {}]
  %s6 = inlined_call_operand.vmem [shape: f32[1,128], index: 6, kind: input, shape index: {}]
  %s7 = inlined_call_operand.hbm [shape: bf16[3,128,128], index: 7, kind: input, shape index: {}]
  %s8 = inlined_call_operand.vmem [shape: f32[1,128], index: 8, kind: input, shape index: {}]
  %s9 = inlined_call_operand.hbm [shape: bf16[16,128,128], index: 9, kind: input, shape index: {}]
  %s10 = inlined_call_operand.vmem [shape: f32[1,128], index: 10, kind: input, shape index: {}]
  %s11 = inlined_call_operand.vmem [shape: f32[128,128], index: 11, kind: input, shape index: {}]
  %s12 = inlined_call_operand.vmem [shape: f32[1,128], index: 12, kind: input, shape index: {}]
  %s13 = inlined_call_operand.hbm [shape: f32[2,1,128], index: 13, kind: output, shape index: {}]
  %s14 = sld [smem:[#allocation0]]
  $region105: #{generator_b_forward.1} parent=0
    _
  %s16 = ssub.s32 1, %s14
  %s17 = scalar_select 0, %s16, %s14
  $region1: #{generator_b_forward.1} parent=0
    #allocation3 [shape = 'u8[36864]{0}', space=vmem, size = 0x9000, scoped, tag = 'input window, operand 1, single buffered']
    #allocation4 [shape = 's32[2]{0}', space=sflag, size = 0x8, scoped, tag = 'scoped memory for generator_b_forward.1']
    #allocation5 [shape = 's32[2]{0}', space=sflag, size = 0x8, scoped, tag = 'scoped memory for generator_b_forward.1']
    #allocation6 [shape = 'u8[229376]{0}', space=vmem, size = 0x38000, scoped, tag = 'input window, operand 3, single buffered']
    #allocation7 [shape = 's32[1]{0}', space=sflag, size = 0x4, scoped, tag = 'scoped memory for generator_b_forward.1']
    #allocation8 [shape = 'u8[163840]{0}', space=vmem, size = 0x28000, scoped, tag = 'input window, operand 5, single buffered']
    #allocation9 [shape = 'u8[98304]{0}', space=vmem, size = 0x18000, scoped, tag = 'input window, operand 7, single buffered']
    #allocation10 [shape = 's32[1]{0}', space=sflag, size = 0x4, scoped, tag = 'scoped memory for generator_b_forward.1']
    #allocation11 [shape = 'u8[524288]{0}', space=vmem, size = 0x80000, scoped, tag = 'input window, operand 9, single buffered']
    #allocation12 [shape = 'u8[1024]{0}', space=vmem, size = 0x400, scoped, tag = 'output window, operand 0']
    %18 = vsyncpa [#allocation4], 0
    %19 = vsyncpa [#allocation7], 0
    %20 = vsyncpa [#allocation10], 0
    %21 = vsyncpa [#allocation5], 0
    %s22 = scalar_lea.sflag [#allocation5], 1
    %23 = vsyncpa %s22, 0
    loop: start=0, step=1, limit=4
    $region2: #{generator_b_forward.1} parent=1 // loop_pre_header
      _
    $region3: #{generator_b_forward.1} parent=1 // loop_header
      %s25 = sphi 0, %s29
      %p26 = scmp.ge.s32.totalorder %s25, 4
      %s35 = sphi 0, %s37
      %s38 = sphi 0, %s35
      %s39 = sphi 0, %s38
      %s55 = sphi 0, %s39
      %s59 = sphi 0, %s59
      %s61 = sphi 0, %s59
      %s62 = sphi 0, %s61
      %s76 = sphi 0, %s62
      %s80 = sphi 0, %s80
      %s82 = sphi 0, %s80
      %s83 = sphi 0, %s82
      %s97 = sphi 0, %s83
      %s101 = sphi 0, %s101
      %s103 = sphi 0, %s101
      %s104 = sphi 0, %s103
      %s118 = sphi 0, %s104
      %s122 = sphi 0, %s122
      %s124 = sphi 0, %s122
      %s125 = sphi 0, %s124
      %s139 = sphi 0, %s125
      %s143 = sphi 0, %s143
      %s145 = sphi 0, %s143
      %s146 = sphi 0, %s145
      %s160 = sphi 0, %s146
      %s164 = sphi 0, %s164
      %s166 = sphi 0, %s164
      %s167 = sphi 0, %s166
      %s181 = sphi 0, %s167
      %s185 = sphi 0, %s185
      %s187 = sphi 0, %s185
      %s188 = sphi 0, %s187
      %s202 = sphi 0, %s188
      %s206 = sphi 0, %s206
      %s208 = sphi 0, %s206
      %s209 = sphi 0, %s208
      %s223 = sphi 0, %s209
      %s227 = sphi 0, %s227
      %s229 = sphi 0, %s227
      %s230 = sphi 0, %s229
      %s244 = sphi 0, %s230
      %s248 = sphi 0, %s248
      %s250 = sphi 0, %s248
      %s251 = sphi 0, %s250
      %s265 = sphi 0, %s251
      %s269 = sphi 0, %s269
      %s271 = sphi 0, %s269
      %s272 = sphi 0, %s271
      %s286 = sphi 0, %s272
      %s290 = sphi 0, %s290
      %s292 = sphi 0, %s290
      %s293 = sphi 0, %s292
      %s307 = sphi 0, %s293
      %s313 = sphi 0, %s315
      %s316 = sphi 0, %s313
      %s317 = sphi 0, %s316
      %s333 = sphi 0, %s317
    $region4: #{generator_b_forward.1} parent=1 // loop_header_branch
      %28 = sbr.rel (%p26) target = $region8
    $region5: #{generator_b_forward.1} parent=1 // loop_body
      %s30 = ssub.s32 %s25, 1
      %s31 = ssub.s32 %s25, 2
      %s32 = sadd.s32 %s25, 1
      %s33 = ssub.s32 %s25, %s32
      %p34 = scmp.eq.s32.totalorder %s33, 0
      %s36 = sadd.s32 %s35, 1
      %s37 = scalar_select %p34, %s35, %s36
      %p40 = pneg %p34
      %p41 = scmp.eq.s32.totalorder %s25, 1
      %p42 = por %p40, %p41
      %p43 = scmp.ne.s32.totalorder %s35, %s38
      %p44 = scmp.eq.s32.totalorder %s25, 0
      %p45 = por %p43, %p44
      %p46 = scmp.ne.s32.totalorder %s35, %s38
      %p47 = scmp.eq.s32.totalorder %s30, 1
      %p48 = por %p46, %p47
      %p49 = scmp.ne.s32.totalorder %s38, %s39
      %p50 = scmp.eq.s32.totalorder %s30, 0
      %p51 = por %p49, %p50
      %p52 = scmp.ne.s32.totalorder %s38, %s39
      %p53 = scmp.eq.s32.totalorder %s31, 1
      %p54 = por %p52, %p53
      %p56 = scmp.ne.s32.totalorder %s39, %s55
      %p57 = scmp.eq.s32.totalorder %s31, 0
      %p58 = por %p56, %p57
      %s60 = sadd.s32 %s59, 1
      %p63 = scmp.eq.s32.totalorder %s25, 1
      %p64 = scmp.ne.s32.totalorder %s59, %s61
      %p65 = scmp.eq.s32.totalorder %s25, 0
      %p66 = por %p64, %p65
      %p67 = scmp.ne.s32.totalorder %s59, %s61
      %p68 = scmp.eq.s32.totalorder %s30, 1
      %p69 = por %p67, %p68
      %p70 = scmp.ne.s32.totalorder %s61, %s62
      %p71 = scmp.eq.s32.totalorder %s30, 0
      %p72 = por %p70, %p71
      %p73 = scmp.ne.s32.totalorder %s61, %s62
      %p74 = scmp.eq.s32.totalorder %s31, 1
      %p75 = por %p73, %p74
      %p77 = scmp.ne.s32.totalorder %s62, %s76
      %p78 = scmp.eq.s32.totalorder %s31, 0
      %p79 = por %p77, %p78
      %s81 = sadd.s32 %s80, 1
      %p84 = scmp.eq.s32.totalorder %s25, 1
      %p85 = scmp.ne.s32.totalorder %s80, %s82
      %p86 = scmp.eq.s32.totalorder %s25, 0
      %p87 = por %p85, %p86
      %p88 = scmp.ne.s32.totalorder %s80, %s82
      %p89 = scmp.eq.s32.totalorder %s30, 1
      %p90 = por %p88, %p89
      %p91 = scmp.ne.s32.totalorder %s82, %s83
      %p92 = scmp.eq.s32.totalorder %s30, 0
      %p93 = por %p91, %p92
      %p94 = scmp.ne.s32.totalorder %s82, %s83
      %p95 = scmp.eq.s32.totalorder %s31, 1
      %p96 = por %p94, %p95
      %p98 = scmp.ne.s32.totalorder %s83, %s97
      %p99 = scmp.eq.s32.totalorder %s31, 0
      %p100 = por %p98, %p99
      %s102 = sadd.s32 %s101, 1
      %p105 = scmp.eq.s32.totalorder %s25, 1
      %p106 = scmp.ne.s32.totalorder %s101, %s103
      %p107 = scmp.eq.s32.totalorder %s25, 0
      %p108 = por %p106, %p107
      %p109 = scmp.ne.s32.totalorder %s101, %s103
      %p110 = scmp.eq.s32.totalorder %s30, 1
      %p111 = por %p109, %p110
      %p112 = scmp.ne.s32.totalorder %s103, %s104
      %p113 = scmp.eq.s32.totalorder %s30, 0
      %p114 = por %p112, %p113
      %p115 = scmp.ne.s32.totalorder %s103, %s104
      %p116 = scmp.eq.s32.totalorder %s31, 1
      %p117 = por %p115, %p116
      %p119 = scmp.ne.s32.totalorder %s104, %s118
      %p120 = scmp.eq.s32.totalorder %s31, 0
      %p121 = por %p119, %p120
      %s123 = sadd.s32 %s122, 1
      %p126 = scmp.eq.s32.totalorder %s25, 1
      %p127 = scmp.ne.s32.totalorder %s122, %s124
      %p128 = scmp.eq.s32.totalorder %s25, 0
      %p129 = por %p127, %p128
      %p130 = scmp.ne.s32.totalorder %s122, %s124
      %p131 = scmp.eq.s32.totalorder %s30, 1
      %p132 = por %p130, %p131
      %p133 = scmp.ne.s32.totalorder %s124, %s125
      %p134 = scmp.eq.s32.totalorder %s30, 0
      %p135 = por %p133, %p134
      %p136 = scmp.ne.s32.totalorder %s124, %s125
      %p137 = scmp.eq.s32.totalorder %s31, 1
      %p138 = por %p136, %p137
      %p140 = scmp.ne.s32.totalorder %s125, %s139
      %p141 = scmp.eq.s32.totalorder %s31, 0
      %p142 = por %p140, %p141
      %s144 = sadd.s32 %s143, 1
      %p147 = scmp.eq.s32.totalorder %s25, 1
      %p148 = scmp.ne.s32.totalorder %s143, %s145
      %p149 = scmp.eq.s32.totalorder %s25, 0
      %p150 = por %p148, %p149
      %p151 = scmp.ne.s32.totalorder %s143, %s145
      %p152 = scmp.eq.s32.totalorder %s30, 1
      %p153 = por %p151, %p152
      %p154 = scmp.ne.s32.totalorder %s145, %s146
      %p155 = scmp.eq.s32.totalorder %s30, 0
      %p156 = por %p154, %p155
      %p157 = scmp.ne.s32.totalorder %s145, %s146
      %p158 = scmp.eq.s32.totalorder %s31, 1
      %p159 = por %p157, %p158
      %p161 = scmp.ne.s32.totalorder %s146, %s160
      %p162 = scmp.eq.s32.totalorder %s31, 0
      %p163 = por %p161, %p162
      %s165 = sadd.s32 %s164, 1
      %p168 = scmp.eq.s32.totalorder %s25, 1
      %p169 = scmp.ne.s32.totalorder %s164, %s166
      %p170 = scmp.eq.s32.totalorder %s25, 0
      %p171 = por %p169, %p170
      %p172 = scmp.ne.s32.totalorder %s164, %s166
      %p173 = scmp.eq.s32.totalorder %s30, 1
      %p174 = por %p172, %p173
      %p175 = scmp.ne.s32.totalorder %s166, %s167
      %p176 = scmp.eq.s32.totalorder %s30, 0
      %p177 = por %p175, %p176
      %p178 = scmp.ne.s32.totalorder %s166, %s167
      %p179 = scmp.eq.s32.totalorder %s31, 1
      %p180 = por %p178, %p179
      %p182 = scmp.ne.s32.totalorder %s167, %s181
      %p183 = scmp.eq.s32.totalorder %s31, 0
      %p184 = por %p182, %p183
      %s186 = sadd.s32 %s185, 1
      %p189 = scmp.eq.s32.totalorder %s25, 1
      %p190 = scmp.ne.s32.totalorder %s185, %s187
      %p191 = scmp.eq.s32.totalorder %s25, 0
      %p192 = por %p190, %p191
      %p193 = scmp.ne.s32.totalorder %s185, %s187
      %p194 = scmp.eq.s32.totalorder %s30, 1
      %p195 = por %p193, %p194
      %p196 = scmp.ne.s32.totalorder %s187, %s188
      %p197 = scmp.eq.s32.totalorder %s30, 0
      %p198 = por %p196, %p197
      %p199 = scmp.ne.s32.totalorder %s187, %s188
      %p200 = scmp.eq.s32.totalorder %s31, 1
      %p201 = por %p199, %p200
      %p203 = scmp.ne.s32.totalorder %s188, %s202
      %p204 = scmp.eq.s32.totalorder %s31, 0
      %p205 = por %p203, %p204
      %s207 = sadd.s32 %s206, 1
      %p210 = scmp.eq.s32.totalorder %s25, 1
      %p211 = scmp.ne.s32.totalorder %s206, %s208
      %p212 = scmp.eq.s32.totalorder %s25, 0
      %p213 = por %p211, %p212
      %p214 = scmp.ne.s32.totalorder %s206, %s208
      %p215 = scmp.eq.s32.totalorder %s30, 1
      %p216 = por %p214, %p215
      %p217 = scmp.ne.s32.totalorder %s208, %s209
      %p218 = scmp.eq.s32.totalorder %s30, 0
      %p219 = por %p217, %p218
      %p220 = scmp.ne.s32.totalorder %s208, %s209
      %p221 = scmp.eq.s32.totalorder %s31, 1
      %p222 = por %p220, %p221
      %p224 = scmp.ne.s32.totalorder %s209, %s223
      %p225 = scmp.eq.s32.totalorder %s31, 0
      %p226 = por %p224, %p225
      %s228 = sadd.s32 %s227, 1
      %p231 = scmp.eq.s32.totalorder %s25, 1
      %p232 = scmp.ne.s32.totalorder %s227, %s229
      %p233 = scmp.eq.s32.totalorder %s25, 0
      %p234 = por %p232, %p233
      %p235 = scmp.ne.s32.totalorder %s227, %s229
      %p236 = scmp.eq.s32.totalorder %s30, 1
      %p237 = por %p235, %p236
      %p238 = scmp.ne.s32.totalorder %s229, %s230
      %p239 = scmp.eq.s32.totalorder %s30, 0
      %p240 = por %p238, %p239
      %p241 = scmp.ne.s32.totalorder %s229, %s230
      %p242 = scmp.eq.s32.totalorder %s31, 1
      %p243 = por %p241, %p242
      %p245 = scmp.ne.s32.totalorder %s230, %s244
      %p246 = scmp.eq.s32.totalorder %s31, 0
      %p247 = por %p245, %p246
      %s249 = sadd.s32 %s248, 1
      %p252 = scmp.eq.s32.totalorder %s25, 1
      %p253 = scmp.ne.s32.totalorder %s248, %s250
      %p254 = scmp.eq.s32.totalorder %s25, 0
      %p255 = por %p253, %p254
      %p256 = scmp.ne.s32.totalorder %s248, %s250
      %p257 = scmp.eq.s32.totalorder %s30, 1
      %p258 = por %p256, %p257
      %p259 = scmp.ne.s32.totalorder %s250, %s251
      %p260 = scmp.eq.s32.totalorder %s30, 0
      %p261 = por %p259, %p260
      %p262 = scmp.ne.s32.totalorder %s250, %s251
      %p263 = scmp.eq.s32.totalorder %s31, 1
      %p264 = por %p262, %p263
      %p266 = scmp.ne.s32.totalorder %s251, %s265
      %p267 = scmp.eq.s32.totalorder %s31, 0
      %p268 = por %p266, %p267
      %s270 = sadd.s32 %s269, 1
      %p273 = scmp.eq.s32.totalorder %s25, 1
      %p274 = scmp.ne.s32.totalorder %s269, %s271
      %p275 = scmp.eq.s32.totalorder %s25, 0
      %p276 = por %p274, %p275
      %p277 = scmp.ne.s32.totalorder %s269, %s271
      %p278 = scmp.eq.s32.totalorder %s30, 1
      %p279 = por %p277, %p278
      %p280 = scmp.ne.s32.totalorder %s271, %s272
      %p281 = scmp.eq.s32.totalorder %s30, 0
      %p282 = por %p280, %p281
      %p283 = scmp.ne.s32.totalorder %s271, %s272
      %p284 = scmp.eq.s32.totalorder %s31, 1
      %p285 = por %p283, %p284
      %p287 = scmp.ne.s32.totalorder %s272, %s286
      %p288 = scmp.eq.s32.totalorder %s31, 0
      %p289 = por %p287, %p288
      %s291 = sadd.s32 %s290, 1
      %p294 = scmp.eq.s32.totalorder %s25, 1
      %p295 = scmp.ne.s32.totalorder %s290, %s292
      %p296 = scmp.eq.s32.totalorder %s25, 0
      %p297 = por %p295, %p296
      %p298 = scmp.ne.s32.totalorder %s290, %s292
      %p299 = scmp.eq.s32.totalorder %s30, 1
      %p300 = por %p298, %p299
      %p301 = scmp.ne.s32.totalorder %s292, %s293
      %p302 = scmp.eq.s32.totalorder %s30, 0
      %p303 = por %p301, %p302
      %p304 = scmp.ne.s32.totalorder %s292, %s293
      %p305 = scmp.eq.s32.totalorder %s31, 1
      %p306 = por %p304, %p305
      %p308 = scmp.ne.s32.totalorder %s293, %s307
      %p309 = scmp.eq.s32.totalorder %s31, 0
      %p310 = por %p308, %p309
      %s311 = ssub.s32 %s25, %s32
      %p312 = scmp.eq.s32.totalorder %s311, 0
      %s314 = sadd.s32 %s313, 1
      %s315 = scalar_select %p312, %s313, %s314
      %p318 = pneg %p312
      %p319 = scmp.eq.s32.totalorder %s25, 1
      %p320 = por %p318, %p319
      %p321 = scmp.ne.s32.totalorder %s313, %s316
      %p322 = scmp.eq.s32.totalorder %s25, 0
      %p323 = por %p321, %p322
      %p324 = scmp.ne.s32.totalorder %s313, %s316
      %p325 = scmp.eq.s32.totalorder %s30, 1
      %p326 = por %p324, %p325
      %p327 = scmp.ne.s32.totalorder %s316, %s317
      %p328 = scmp.eq.s32.totalorder %s30, 0
      %p329 = por %p327, %p328
      %p330 = scmp.ne.s32.totalorder %s316, %s317
      %p331 = scmp.eq.s32.totalorder %s31, 1
      %p332 = por %p330, %p331
      %p334 = scmp.ne.s32.totalorder %s317, %s333
      %p335 = scmp.eq.s32.totalorder %s31, 0
      %p336 = por %p334, %p335
      %p337 = scmp.le.s32.totalorder 1, %s25
      %p338 = scmp.lt.s32.totalorder %s25, 3
      %p339 = pnand %p337, %p338
      %p340 = pneg %p339
      // Predicated region
      $region9: #{generator_b_forward.1} parent=5 // pred_check
        _
      $region10: #{generator_b_forward.1} parent=5 // pred_check_branch
        %342 = sbr.rel (%p339) target = $region12
      $region11: #{generator_b_forward.1} parent=5 // pred_region
        %s343 = ssub.s32 %s25, 1
        // Predicated region
        $region13: #{generator_b_forward.1} parent=11 // pred_check
          %p344 = pneg %p72
        $region14: #{generator_b_forward.1} parent=11 // pred_check_branch
          %346 = sbr.rel (%p344) target = $region16
        $region15: #{generator_b_forward.1} parent=11 // pred_region
          %s348 = ssub.s32 1152, 1152
          %349 = vsyncadd [#allocation4], %s348
          %s350 = sshll.u32 [#allocation3], 4
          %s351 = int_to_ptr.vmem [resolvable:$true] %s350
          %356 = dma.hbm_to_vmem [thread:$0]  %s1, 1152, %s351, [#allocation4], 128, 128, 8
        $region16: #{generator_b_forward.1} parent=11 // pred_fallthru
          _
        // Predicated region
        $region17: #{generator_b_forward.1} parent=11 // pred_check
          %p357 = pneg %p93
        $region18: #{generator_b_forward.1} parent=11 // pred_check_branch
          %359 = sbr.rel (%p357) target = $region20
        $region19: #{generator_b_forward.1} parent=11 // pred_region
          _
        $region20: #{generator_b_forward.1} parent=11 // pred_fallthru
          _
        // Predicated region
        $region21: #{generator_b_forward.1} parent=11 // pred_check
          %p360 = pneg %p114
        $region22: #{generator_b_forward.1} parent=11 // pred_check_branch
          %362 = sbr.rel (%p360) target = $region24
        $region23: #{generator_b_forward.1} parent=11 // pred_region
          %s364 = ssub.s32 7168, 7168
          %365 = vsyncadd [#allocation7], %s364
          %s366 = sshll.u32 [#allocation6], 4
          %s367 = int_to_ptr.vmem [resolvable:$true] %s366
          %372 = dma.hbm_to_vmem [thread:$0]  %s3, 7168, %s367, [#allocation7], 64, 64, 4
        $region24: #{generator_b_forward.1} parent=11 // pred_fallthru
          _
        // Predicated region
        $region25: #{generator_b_forward.1} parent=11 // pred_check
          %p373 = pneg %p135
        $region26: #{generator_b_forward.1} parent=11 // pred_check_branch
          %375 = sbr.rel (%p373) target = $region28
        $region27: #{generator_b_forward.1} parent=11 // pred_region
          _
        $region28: #{generator_b_forward.1} parent=11 // pred_fallthru
          _
        // Predicated region
        $region29: #{generator_b_forward.1} parent=11 // pred_check
          %p376 = pneg %p156
        $region30: #{generator_b_forward.1} parent=11 // pred_check_branch
          %378 = sbr.rel (%p376) target = $region32
        $region31: #{generator_b_forward.1} parent=11 // pred_region
          %s380 = ssub.s32 5120, 5120
          %381 = vsyncadd [#allocation7], %s380
          %s382 = sshll.u32 [#allocation8], 4
          %s383 = int_to_ptr.vmem [resolvable:$true] %s382
          %388 = dma.hbm_to_vmem [thread:$0]  %s5, 5120, %s383, [#allocation7], 64, 64, 4
        $region32: #{generator_b_forward.1} parent=11 // pred_fallthru
          _
        // Predicated region
        $region33: #{generator_b_forward.1} parent=11 // pred_check
          %p389 = pneg %p177
        $region34: #{generator_b_forward.1} parent=11 // pred_check_branch
          %391 = sbr.rel (%p389) target = $region36
        $region35: #{generator_b_forward.1} parent=11 // pred_region
          _
        $region36: #{generator_b_forward.1} parent=11 // pred_fallthru
          _
        // Predicated region
        $region37: #{generator_b_forward.1} parent=11 // pred_check
          %p392 = pneg %p198
        $region38: #{generator_b_forward.1} parent=11 // pred_check_branch
          %394 = sbr.rel (%p392) target = $region40
        $region39: #{generator_b_forward.1} parent=11 // pred_region
          %s396 = ssub.s32 3072, 3072
          %397 = vsyncadd [#allocation10], %s396
          %s398 = sshll.u32 [#allocation9], 4
          %s399 = int_to_ptr.vmem [resolvable:$true] %s398
          %404 = dma.hbm_to_vmem [thread:$0]  %s7, 3072, %s399, [#allocation10], 64, 64, 4
        $region40: #{generator_b_forward.1} parent=11 // pred_fallthru
          _
        // Predicated region
        $region41: #{generator_b_forward.1} parent=11 // pred_check
          %p405 = pneg %p219
        $region42: #{generator_b_forward.1} parent=11 // pred_check_branch
          %407 = sbr.rel (%p405) target = $region44
        $region43: #{generator_b_forward.1} parent=11 // pred_region
          _
        $region44: #{generator_b_forward.1} parent=11 // pred_fallthru
          _
        // Predicated region
        $region45: #{generator_b_forward.1} parent=11 // pred_check
          %p408 = pneg %p240
        $region46: #{generator_b_forward.1} parent=11 // pred_check_branch
          %410 = sbr.rel (%p408) target = $region48
        $region47: #{generator_b_forward.1} parent=11 // pred_region
          %s412 = ssub.s32 16384, 16384
          %413 = vsyncadd [#allocation10], %s412
          %s414 = sshll.u32 [#allocation11], 4
          %s415 = int_to_ptr.vmem [resolvable:$true] %s414
          %420 = dma.hbm_to_vmem [thread:$0]  %s9, 16384, %s415, [#allocation10], 64, 64, 4
        $region48: #{generator_b_forward.1} parent=11 // pred_fallthru
          _
        // Predicated region
        $region49: #{generator_b_forward.1} parent=11 // pred_check
          %p421 = pneg %p261
        $region50: #{generator_b_forward.1} parent=11 // pred_check_branch
          %423 = sbr.rel (%p421) target = $region52
        $region51: #{generator_b_forward.1} parent=11 // pred_region
          _
        $region52: #{generator_b_forward.1} parent=11 // pred_fallthru
          _
        // Predicated region
        $region53: #{generator_b_forward.1} parent=11 // pred_check
          %p424 = pneg %p282
        $region54: #{generator_b_forward.1} parent=11 // pred_check_branch
          %426 = sbr.rel (%p424) target = $region56
        $region55: #{generator_b_forward.1} parent=11 // pred_region
          _
        $region56: #{generator_b_forward.1} parent=11 // pred_fallthru
          _
        // Predicated region
        $region57: #{generator_b_forward.1} parent=11 // pred_check
          %p427 = pneg %p303
        $region58: #{generator_b_forward.1} parent=11 // pred_check_branch
          %429 = sbr.rel (%p427) target = $region60
        $region59: #{generator_b_forward.1} parent=11 // pred_region
          _
        $region60: #{generator_b_forward.1} parent=11 // pred_fallthru
          _
      $region12: #{generator_b_forward.1} parent=5 // pred_fallthru
        _
      %p430 = scmp.lt.s32.totalorder %s25, 2
      // Predicated region
      $region61: #{generator_b_forward.1} parent=5 // pred_check
        %p431 = pneg %p430
      $region62: #{generator_b_forward.1} parent=5 // pred_check_branch
        %433 = sbr.rel (%p431) target = $region64
      $region63: #{generator_b_forward.1} parent=5 // pred_region
        // Predicated region
        $region65: #{generator_b_forward.1} parent=63 // pred_check
          %p434 = pneg %p45
        $region66: #{generator_b_forward.1} parent=63 // pred_check_branch
          %436 = sbr.rel (%p434) target = $region68
        $region67: #{generator_b_forward.1} parent=63 // pred_region
          %p437 = scmp.lt.s32.totalorder %s25, 1
          %s438 = scalar_select %p437, %s25, 1
          %s439 = smul.addr %s438, 4
          %s440 = smul.addr %s439, 8
          %s441 = scalar_lea.vmem %s0, %s440
        $region68: #{generator_b_forward.1} parent=63 // pred_fallthru
          _
      $region64: #{generator_b_forward.1} parent=5 // pred_fallthru
        _
      %p442 = scmp.le.s32.totalorder 1, %s25
      %p443 = scmp.lt.s32.totalorder %s25, 3
      %p444 = pnand %p442, %p443
      %p445 = pneg %p444
      // Predicated region
      $region69: #{generator_b_forward.1} parent=5 // pred_check
        _
      $region70: #{generator_b_forward.1} parent=5 // pred_check_branch
        %447 = sbr.rel (%p444) target = $region72
      $region71: #{generator_b_forward.1} parent=5 // pred_region
        %s448 = ssub.s32 %s25, 1
        // Predicated region
        $region73: #{generator_b_forward.1} parent=71 // pred_check
          %p449 = pneg %p72
        $region74: #{generator_b_forward.1} parent=71 // pred_check_branch
          %451 = sbr.rel (%p449) target = $region76
        $region75: #{generator_b_forward.1} parent=71 // pred_region
          %452 = dma.done [#allocation4], 1152
        $region76: #{generator_b_forward.1} parent=71 // pred_fallthru
          _
        // Predicated region
        $region77: #{generator_b_forward.1} parent=71 // pred_check
          %p453 = pneg %p114
        $region78: #{generator_b_forward.1} parent=71 // pred_check_branch
          %455 = sbr.rel (%p453) target = $region80
        $region79: #{generator_b_forward.1} parent=71 // pred_region
          %456 = dma.done [#allocation7], 7168
        $region80: #{generator_b_forward.1} parent=71 // pred_fallthru
          _
        // Predicated region
        $region81: #{generator_b_forward.1} parent=71 // pred_check
          %p457 = pneg %p156
        $region82: #{generator_b_forward.1} parent=71 // pred_check_branch
          %459 = sbr.rel (%p457) target = $region84
        $region83: #{generator_b_forward.1} parent=71 // pred_region
          %460 = dma.done [#allocation7], 5120
        $region84: #{generator_b_forward.1} parent=71 // pred_fallthru
          _
        // Predicated region
        $region85: #{generator_b_forward.1} parent=71 // pred_check
          %p461 = pneg %p198
        $region86: #{generator_b_forward.1} parent=71 // pred_check_branch
          %463 = sbr.rel (%p461) target = $region88
        $region87: #{generator_b_forward.1} parent=71 // pred_region
          %464 = dma.done [#allocation10], 3072
        $region88: #{generator_b_forward.1} parent=71 // pred_fallthru
          _
        // Predicated region
        $region89: #{generator_b_forward.1} parent=71 // pred_check
          %p465 = pneg %p240
        $region90: #{generator_b_forward.1} parent=71 // pred_check_branch
          %467 = sbr.rel (%p465) target = $region92
        $region91: #{generator_b_forward.1} parent=71 // pred_region
          %468 = dma.done [#allocation10], 16384
        $region92: #{generator_b_forward.1} parent=71 // pred_fallthru
          _
        %p469 = scmp.lt.s32.totalorder %s30, 1
        %s470 = scalar_select %p469, %s30, 1
        %s471 = smul.addr %s470, 4
        %s472 = smul.addr %s471, 8
        %s473 = scalar_lea.vmem %s0, %s472
        %p474 = pneg %p51
        %p475 = pneg %p48
        %p476 = pneg %p72
        %p477 = pneg %p69
        %p478 = pneg %p93
        %p479 = pneg %p90
        %p480 = pneg %p114
        %p481 = pneg %p111
        %p482 = pneg %p135
        %p483 = pneg %p132
        %p484 = pneg %p156
        %p485 = pneg %p153
        %p486 = pneg %p177
        %p487 = pneg %p174
        %p488 = pneg %p198
        %p489 = pneg %p195
        %p490 = pneg %p219
        %p491 = pneg %p216
        %p492 = pneg %p240
        %p493 = pneg %p237
        %p494 = pneg %p261
        %p495 = pneg %p258
        %p496 = pneg %p282
        %p497 = pneg %p279
        %p498 = pneg %p303
        %p499 = pneg %p300
        %p500 = pneg %p329
        %p501 = pneg %p326
        %s502 = sand.u32 %s316, 1
        %s503 = scalar_lea.sflag [#allocation5], %s502
        %s504 = sand.u32 %s316, 1
        %s505 = scalar_lea.vmem [#allocation12], %s504
        %p506 = scmp.lt.s32.totalorder %s30, 1
        %s507 = scalar_select %p506, %s30, 1
        %s508 = smul.addr %s507, 4
        %s509 = smul.addr %s508, 8
        %s510 = scalar_lea.vmem %s0, %s509
        %512 = vst [vmem:[#allocation2] sm:$0xff] 0.0
        %513 = vst [vmem:[#allocation2 + $0x18] sm:$0xff] 0.0
        %v514 = vld [vmem:[%s510 + $0x4] sm:$0xff]
        %v515 = vld [vmem:[%s510 + $0xc] sm:$0xff]
        %v516 = vld [vmem:[#allocation3] sm:$0xff]
        %v517 = vld [vmem:[%s510 + $0x5] sm:$0xff]
        %v518 = vld [vmem:[%s510 + $0xd] sm:$0xff]
        %s519 = scalar_lea.vmem [#allocation3], 8
        %v520 = vld [vmem:[%s519] sm:$0xff]
        %vm521 = vcmask 64512
        %v523 = vsel %vm521, %v517, 0
        %v526 = vsel %vm521, %v518, 0
        %528 = vmatprep.subr.mxu0 0.0
        %529 = vmatpush1.msra.mxu0 %v520
        %530 = vmatprep.subr.mxu0 0.0
        %531 = vmatpush1.msra.mxu0 0.0
        %532 = vmatprep.subr.mxu0 0.0
        %533 = vmatpush1.msra.mxu0 0.0
        %534 = vmatprep.subr.mxu0 0.0
        %535 = vmatpush1.msra.mxu0 0.0
        %536 = vmatprep.subr.mxu0 0.0
        %537 = vmatpush1.msra.mxu0 0.0
        %538 = vmatprep.subr.mxu0 0.0
        %539 = vmatpush1.msra.mxu0 0.0
        %540 = vmatprep.subr.mxu0 0.0
        %541 = vmatpush1.msra.mxu0 0.0
        %542 = vmatprep.subr.mxu0 0.0
        %543 = vmatpush1.msra.mxu0 0.0
        %544 = vmatprep.subr.mxu0 0.0
        %545 = vmatpush1.msra.mxu0 0.0
        %546 = vmatprep.subr.mxu0 0.0
        %547 = vmatpush1.msra.mxu0 0.0
        %548 = vmatprep.subr.mxu0 0.0
        %549 = vmatpush1.msra.mxu0 0.0
        %550 = vmatprep.subr.mxu0 0.0
        %551 = vmatpush1.msra.mxu0 0.0
        %552 = vmatprep.subr.mxu0 0.0
        %553 = vmatpush1.msra.mxu0 0.0
        %554 = vmatprep.subr.mxu0 0.0
        %555 = vmatpush1.msra.mxu0 0.0
        %556 = vmatprep.subr.mxu0 0.0
        %557 = vmatpush1.msra.mxu0 0.0
        %558 = vmatprep.subr.mxu0 0.0
        %559 = vmatpush1.msra.mxu0 0.0
        %560 = vmatprep.subr.mxu0 0.0
        %561 = vmatpush1.msra.mxu0 0.0
        %562 = vmatprep.subr.mxu0 0.0
        %563 = vmatpush1.msra.mxu0 0.0
        %564 = vmatprep.subr.mxu0 0.0
        %565 = vmatpush1.msra.mxu0 0.0
        %566 = vmatprep.subr.mxu0 0.0
        %567 = vmatpush1.msra.mxu0 0.0
        %568 = vmatprep.subr.mxu0 0.0
        %569 = vmatpush1.msra.mxu0 0.0
        %570 = vmatprep.subr.mxu0 0.0
        %571 = vmatpush1.msra.mxu0 0.0
        %572 = vmatprep.subr.mxu0 0.0
        %573 = vmatpush1.msra.mxu0 0.0
        %574 = vmatprep.subr.mxu0 0.0
        %575 = vmatpush1.msra.mxu0 0.0
        %576 = vmatprep.subr.mxu0 0.0
        %577 = vmatpush1.msra.mxu0 0.0
        %578 = vmatprep.subr.mxu0 0.0
        %579 = vmatpush1.msra.mxu0 0.0
        %580 = vmatprep.subr.mxu0 0.0
        %581 = vmatpush1.msra.mxu0 0.0
        %582 = vmatprep.subr.mxu0 0.0
        %583 = vmatpush1.msra.mxu0 0.0
        %584 = vmatprep.subr.mxu0 0.0
        %585 = vmatpush1.msra.mxu0 0.0
        %586 = vmatprep.subr.mxu0 0.0
        %587 = vmatpush1.msra.mxu0 0.0
        %588 = vmatprep.subr.mxu0 0.0
        %589 = vmatpush1.msra.mxu0 0.0
        %590 = vmatprep.subr.mxu0 0.0
        %591 = vmatpush1.msra.mxu0 0.0
        %592 = vmatprep.mubr.f32.mxu0 0.0
        %593 = vmatmul.mubr.f32.gmra.mrb[0].mxu0 %v523
        %v594 = vpop.f32.mrb[0].mxu0
        %v595 = vadd.f32 0.0, %v594
        %v596 = vpop.f32.mrb[0].mxu0
        %597 = vmatprep.mubr.f32.mxu0 0.0
        %598 = vmatmul.mubr.f32.gmra.mrb[0].mxu0 %v526
        %v599 = vpop.f32.mrb[0].mxu0
        %v600 = vadd.f32 0.0, %v599
        %v601 = vpop.f32.mrb[0].mxu0
        %602 = vdwg.mxu0
        %v604 = vsel %vm521, %v514, 0
        %v607 = vsel %vm521, %v515, 0
        %609 = vmatprep.subr.mxu0 0.0
        %610 = vmatpush1.msra.mxu0 %v516
        %611 = vmatprep.subr.mxu0 0.0
        %612 = vmatpush1.msra.mxu0 0.0
        %613 = vmatprep.subr.mxu0 0.0
        %614 = vmatpush1.msra.mxu0 0.0
        %615 = vmatprep.subr.mxu0 0.0
        %616 = vmatpush1.msra.mxu0 0.0
        %617 = vmatprep.subr.mxu0 0.0
        %618 = vmatpush1.msra.mxu0 0.0
        %619 = vmatprep.subr.mxu0 0.0
        %620 = vmatpush1.msra.mxu0 0.0
        %621 = vmatprep.subr.mxu0 0.0
        %622 = vmatpush1.msra.mxu0 0.0
        %623 = vmatprep.subr.mxu0 0.0
        %624 = vmatpush1.msra.mxu0 0.0
        %625 = vmatprep.subr.mxu0 0.0
        %626 = vmatpush1.msra.mxu0 0.0
        %627 = vmatprep.subr.mxu0 0.0
        %628 = vmatpush1.msra.mxu0 0.0
        %629 = vmatprep.subr.mxu0 0.0
        %630 = vmatpush1.msra.mxu0 0.0
        %631 = vmatprep.subr.mxu0 0.0
        %632 = vmatpush1.msra.mxu0 0.0
        %633 = vmatprep.subr.mxu0 0.0
        %634 = vmatpush1.msra.mxu0 0.0
        %635 = vmatprep.subr.mxu0 0.0
        %636 = vmatpush1.msra.mxu0 0.0
        %637 = vmatprep.subr.mxu0 0.0
        %638 = vmatpush1.msra.mxu0 0.0
        %639 = vmatprep.subr.mxu0 0.0
        %640 = vmatpush1.msra.mxu0 0.0
        %641 = vmatprep.subr.mxu0 0.0
        %642 = vmatpush1.msra.mxu0 0.0
        %643 = vmatprep.subr.mxu0 0.0
        %644 = vmatpush1.msra.mxu0 0.0
        %645 = vmatprep.subr.mxu0 0.0
        %646 = vmatpush1.msra.mxu0 0.0
        %647 = vmatprep.subr.mxu0 0.0
        %648 = vmatpush1.msra.mxu0 0.0
        %649 = vmatprep.subr.mxu0 0.0
        %650 = vmatpush1.msra.mxu0 0.0
        %651 = vmatprep.subr.mxu0 0.0
        %652 = vmatpush1.msra.mxu0 0.0
        %653 = vmatprep.subr.mxu0 0.0
        %654 = vmatpush1.msra.mxu0 0.0
        %655 = vmatprep.subr.mxu0 0.0
        %656 = vmatpush1.msra.mxu0 0.0
        %657 = vmatprep.subr.mxu0 0.0
        %658 = vmatpush1.msra.mxu0 0.0
        %659 = vmatprep.subr.mxu0 0.0
        %660 = vmatpush1.msra.mxu0 0.0
        %661 = vmatprep.subr.mxu0 0.0
        %662 = vmatpush1.msra.mxu0 0.0
        %663 = vmatprep.subr.mxu0 0.0
        %664 = vmatpush1.msra.mxu0 0.0
        %665 = vmatprep.subr.mxu0 0.0
        %666 = vmatpush1.msra.mxu0 0.0
        %667 = vmatprep.subr.mxu0 0.0
        %668 = vmatpush1.msra.mxu0 0.0
        %669 = vmatprep.subr.mxu0 0.0
        %670 = vmatpush1.msra.mxu0 0.0
        %671 = vmatprep.subr.mxu0 0.0
        %672 = vmatpush1.msra.mxu0 0.0
        %673 = vmatprep.mubr.f32.mxu0 0.0
        %674 = vmatmul.mubr.f32.gmra.mrb[0].mxu0 %v604
        %v675 = vpop.f32.mrb[0].mxu0
        %v676 = vadd.f32 %v595, %v675
        %v677 = vpop.f32.mrb[0].mxu0
        %678 = vmatprep.mubr.f32.mxu0 0.0
        %679 = vmatmul.mubr.f32.gmra.mrb[0].mxu0 %v607
        %v680 = vpop.f32.mrb[0].mxu0
        %v681 = vadd.f32 %v600, %v680
        %v682 = vpop.f32.mrb[0].mxu0
        %683 = vdwg.mxu0
        %v684 = vld [vmem:[%s510 + $0x6] sm:$0xff]
        %v685 = vld [vmem:[%s510 + $0xe] sm:$0xff]
        %s686 = scalar_lea.vmem [#allocation3], 16
        %v687 = vld [vmem:[%s686] sm:$0xff]
        %v689 = vsel %vm521, %v684, 0
        %v692 = vsel %vm521, %v685, 0
        %694 = vmatprep.subr.mxu0 0.0
        %695 = vmatpush1.msra.mxu0 %v687
        %696 = vmatprep.subr.mxu0 0.0
        %697 = vmatpush1.msra.mxu0 0.0
        %698 = vmatprep.subr.mxu0 0.0
        %699 = vmatpush1.msra.mxu0 0.0
        %700 = vmatprep.subr.mxu0 0.0
        %701 = vmatpush1.msra.mxu0 0.0
        %702 = vmatprep.subr.mxu0 0.0
        %703 = vmatpush1.msra.mxu0 0.0
        %704 = vmatprep.subr.mxu0 0.0
        %705 = vmatpush1.msra.mxu0 0.0
        %706 = vmatprep.subr.mxu0 0.0
        %707 = vmatpush1.msra.mxu0 0.0
        %708 = vmatprep.subr.mxu0 0.0
        %709 = vmatpush1.msra.mxu0 0.0
        %710 = vmatprep.subr.mxu0 0.0
        %711 = vmatpush1.msra.mxu0 0.0
        %712 = vmatprep.subr.mxu0 0.0
        %713 = vmatpush1.msra.mxu0 0.0
        %714 = vmatprep.subr.mxu0 0.0
        %715 = vmatpush1.msra.mxu0 0.0
        %716 = vmatprep.subr.mxu0 0.0
        %717 = vmatpush1.msra.mxu0 0.0
        %718 = vmatprep.subr.mxu0 0.0
        %719 = vmatpush1.msra.mxu0 0.0
        %720 = vmatprep.subr.mxu0 0.0
        %721 = vmatpush1.msra.mxu0 0.0
        %722 = vmatprep.subr.mxu0 0.0
        %723 = vmatpush1.msra.mxu0 0.0
        %724 = vmatprep.subr.mxu0 0.0
        %725 = vmatpush1.msra.mxu0 0.0
        %726 = vmatprep.subr.mxu0 0.0
        %727 = vmatpush1.msra.mxu0 0.0
        %728 = vmatprep.subr.mxu0 0.0
        %729 = vmatpush1.msra.mxu0 0.0
        %730 = vmatprep.subr.mxu0 0.0
        %731 = vmatpush1.msra.mxu0 0.0
        %732 = vmatprep.subr.mxu0 0.0
        %733 = vmatpush1.msra.mxu0 0.0
        %734 = vmatprep.subr.mxu0 0.0
        %735 = vmatpush1.msra.mxu0 0.0
        %736 = vmatprep.subr.mxu0 0.0
        %737 = vmatpush1.msra.mxu0 0.0
        %738 = vmatprep.subr.mxu0 0.0
        %739 = vmatpush1.msra.mxu0 0.0
        %740 = vmatprep.subr.mxu0 0.0
        %741 = vmatpush1.msra.mxu0 0.0
        %742 = vmatprep.subr.mxu0 0.0
        %743 = vmatpush1.msra.mxu0 0.0
        %744 = vmatprep.subr.mxu0 0.0
        %745 = vmatpush1.msra.mxu0 0.0
        %746 = vmatprep.subr.mxu0 0.0
        %747 = vmatpush1.msra.mxu0 0.0
        %748 = vmatprep.subr.mxu0 0.0
        %749 = vmatpush1.msra.mxu0 0.0
        %750 = vmatprep.subr.mxu0 0.0
        %751 = vmatpush1.msra.mxu0 0.0
        %752 = vmatprep.subr.mxu0 0.0
        %753 = vmatpush1.msra.mxu0 0.0
        %754 = vmatprep.subr.mxu0 0.0
        %755 = vmatpush1.msra.mxu0 0.0
        %756 = vmatprep.subr.mxu0 0.0
        %757 = vmatpush1.msra.mxu0 0.0
        %758 = vmatprep.mubr.f32.mxu0 0.0
        %759 = vmatmul.mubr.f32.gmra.mrb[0].mxu0 %v689
        %v760 = vpop.f32.mrb[0].mxu0
        %v761 = vadd.f32 0.0, %v760
        %v762 = vpop.f32.mrb[0].mxu0
        %763 = vmatprep.mubr.f32.mxu0 0.0
        %764 = vmatmul.mubr.f32.gmra.mrb[0].mxu0 %v692
        %v765 = vpop.f32.mrb[0].mxu0
        %v766 = vadd.f32 0.0, %v765
        %v767 = vpop.f32.mrb[0].mxu0
        %768 = vdwg.mxu0
        %v769 = vadd.f32 %v676, %v761
        %v770 = vadd.f32 %v681, %v766
        %v771 = vld [vmem:[%s510 + $0x7] sm:$0xff]
        %v772 = vld [vmem:[%s510 + $0xf] sm:$0xff]
        %s773 = scalar_lea.vmem [#allocation3], 24
        %v774 = vld [vmem:[%s773] sm:$0xff]
        %v776 = vsel %vm521, %v771, 0
        %v779 = vsel %vm521, %v772, 0
        %781 = vmatprep.subr.mxu0 0.0
        %782 = vmatpush1.msra.mxu0 %v774
        %783 = vmatprep.subr.mxu0 0.0
        %784 = vmatpush1.msra.mxu0 0.0
        %785 = vmatprep.subr.mxu0 0.0
        %786 = vmatpush1.msra.mxu0 0.0
        %787 = vmatprep.subr.mxu0 0.0
        %788 = vmatpush1.msra.mxu0 0.0
        %789 = vmatprep.subr.mxu0 0.0
        %790 = vmatpush1.msra.mxu0 0.0
        %791 = vmatprep.subr.mxu0 0.0
        %792 = vmatpush1.msra.mxu0 0.0
        %793 = vmatprep.subr.mxu0 0.0
        %794 = vmatpush1.msra.mxu0 0.0
        %795 = vmatprep.subr.mxu0 0.0
        %796 = vmatpush1.msra.mxu0 0.0
        %797 = vmatprep.subr.mxu0 0.0
        %798 = vmatpush1.msra.mxu0 0.0
        %799 = vmatprep.subr.mxu0 0.0
        %800 = vmatpush1.msra.mxu0 0.0
        %801 = vmatprep.subr.mxu0 0.0
        %802 = vmatpush1.msra.mxu0 0.0
        %803 = vmatprep.subr.mxu0 0.0
        %804 = vmatpush1.msra.mxu0 0.0
        %805 = vmatprep.subr.mxu0 0.0
        %806 = vmatpush1.msra.mxu0 0.0
        %807 = vmatprep.subr.mxu0 0.0
        %808 = vmatpush1.msra.mxu0 0.0
        %809 = vmatprep.subr.mxu0 0.0
        %810 = vmatpush1.msra.mxu0 0.0
        %811 = vmatprep.subr.mxu0 0.0
        %812 = vmatpush1.msra.mxu0 0.0
        %813 = vmatprep.subr.mxu0 0.0
        %814 = vmatpush1.msra.mxu0 0.0
        %815 = vmatprep.subr.mxu0 0.0
        %816 = vmatpush1.msra.mxu0 0.0
        %817 = vmatprep.subr.mxu0 0.0
        %818 = vmatpush1.msra.mxu0 0.0
        %819 = vmatprep.subr.mxu0 0.0
        %820 = vmatpush1.msra.mxu0 0.0
        %821 = vmatprep.subr.mxu0 0.0
        %822 = vmatpush1.msra.mxu0 0.0
        %823 = vmatprep.subr.mxu0 0.0
        %824 = vmatpush1.msra.mxu0 0.0
        %825 = vmatprep.subr.mxu0 0.0
        %826 = vmatpush1.msra.mxu0 0.0
        %827 = vmatprep.subr.mxu0 0.0
        %828 = vmatpush1.msra.mxu0 0.0
        %829 = vmatprep.subr.mxu0 0.0
        %830 = vmatpush1.msra.mxu0 0.0
        %831 = vmatprep.subr.mxu0 0.0
        %832 = vmatpush1.msra.mxu0 0.0
        %833 = vmatprep.subr.mxu0 0.0
        %834 = vmatpush1.msra.mxu0 0.0
        %835 = vmatprep.subr.mxu0 0.0
        %836 = vmatpush1.msra.mxu0 0.0
        %837 = vmatprep.subr.mxu0 0.0
        %838 = vmatpush1.msra.mxu0 0.0
        %839 = vmatprep.subr.mxu0 0.0
        %840 = vmatpush1.msra.mxu0 0.0
        %841 = vmatprep.subr.mxu0 0.0
        %842 = vmatpush1.msra.mxu0 0.0
        %843 = vmatprep.subr.mxu0 0.0
        %844 = vmatpush1.msra.mxu0 0.0
        %845 = vmatprep.mubr.f32.mxu0 0.0
        %846 = vmatmul.mubr.f32.gmra.mrb[0].mxu0 %v776
        %v847 = vpop.f32.mrb[0].mxu0
        %v848 = vadd.f32 0.0, %v847
        %v849 = vpop.f32.mrb[0].mxu0
        %850 = vmatprep.mubr.f32.mxu0 0.0
        %851 = vmatmul.mubr.f32.gmra.mrb[0].mxu0 %v779
        %v852 = vpop.f32.mrb[0].mxu0
        %v853 = vadd.f32 0.0, %v852
        %v854 = vpop.f32.mrb[0].mxu0
        %855 = vdwg.mxu0
        %v856 = vadd.f32 %v769, %v848
        %v857 = vadd.f32 %v770, %v853
        %v858 = vld [vmem:[%s510 + $0x8] sm:$0xff]
        %v859 = vld [vmem:[%s510 + $0x10] sm:$0xff]
        %s860 = scalar_lea.vmem [#allocation3], 32
        %v861 = vld [vmem:[%s860] sm:$0xff]
        %v863 = vsel %vm521, %v858, 0
        %v866 = vsel %vm521, %v859, 0
        %868 = vmatprep.subr.mxu0 0.0
        %869 = vmatpush1.msra.mxu0 %v861
        %870 = vmatprep.subr.mxu0 0.0
        %871 = vmatpush1.msra.mxu0 0.0
        %872 = vmatprep.subr.mxu0 0.0
        %873 = vmatpush1.msra.mxu0 0.0
        %874 = vmatprep.subr.mxu0 0.0
        %875 = vmatpush1.msra.mxu0 0.0
        %876 = vmatprep.subr.mxu0 0.0
        %877 = vmatpush1.msra.mxu0 0.0
        %878 = vmatprep.subr.mxu0 0.0
        %879 = vmatpush1.msra.mxu0 0.0
        %880 = vmatprep.subr.mxu0 0.0
        %881 = vmatpush1.msra.mxu0 0.0
        %882 = vmatprep.subr.mxu0 0.0
        %883 = vmatpush1.msra.mxu0 0.0
        %884 = vmatprep.subr.mxu0 0.0
        %885 = vmatpush1.msra.mxu0 0.0
        %886 = vmatprep.subr.mxu0 0.0
        %887 = vmatpush1.msra.mxu0 0.0
        %888 = vmatprep.subr.mxu0 0.0
        %889 = vmatpush1.msra.mxu0 0.0
        %890 = vmatprep.subr.mxu0 0.0
        %891 = vmatpush1.msra.mxu0 0.0
        %892 = vmatprep.subr.mxu0 0.0
        %893 = vmatpush1.msra.mxu0 0.0
        %894 = vmatprep.subr.mxu0 0.0
        %895 = vmatpush1.msra.mxu0 0.0
        %896 = vmatprep.subr.mxu0 0.0
        %897 = vmatpush1.msra.mxu0 0.0
        %898 = vmatprep.subr.mxu0 0.0
        %899 = vmatpush1.msra.mxu0 0.0
        %900 = vmatprep.subr.mxu0 0.0
        %901 = vmatpush1.msra.mxu0 0.0
        %902 = vmatprep.subr.mxu0 0.0
        %903 = vmatpush1.msra.mxu0 0.0
        %904 = vmatprep.subr.mxu0 0.0
        %905 = vmatpush1.msra.mxu0 0.0
        %906 = vmatprep.subr.mxu0 0.0
        %907 = vmatpush1.msra.mxu0 0.0
        %908 = vmatprep.subr.mxu0 0.0
        %909 = vmatpush1.msra.mxu0 0.0
        %910 = vmatprep.subr.mxu0 0.0
        %911 = vmatpush1.msra.mxu0 0.0
        %912 = vmatprep.subr.mxu0 0.0
        %913 = vmatpush1.msra.mxu0 0.0
        %914 = vmatprep.subr.mxu0 0.0
        %915 = vmatpush1.msra.mxu0 0.0
        %916 = vmatprep.subr.mxu0 0.0
        %917 = vmatpush1.msra.mxu0 0.0
        %918 = vmatprep.subr.mxu0 0.0
        %919 = vmatpush1.msra.mxu0 0.0
        %920 = vmatprep.subr.mxu0 0.0
        %921 = vmatpush1.msra.mxu0 0.0
        %922 = vmatprep.subr.mxu0 0.0
        %923 = vmatpush1.msra.mxu0 0.0
        %924 = vmatprep.subr.mxu0 0.0
        %925 = vmatpush1.msra.mxu0 0.0
        %926 = vmatprep.subr.mxu0 0.0
        %927 = vmatpush1.msra.mxu0 0.0
        %928 = vmatprep.subr.mxu0 0.0
        %929 = vmatpush1.msra.mxu0 0.0
        %930 = vmatprep.subr.mxu0 0.0
        %931 = vmatpush1.msra.mxu0 0.0
        %932 = vmatprep.mubr.f32.mxu0 0.0
        %933 = vmatmul.mubr.f32.gmra.mrb[0].mxu0 %v863
        %v934 = vpop.f32.mrb[0].mxu0
        %v935 = vadd.f32 0.0, %v934
        %v936 = vpop.f32.mrb[0].mxu0
        %937 = vmatprep.mubr.f32.mxu0 0.0
        %938 = vmatmul.mubr.f32.gmra.mrb[0].mxu0 %v866
        %v939 = vpop.f32.mrb[0].mxu0
        %v940 = vadd.f32 0.0, %v939
        %v941 = vpop.f32.mrb[0].mxu0
        %942 = vdwg.mxu0
        %v943 = vadd.f32 %v856, %v935
        %v944 = vadd.f32 %v857, %v940
        %v945 = vld [vmem:[%s510 + $0x9] sm:$0xff]
        %v946 = vld [vmem:[%s510 + $0x11] sm:$0xff]
        %s947 = scalar_lea.vmem [#allocation3], 40
        %v948 = vld [vmem:[%s947] sm:$0xff]
        %v950 = vsel %vm521, %v945, 0
        %v953 = vsel %vm521, %v946, 0
        %955 = vmatprep.subr.mxu0 0.0
        %956 = vmatpush1.msra.mxu0 %v948
        %957 = vmatprep.subr.mxu0 0.0
        %958 = vmatpush1.msra.mxu0 0.0
        %959 = vmatprep.subr.mxu0 0.0
        %960 = vmatpush1.msra.mxu0 0.0
        %961 = vmatprep.subr.mxu0 0.0
        %962 = vmatpush1.msra.mxu0 0.0
        %963 = vmatprep.subr.mxu0 0.0
        %964 = vmatpush1.msra.mxu0 0.0
        %965 = vmatprep.subr.mxu0 0.0
        %966 = vmatpush1.msra.mxu0 0.0
        %967 = vmatprep.subr.mxu0 0.0
        %968 = vmatpush1.msra.mxu0 0.0
        %969 = vmatprep.subr.mxu0 0.0
        %970 = vmatpush1.msra.mxu0 0.0
        %971 = vmatprep.subr.mxu0 0.0
        %972 = vmatpush1.msra.mxu0 0.0
        %973 = vmatprep.subr.mxu0 0.0
        %974 = vmatpush1.msra.mxu0 0.0
        %975 = vmatprep.subr.mxu0 0.0
        %976 = vmatpush1.msra.mxu0 0.0
        %977 = vmatprep.subr.mxu0 0.0
        %978 = vmatpush1.msra.mxu0 0.0
        %979 = vmatprep.subr.mxu0 0.0
        %980 = vmatpush1.msra.mxu0 0.0
        %981 = vmatprep.subr.mxu0 0.0
        %982 = vmatpush1.msra.mxu0 0.0
        %983 = vmatprep.subr.mxu0 0.0
        %984 = vmatpush1.msra.mxu0 0.0
        %985 = vmatprep.subr.mxu0 0.0
        %986 = vmatpush1.msra.mxu0 0.0
        %987 = vmatprep.subr.mxu0 0.0
        %988 = vmatpush1.msra.mxu0 0.0
        %989 = vmatprep.subr.mxu0 0.0
        %990 = vmatpush1.msra.mxu0 0.0
        %991 = vmatprep.subr.mxu0 0.0
        %992 = vmatpush1.msra.mxu0 0.0
        %993 = vmatprep.subr.mxu0 0.0
        %994 = vmatpush1.msra.mxu0 0.0
        %995 = vmatprep.subr.mxu0 0.0
        %996 = vmatpush1.msra.mxu0 0.0
        %997 = vmatprep.subr.mxu0 0.0
        %998 = vmatpush1.msra.mxu0 0.0
        %999 = vmatprep.subr.mxu0 0.0
        %1000 = vmatpush1.msra.mxu0 0.0
        %1001 = vmatprep.subr.mxu0 0.0
        %1002 = vmatpush1.msra.mxu0 0.0
        %1003 = vmatprep.subr.mxu0 0.0
        %1004 = vmatpush1.msra.mxu0 0.0
        %1005 = vmatprep.subr.mxu0 0.0
        %1006 = vmatpush1.msra.mxu0 0.0
        %1007 = vmatprep.subr.mxu0 0.0
        %1008 = vmatpush1.msra.mxu0 0.0
        %1009 = vmatprep.subr.mxu0 0.0
        %1010 = vmatpush1.msra.mxu0 0.0
        %1011 = vmatprep.subr.mxu0 0.0
        %1012 = vmatpush1.msra.mxu0 0.0
        %1013 = vmatprep.subr.mxu0 0.0
        %1014 = vmatpush1.msra.mxu0 0.0
        %1015 = vmatprep.subr.mxu0 0.0
        %1016 = vmatpush1.msra.mxu0 0.0
        %1017 = vmatprep.subr.mxu0 0.0
        %1018 = vmatpush1.msra.mxu0 0.0
        %1019 = vmatprep.mubr.f32.mxu0 0.0
        %1020 = vmatmul.mubr.f32.gmra.mrb[0].mxu0 %v950
        %v1021 = vpop.f32.mrb[0].mxu0
        %v1022 = vadd.f32 0.0, %v1021
        %v1023 = vpop.f32.mrb[0].mxu0
        %1024 = vmatprep.mubr.f32.mxu0 0.0
        %1025 = vmatmul.mubr.f32.gmra.mrb[0].mxu0 %v953
        %v1026 = vpop.f32.mrb[0].mxu0
        %v1027 = vadd.f32 0.0, %v1026
        %v1028 = vpop.f32.mrb[0].mxu0
        %1029 = vdwg.mxu0
        %v1030 = vadd.f32 %v943, %v1022
        %v1031 = vadd.f32 %v944, %v1027
        %v1032 = vld [vmem:[%s510 + $0xa] sm:$0xff]
        %v1033 = vld [vmem:[%s510 + $0x12] sm:$0xff]
        %s1034 = scalar_lea.vmem [#allocation3], 48
        %v1035 = vld [vmem:[%s1034] sm:$0xff]
        %v1037 = vsel %vm521, %v1032, 0
        %v1040 = vsel %vm521, %v1033, 0
        %1042 = vmatprep.subr.mxu0 0.0
        %1043 = vmatpush1.msra.mxu0 %v1035
        %1044 = vmatprep.subr.mxu0 0.0
        %1045 = vmatpush1.msra.mxu0 0.0
        %1046 = vmatprep.subr.mxu0 0.0
        %1047 = vmatpush1.msra.mxu0 0.0
        %1048 = vmatprep.subr.mxu0 0.0
        %1049 = vmatpush1.msra.mxu0 0.0
        %1050 = vmatprep.subr.mxu0 0.0
        %1051 = vmatpush1.msra.mxu0 0.0
        %1052 = vmatprep.subr.mxu0 0.0
        %1053 = vmatpush1.msra.mxu0 0.0
        %1054 = vmatprep.subr.mxu0 0.0
        %1055 = vmatpush1.msra.mxu0 0.0
        %1056 = vmatprep.subr.mxu0 0.0
        %1057 = vmatpush1.msra.mxu0 0.0
        %1058 = vmatprep.subr.mxu0 0.0
        %1059 = vmatpush1.msra.mxu0 0.0
        %1060 = vmatprep.subr.mxu0 0.0
        %1061 = vmatpush1.msra.mxu0 0.0
        %1062 = vmatprep.subr.mxu0 0.0
        %1063 = vmatpush1.msra.mxu0 0.0
        %1064 = vmatprep.subr.mxu0 0.0
        %1065 = vmatpush1.msra.mxu0 0.0
        %1066 = vmatprep.subr.mxu0 0.0
        %1067 = vmatpush1.msra.mxu0 0.0
        %1068 = vmatprep.subr.mxu0 0.0
        %1069 = vmatpush1.msra.mxu0 0.0
        %1070 = vmatprep.subr.mxu0 0.0
        %1071 = vmatpush1.msra.mxu0 0.0
        %1072 = vmatprep.subr.mxu0 0.0
        %1073 = vmatpush1.msra.mxu0 0.0
        %1074 = vmatprep.subr.mxu0 0.0
        %1075 = vmatpush1.msra.mxu0 0.0
        %1076 = vmatprep.subr.mxu0 0.0
        %1077 = vmatpush1.msra.mxu0 0.0
        %1078 = vmatprep.subr.mxu0 0.0
        %1079 = vmatpush1.msra.mxu0 0.0
        %1080 = vmatprep.subr.mxu0 0.0
        %1081 = vmatpush1.msra.mxu0 0.0
        %1082 = vmatprep.subr.mxu0 0.0
        %1083 = vmatpush1.msra.mxu0 0.0
        %1084 = vmatprep.subr.mxu0 0.0
        %1085 = vmatpush1.msra.mxu0 0.0
        %1086 = vmatprep.subr.mxu0 0.0
        %1087 = vmatpush1.msra.mxu0 0.0
        %1088 = vmatprep.subr.mxu0 0.0
        %1089 = vmatpush1.msra.mxu0 0.0
        %1090 = vmatprep.subr.mxu0 0.0
        %1091 = vmatpush1.msra.mxu0 0.0
        %1092 = vmatprep.subr.mxu0 0.0
        %1093 = vmatpush1.msra.mxu0 0.0
        %1094 = vmatprep.subr.mxu0 0.0
        %1095 = vmatpush1.msra.mxu0 0.0
        %1096 = vmatprep.subr.mxu0 0.0
        %1097 = vmatpush1.msra.mxu0 0.0
        %1098 = vmatprep.subr.mxu0 0.0
        %1099 = vmatpush1.msra.mxu0 0.0
        %1100 = vmatprep.subr.mxu0 0.0
        %1101 = vmatpush1.msra.mxu0 0.0
        %1102 = vmatprep.subr.mxu0 0.0
        %1103 = vmatpush1.msra.mxu0 0.0
        %1104 = vmatprep.subr.mxu0 0.0
        %1105 = vmatpush1.msra.mxu0 0.0
        %1106 = vmatprep.mubr.f32.mxu0 0.0
        %1107 = vmatmul.mubr.f32.gmra.mrb[0].mxu0 %v1037
        %v1108 = vpop.f32.mrb[0].mxu0
        %v1109 = vadd.f32 0.0, %v1108
        %v1110 = vpop.f32.mrb[0].mxu0
        %1111 = vmatprep.mubr.f32.mxu0 0.0
        %1112 = vmatmul.mubr.f32.gmra.mrb[0].mxu0 %v1040
        %v1113 = vpop.f32.mrb[0].mxu0
        %v1114 = vadd.f32 0.0, %v1113
        %v1115 = vpop.f32.mrb[0].mxu0
        %1116 = vdwg.mxu0
        %v1117 = vadd.f32 %v1030, %v1109
        %v1118 = vadd.f32 %v1031, %v1114
        %v1119 = vld [vmem:[%s510 + $0xb] sm:$0xff]
        %v1120 = vld [vmem:[%s510 + $0x13] sm:$0xff]
        %s1121 = scalar_lea.vmem [#allocation3], 56
        %v1122 = vld [vmem:[%s1121] sm:$0xff]
        %v1124 = vsel %vm521, %v1119, 0
        %v1127 = vsel %vm521, %v1120, 0
        %1129 = vmatprep.subr.mxu0 0.0
        %1130 = vmatpush1.msra.mxu0 %v1122
        %1131 = vmatprep.subr.mxu0 0.0
        %1132 = vmatpush1.msra.mxu0 0.0
        %1133 = vmatprep.subr.mxu0 0.0
        %1134 = vmatpush1.msra.mxu0 0.0
        %1135 = vmatprep.subr.mxu0 0.0
        %1136 = vmatpush1.msra.mxu0 0.0
        %1137 = vmatprep.subr.mxu0 0.0
        %1138 = vmatpush1.msra.mxu0 0.0
        %1139 = vmatprep.subr.mxu0 0.0
        %1140 = vmatpush1.msra.mxu0 0.0
        %1141 = vmatprep.subr.mxu0 0.0
        %1142 = vmatpush1.msra.mxu0 0.0
        %1143 = vmatprep.subr.mxu0 0.0
        %1144 = vmatpush1.msra.mxu0 0.0
        %1145 = vmatprep.subr.mxu0 0.0
        %1146 = vmatpush1.msra.mxu0 0.0
        %1147 = vmatprep.subr.mxu0 0.0
        %1148 = vmatpush1.msra.mxu0 0.0
        %1149 = vmatprep.subr.mxu0 0.0
        %1150 = vmatpush1.msra.mxu0 0.0
        %1151 = vmatprep.subr.mxu0 0.0
        %1152 = vmatpush1.msra.mxu0 0.0
        %1153 = vmatprep.subr.mxu0 0.0
        %1154 = vmatpush1.msra.mxu0 0.0
        %1155 = vmatprep.subr.mxu0 0.0
        %1156 = vmatpush1.msra.mxu0 0.0
        %1157 = vmatprep.subr.mxu0 0.0
        %1158 = vmatpush1.msra.mxu0 0.0
        %1159 = vmatprep.subr.mxu0 0.0
        %1160 = vmatpush1.msra.mxu0 0.0
        %1161 = vmatprep.subr.mxu0 0.0
        %1162 = vmatpush1.msra.mxu0 0.0
        %1163 = vmatprep.subr.mxu0 0.0
        %1164 = vmatpush1.msra.mxu0 0.0
        %1165 = vmatprep.subr.mxu0 0.0
        %1166 = vmatpush1.msra.mxu0 0.0
        %1167 = vmatprep.subr.mxu0 0.0
        %1168 = vmatpush1.msra.mxu0 0.0
        %1169 = vmatprep.subr.mxu0 0.0
        %1170 = vmatpush1.msra.mxu0 0.0
        %1171 = vmatprep.subr.mxu0 0.0
        %1172 = vmatpush1.msra.mxu0 0.0
        %1173 = vmatprep.subr.mxu0 0.0
        %1174 = vmatpush1.msra.mxu0 0.0
        %1175 = vmatprep.subr.mxu0 0.0
        %1176 = vmatpush1.msra.mxu0 0.0
        %1177 = vmatprep.subr.mxu0 0.0
        %1178 = vmatpush1.msra.mxu0 0.0
        %1179 = vmatprep.subr.mxu0 0.0
        %1180 = vmatpush1.msra.mxu0 0.0
        %1181 = vmatprep.subr.mxu0 0.0
        %1182 = vmatpush1.msra.mxu0 0.0
        %1183 = vmatprep.subr.mxu0 0.0
        %1184 = vmatpush1.msra.mxu0 0.0
        %1185 = vmatprep.subr.mxu0 0.0
        %1186 = vmatpush1.msra.mxu0 0.0
        %1187 = vmatprep.subr.mxu0 0.0
        %1188 = vmatpush1.msra.mxu0 0.0
        %1189 = vmatprep.subr.mxu0 0.0
        %1190 = vmatpush1.msra.mxu0 0.0
        %1191 = vmatprep.subr.mxu0 0.0
        %1192 = vmatpush1.msra.mxu0 0.0
        %1193 = vmatprep.mubr.f32.mxu0 0.0
        %1194 = vmatmul.mubr.f32.gmra.mrb[0].mxu0 %v1124
        %v1195 = vpop.f32.mrb[0].mxu0
        %v1196 = vadd.f32 0.0, %v1195
        %v1197 = vpop.f32.mrb[0].mxu0
        %1198 = vmatprep.mubr.f32.mxu0 0.0
        %1199 = vmatmul.mubr.f32.gmra.mrb[0].mxu0 %v1127
        %v1200 = vpop.f32.mrb[0].mxu0
        %v1201 = vadd.f32 0.0, %v1200
        %v1202 = vpop.f32.mrb[0].mxu0
        %1203 = vdwg.mxu0
        %v1204 = vadd.f32 %v1117, %v1196
        %v1205 = vadd.f32 %v1118, %v1201
        %v1206 = vld [vmem:[%s510 + $0xc] sm:$0xff]
        %v1207 = vld [vmem:[%s510 + $0x14] sm:$0xff]
        %s1208 = scalar_lea.vmem [#allocation3], 64
        %v1209 = vld [vmem:[%s1208] sm:$0xff]
        %v1211 = vsel %vm521, %v1206, 0
        %v1214 = vsel %vm521, %v1207, 0
        %1216 = vmatprep.subr.mxu0 0.0
        %1217 = vmatpush1.msra.mxu0 %v1209
        %1218 = vmatprep.subr.mxu0 0.0
        %1219 = vmatpush1.msra.mxu0 0.0
        %1220 = vmatprep.subr.mxu0 0.0
        %1221 = vmatpush1.msra.mxu0 0.0
        %1222 = vmatprep.subr.mxu0 0.0
        %1223 = vmatpush1.msra.mxu0 0.0
        %1224 = vmatprep.subr.mxu0 0.0
        %1225 = vmatpush1.msra.mxu0 0.0
        %1226 = vmatprep.subr.mxu0 0.0
        %1227 = vmatpush1.msra.mxu0 0.0
        %1228 = vmatprep.subr.mxu0 0.0
        %1229 = vmatpush1.msra.mxu0 0.0
        %1230 = vmatprep.subr.mxu0 0.0
        %1231 = vmatpush1.msra.mxu0 0.0
        %1232 = vmatprep.subr.mxu0 0.0
        %1233 = vmatpush1.msra.mxu0 0.0
        %1234 = vmatprep.subr.mxu0 0.0
        %1235 = vmatpush1.msra.mxu0 0.0
        %1236 = vmatprep.subr.mxu0 0.0
        %1237 = vmatpush1.msra.mxu0 0.0
        %1238 = vmatprep.subr.mxu0 0.0
        %1239 = vmatpush1.msra.mxu0 0.0
        %1240 = vmatprep.subr.mxu0 0.0
        %1241 = vmatpush1.msra.mxu0 0.0
        %1242 = vmatprep.subr.mxu0 0.0
        %1243 = vmatpush1.msra.mxu0 0.0
        %1244 = vmatprep.subr.mxu0 0.0
        %1245 = vmatpush1.msra.mxu0 0.0
        %1246 = vmatprep.subr.mxu0 0.0
        %1247 = vmatpush1.msra.mxu0 0.0
        %1248 = vmatprep.subr.mxu0 0.0
        %1249 = vmatpush1.msra.mxu0 0.0
        %1250 = vmatprep.subr.mxu0 0.0
        %1251 = vmatpush1.msra.mxu0 0.0
        %1252 = vmatprep.subr.mxu0 0.0
        %1253 = vmatpush1.msra.mxu0 0.0
        %1254 = vmatprep.subr.mxu0 0.0
        %1255 = vmatpush1.msra.mxu0 0.0
        %1256 = vmatprep.subr.mxu0 0.0
        %1257 = vmatpush1.msra.mxu0 0.0
        %1258 = vmatprep.subr.mxu0 0.0
        %1259 = vmatpush1.msra.mxu0 0.0
        %1260 = vmatprep.subr.mxu0 0.0
        %1261 = vmatpush1.msra.mxu0 0.0
        %1262 = vmatprep.subr.mxu0 0.0
        %1263 = vmatpush1.msra.mxu0 0.0
        %1264 = vmatprep.subr.mxu0 0.0
        %1265 = vmatpush1.msra.mxu0 0.0
        %1266 = vmatprep.subr.mxu0 0.0
        %1267 = vmatpush1.msra.mxu0 0.0
        %1268 = vmatprep.subr.mxu0 0.0
        %1269 = vmatpush1.msra.mxu0 0.0
        %1270 = vmatprep.subr.mxu0 0.0
        %1271 = vmatpush1.msra.mxu0 0.0
        %1272 = vmatprep.subr.mxu0 0.0
        %1273 = vmatpush1.msra.mxu0 0.0
        %1274 = vmatprep.subr.mxu0 0.0
        %1275 = vmatpush1.msra.mxu0 0.0
        %1276 = vmatprep.subr.mxu0 0.0
        %1277 = vmatpush1.msra.mxu0 0.0
        %1278 = vmatprep.subr.mxu0 0.0
        %1279 = vmatpush1.msra.mxu0 0.0
        %1280 = vmatprep.mubr.f32.mxu0 0.0
        %1281 = vmatmul.mubr.f32.gmra.mrb[0].mxu0 %v1211
        %v1282 = vpop.f32.mrb[0].mxu0
        %v1283 = vadd.f32 0.0, %v1282
        %v1284 = vpop.f32.mrb[0].mxu0
        %1285 = vmatprep.mubr.f32.mxu0 0.0
        %1286 = vmatmul.mubr.f32.gmra.mrb[0].mxu0 %v1214
        %v1287 = vpop.f32.mrb[0].mxu0
        %v1288 = vadd.f32 0.0, %v1287
        %v1289 = vpop.f32.mrb[0].mxu0
        %1290 = vdwg.mxu0
        %v1291 = vadd.f32 %v1204, %v1283
        %v1292 = vadd.f32 %v1205, %v1288
        %v1293 = vld [vmem:[%s2] sm:$0x1]
        %v1295 = vlaneseq
        %v1296 = vshrl.u32 %v1295, 7
        %v1297 = vsub.s32 0, %v1296
        %v1298 = vrot.slane %v1293, %v1297
        %v1300 = vadd.f32 %v1291, %v1298
        %v1301 = vadd.f32 %v1292, %v1298
        %v1302 = vmax.f32 %v1300, 0.0
        %v1303 = vmax.f32 %v1301, 0.0
        %1304 = vst [vmem:[#allocation2 + $0x8] sm:$0xff] %v1302
        %1305 = vst [vmem:[#allocation2 + $0x10] sm:$0xff] %v1303
        %v1306 = vld [vmem:[#allocation2 + $0x5] sm:$0xff]
        %v1307 = vld [vmem:[#allocation2 + $0xd] sm:$0xff]
        %v1308 = vpack.c.bf16 %v1307, %v1306
        %v1309 = vld [vmem:[#allocation6] sm:$0xf]
        %v1310 = vld [vmem:[#allocation6 + $0x4] sm:$0xf]
        %v1311 = vld [vmem:[#allocation6 + $0x8] sm:$0xf]
        %v1312 = vld [vmem:[#allocation6 + $0xc] sm:$0xf]
        %v1313 = vld [vmem:[#allocation6 + $0x10] sm:$0xf]
        %v1314 = vld [vmem:[#allocation6 + $0x14] sm:$0xf]
        %v1315 = vld [vmem:[#allocation6 + $0x18] sm:$0xf]
        %v1316 = vld [vmem:[#allocation6 + $0x1c] sm:$0xf]
        %v1317 = vld [vmem:[#allocation6 + $0x20] sm:$0xf]
        %v1318 = vld [vmem:[#allocation6 + $0x24] sm:$0xf]
        %v1319 = vld [vmem:[#allocation6 + $0x28] sm:$0xf]
        %v1320 = vld [vmem:[#allocation6 + $0x2c] sm:$0xf]
        %v1321 = vld [vmem:[#allocation6 + $0x30] sm:$0xf]
        %v1322 = vld [vmem:[#allocation6 + $0x34] sm:$0xf]
        %v1323 = vld [vmem:[#allocation6 + $0x38] sm:$0xf]
        %v1324 = vld [vmem:[#allocation6 + $0x3c] sm:$0xf]
        %v1325 = vld [vmem:[#allocation2 + $0x6] sm:$0xff]
        %v1326 = vld [vmem:[#allocation2 + $0xe] sm:$0xff]
        %v1327 = vpack.c.bf16 %v1326, %v1325
        %s1328 = scalar_lea.vmem [#allocation6], 64
        %v1329 = vld [vmem:[%s1328] sm:$0xf]
        %v1330 = vld [vmem:[%s1328 + $0x4] sm:$0xf]
        %v1331 = vld [vmem:[%s1328 + $0x8] sm:$0xf]
        %v1332 = vld [vmem:[%s1328 + $0xc] sm:$0xf]
        %v1333 = vld [vmem:[%s1328 + $0x10] sm:$0xf]
        %v1334 = vld [vmem:[%s1328 + $0x14] sm:$0xf]
        %v1335 = vld [vmem:[%s1328 + $0x18] sm:$0xf]
        %v1336 = vld [vmem:[%s1328 + $0x1c] sm:$0xf]
        %v1337 = vld [vmem:[%s1328 + $0x20] sm:$0xf]
        %v1338 = vld [vmem:[%s1328 + $0x24] sm:$0xf]
        %v1339 = vld [vmem:[%s1328 + $0x28] sm:$0xf]
        %v1340 = vld [vmem:[%s1328 + $0x2c] sm:$0xf]
        %v1341 = vld [vmem:[%s1328 + $0x30] sm:$0xf]
        %v1342 = vld [vmem:[%s1328 + $0x34] sm:$0xf]
        %v1343 = vld [vmem:[%s1328 + $0x38] sm:$0xf]
        %v1344 = vld [vmem:[%s1328 + $0x3c] sm:$0xf]
        %v1361 = vunpack.c.l.b16 %v1329
        %v1362 = vunpack.c.l.b16 %v1330
        %v1363 = vunpack.c.l.b16 %v1331
        %v1364 = vunpack.c.l.b16 %v1332
        %v1365 = vunpack.c.l.b16 %v1333
        %v1366 = vunpack.c.l.b16 %v1334
        %v1367 = vunpack.c.l.b16 %v1335
        %v1368 = vunpack.c.l.b16 %v1336
        %v1369 = vunpack.c.l.b16 %v1337
        %v1370 = vunpack.c.l.b16 %v1338
        %v1371 = vunpack.c.l.b16 %v1339
        %v1372 = vunpack.c.l.b16 %v1340
        %v1373 = vunpack.c.l.b16 %v1341
        %v1374 = vunpack.c.l.b16 %v1342
        %v1375 = vunpack.c.l.b16 %v1343
        %v1376 = vunpack.c.l.b16 %v1344
        %v1377 = vpack.c.b16 %v1362, %v1361
        %v1378 = vpack.c.b16 %v1364, %v1363
        %v1379 = vpack.c.b16 %v1366, %v1365
        %v1380 = vpack.c.b16 %v1368, %v1367
        %v1381 = vpack.c.b16 %v1370, %v1369
        %v1382 = vpack.c.b16 %v1372, %v1371
        %v1383 = vpack.c.b16 %v1374, %v1373
        %v1384 = vpack.c.b16 %v1376, %v1375
        %1393 = vmatprep.subr.bf16.mxu0 0
        %1394 = vmatpush1.bf16.msra.mxu0 %v1377
        %1395 = vmatprep.subr.bf16.mxu0 0
        %1396 = vmatpush1.bf16.msra.mxu0 %v1378
        %1397 = vmatprep.subr.bf16.mxu0 0
        %1398 = vmatpush1.bf16.msra.mxu0 %v1379
        %1399 = vmatprep.subr.bf16.mxu0 0
        %1400 = vmatpush1.bf16.msra.mxu0 %v1380
        %1401 = vmatprep.subr.bf16.mxu0 0
        %1402 = vmatpush1.bf16.msra.mxu0 %v1381
        %1403 = vmatprep.subr.bf16.mxu0 0
        %1404 = vmatpush1.bf16.msra.mxu0 %v1382
        %1405 = vmatprep.subr.bf16.mxu0 0
        %1406 = vmatpush1.bf16.msra.mxu0 %v1383
        %1407 = vmatprep.subr.bf16.mxu0 0
        %1408 = vmatpush1.bf16.msra.mxu0 %v1384
        %1409 = vmatprep.subr.bf16.mxu0 0
        %1410 = vmatpush1.bf16.msra.mxu0 0
        %1411 = vmatprep.subr.bf16.mxu0 0
        %1412 = vmatpush1.bf16.msra.mxu0 0
        %1413 = vmatprep.subr.bf16.mxu0 0
        %1414 = vmatpush1.bf16.msra.mxu0 0
        %1415 = vmatprep.subr.bf16.mxu0 0
        %1416 = vmatpush1.bf16.msra.mxu0 0
        %1417 = vmatprep.subr.bf16.mxu0 0
        %1418 = vmatpush1.bf16.msra.mxu0 0
        %1419 = vmatprep.subr.bf16.mxu0 0
        %1420 = vmatpush1.bf16.msra.mxu0 0
        %1421 = vmatprep.subr.bf16.mxu0 0
        %1422 = vmatpush1.bf16.msra.mxu0 0
        %1423 = vmatprep.subr.bf16.mxu0 0
        %1424 = vmatpush1.bf16.msra.mxu0 0
        %1425 = vmatprep.mubr.bf16.mxu0 0
        %1426 = vmatmul.mubr.bf16.gmra.mrb[0].mxu0 %v1327
        %v1427 = vpop.f32.mrb[0].mxu0
        %v1428 = vadd.f32 0.0, %v1427
        %v1429 = vpop.f32.mrb[0].mxu0
        %v1430 = vpop.f32.mrb[0].mxu0
        %v1431 = vadd.f32 0.0, %v1430
        %v1432 = vpop.f32.mrb[0].mxu0
        %1433 = vdwg.mxu0
        %v1450 = vunpack.c.l.b16 %v1309
        %v1451 = vunpack.c.l.b16 %v1310
        %v1452 = vunpack.c.l.b16 %v1311
        %v1453 = vunpack.c.l.b16 %v1312
        %v1454 = vunpack.c.l.b16 %v1313
        %v1455 = vunpack.c.l.b16 %v1314
        %v1456 = vunpack.c.l.b16 %v1315
        %v1457 = vunpack.c.l.b16 %v1316
        %v1458 = vunpack.c.l.b16 %v1317
        %v1459 = vunpack.c.l.b16 %v1318
        %v1460 = vunpack.c.l.b16 %v1319
        %v1461 = vunpack.c.l.b16 %v1320
        %v1462 = vunpack.c.l.b16 %v1321
        %v1463 = vunpack.c.l.b16 %v1322
        %v1464 = vunpack.c.l.b16 %v1323
        %v1465 = vunpack.c.l.b16 %v1324
        %v1466 = vpack.c.b16 %v1451, %v1450
        %v1467 = vpack.c.b16 %v1453, %v1452
        %v1468 = vpack.c.b16 %v1455, %v1454
        %v1469 = vpack.c.b16 %v1457, %v1456
        %v1470 = vpack.c.b16 %v1459, %v1458
        %v1471 = vpack.c.b16 %v1461, %v1460
        %v1472 = vpack.c.b16 %v1463, %v1462
        %v1473 = vpack.c.b16 %v1465, %v1464
        %1482 = vmatprep.subr.bf16.mxu0 0
        %1483 = vmatpush1.bf16.msra.mxu0 %v1466
        %1484 = vmatprep.subr.bf16.mxu0 0
        %1485 = vmatpush1.bf16.msra.mxu0 %v1467
        %1486 = vmatprep.subr.bf16.mxu0 0
        %1487 = vmatpush1.bf16.msra.mxu0 %v1468
        %1488 = vmatprep.subr.bf16.mxu0 0
        %1489 = vmatpush1.bf16.msra.mxu0 %v1469
        %1490 = vmatprep.subr.bf16.mxu0 0
        %1491 = vmatpush1.bf16.msra.mxu0 %v1470
        %1492 = vmatprep.subr.bf16.mxu0 0
        %1493 = vmatpush1.bf16.msra.mxu0 %v1471
        %1494 = vmatprep.subr.bf16.mxu0 0
        %1495 = vmatpush1.bf16.msra.mxu0 %v1472
        %1496 = vmatprep.subr.bf16.mxu0 0
        %1497 = vmatpush1.bf16.msra.mxu0 %v1473
        %1498 = vmatprep.subr.bf16.mxu0 0
        %1499 = vmatpush1.bf16.msra.mxu0 0
        %1500 = vmatprep.subr.bf16.mxu0 0
        %1501 = vmatpush1.bf16.msra.mxu0 0
        %1502 = vmatprep.subr.bf16.mxu0 0
        %1503 = vmatpush1.bf16.msra.mxu0 0
        %1504 = vmatprep.subr.bf16.mxu0 0
        %1505 = vmatpush1.bf16.msra.mxu0 0
        %1506 = vmatprep.subr.bf16.mxu0 0
        %1507 = vmatpush1.bf16.msra.mxu0 0
        %1508 = vmatprep.subr.bf16.mxu0 0
        %1509 = vmatpush1.bf16.msra.mxu0 0
        %1510 = vmatprep.subr.bf16.mxu0 0
        %1511 = vmatpush1.bf16.msra.mxu0 0
        %1512 = vmatprep.subr.bf16.mxu0 0
        %1513 = vmatpush1.bf16.msra.mxu0 0
        %1514 = vmatprep.mubr.bf16.mxu0 0
        %1515 = vmatmul.mubr.bf16.gmra.mrb[0].mxu0 %v1308
        %v1516 = vpop.f32.mrb[0].mxu0
        %v1517 = vadd.f32 %v1428, %v1516
        %v1518 = vpop.f32.mrb[0].mxu0
        %v1519 = vpop.f32.mrb[0].mxu0
        %v1520 = vadd.f32 %v1431, %v1519
        %v1521 = vpop.f32.mrb[0].mxu0
        %1522 = vdwg.mxu0
        %v1523 = vld [vmem:[#allocation2 + $0x7] sm:$0xff]
        %v1524 = vld [vmem:[#allocation2 + $0xf] sm:$0xff]
        %v1525 = vpack.c.bf16 %v1524, %v1523
        %s1526 = scalar_lea.vmem [#allocation6], 128
        %v1527 = vld [vmem:[%s1526] sm:$0xf]
        %v1528 = vld [vmem:[%s1526 + $0x4] sm:$0xf]
        %v1529 = vld [vmem:[%s1526 + $0x8] sm:$0xf]
        %v1530 = vld [vmem:[%s1526 + $0xc] sm:$0xf]
        %v1531 = vld [vmem:[%s1526 + $0x10] sm:$0xf]
        %v1532 = vld [vmem:[%s1526 + $0x14] sm:$0xf]
        %v1533 = vld [vmem:[%s1526 + $0x18] sm:$0xf]
        %v1534 = vld [vmem:[%s1526 + $0x1c] sm:$0xf]
        %v1535 = vld [vmem:[%s1526 + $0x20] sm:$0xf]
        %v1536 = vld [vmem:[%s1526 + $0x24] sm:$0xf]
        %v1537 = vld [vmem:[%s1526 + $0x28] sm:$0xf]
        %v1538 = vld [vmem:[%s1526 + $0x2c] sm:$0xf]
        %v1539 = vld [vmem:[%s1526 + $0x30] sm:$0xf]
        %v1540 = vld [vmem:[%s1526 + $0x34] sm:$0xf]
        %v1541 = vld [vmem:[%s1526 + $0x38] sm:$0xf]
        %v1542 = vld [vmem:[%s1526 + $0x3c] sm:$0xf]
        %v1559 = vunpack.c.l.b16 %v1527
        %v1560 = vunpack.c.l.b16 %v1528
        %v1561 = vunpack.c.l.b16 %v1529
        %v1562 = vunpack.c.l.b16 %v1530
        %v1563 = vunpack.c.l.b16 %v1531
        %v1564 = vunpack.c.l.b16 %v1532
        %v1565 = vunpack.c.l.b16 %v1533
        %v1566 = vunpack.c.l.b16 %v1534
        %v1567 = vunpack.c.l.b16 %v1535
        %v1568 = vunpack.c.l.b16 %v1536
        %v1569 = vunpack.c.l.b16 %v1537
        %v1570 = vunpack.c.l.b16 %v1538
        %v1571 = vunpack.c.l.b16 %v1539
        %v1572 = vunpack.c.l.b16 %v1540
        %v1573 = vunpack.c.l.b16 %v1541
        %v1574 = vunpack.c.l.b16 %v1542
        %v1575 = vpack.c.b16 %v1560, %v1559
        %v1576 = vpack.c.b16 %v1562, %v1561
        %v1577 = vpack.c.b16 %v1564, %v1563
        %v1578 = vpack.c.b16 %v1566, %v1565
        %v1579 = vpack.c.b16 %v1568, %v1567
        %v1580 = vpack.c.b16 %v1570, %v1569
        %v1581 = vpack.c.b16 %v1572, %v1571
        %v1582 = vpack.c.b16 %v1574, %v1573
        %1591 = vmatprep.subr.bf16.mxu0 0
        %1592 = vmatpush1.bf16.msra.mxu0 %v1575
        %1593 = vmatprep.subr.bf16.mxu0 0
        %1594 = vmatpush1.bf16.msra.mxu0 %v1576
        %1595 = vmatprep.subr.bf16.mxu0 0
        %1596 = vmatpush1.bf16.msra.mxu0 %v1577
        %1597 = vmatprep.subr.bf16.mxu0 0
        %1598 = vmatpush1.bf16.msra.mxu0 %v1578
        %1599 = vmatprep.subr.bf16.mxu0 0
        %1600 = vmatpush1.bf16.msra.mxu0 %v1579
        %1601 = vmatprep.subr.bf16.mxu0 0
        %1602 = vmatpush1.bf16.msra.mxu0 %v1580
        %1603 = vmatprep.subr.bf16.mxu0 0
        %1604 = vmatpush1.bf16.msra.mxu0 %v1581
        %1605 = vmatprep.subr.bf16.mxu0 0
        %1606 = vmatpush1.bf16.msra.mxu0 %v1582
        %1607 = vmatprep.subr.bf16.mxu0 0
        %1608 = vmatpush1.bf16.msra.mxu0 0
        %1609 = vmatprep.subr.bf16.mxu0 0
        %1610 = vmatpush1.bf16.msra.mxu0 0
        %1611 = vmatprep.subr.bf16.mxu0 0
        %1612 = vmatpush1.bf16.msra.mxu0 0
        %1613 = vmatprep.subr.bf16.mxu0 0
        %1614 = vmatpush1.bf16.msra.mxu0 0
        %1615 = vmatprep.subr.bf16.mxu0 0
        %1616 = vmatpush1.bf16.msra.mxu0 0
        %1617 = vmatprep.subr.bf16.mxu0 0
        %1618 = vmatpush1.bf16.msra.mxu0 0
        %1619 = vmatprep.subr.bf16.mxu0 0
        %1620 = vmatpush1.bf16.msra.mxu0 0
        %1621 = vmatprep.subr.bf16.mxu0 0
        %1622 = vmatpush1.bf16.msra.mxu0 0
        %1623 = vmatprep.mubr.bf16.mxu0 0
        %1624 = vmatmul.mubr.bf16.gmra.mrb[0].mxu0 %v1525
        %v1625 = vpop.f32.mrb[0].mxu0
        %v1626 = vadd.f32 0.0, %v1625
        %v1627 = vpop.f32.mrb[0].mxu0
        %v1628 = vpop.f32.mrb[0].mxu0
        %v1629 = vadd.f32 0.0, %v1628
        %v1630 = vpop.f32.mrb[0].mxu0
        %1631 = vdwg.mxu0
        %v1632 = vadd.f32 %v1517, %v1626
        %v1633 = vadd.f32 %v1520, %v1629
        %v1634 = vld [vmem:[#allocation2 + $0x8] sm:$0xff]
        %v1635 = vld [vmem:[#allocation2 + $0x10] sm:$0xff]
        %v1636 = vpack.c.bf16 %v1635, %v1634
        %s1637 = scalar_lea.vmem [#allocation6], 192
        %v1638 = vld [vmem:[%s1637] sm:$0xf]
        %v1639 = vld [vmem:[%s1637 + $0x4] sm:$0xf]
        %v1640 = vld [vmem:[%s1637 + $0x8] sm:$0xf]
        %v1641 = vld [vmem:[%s1637 + $0xc] sm:$0xf]
        %v1642 = vld [vmem:[%s1637 + $0x10] sm:$0xf]
        %v1643 = vld [vmem:[%s1637 + $0x14] sm:$0xf]
        %v1644 = vld [vmem:[%s1637 + $0x18] sm:$0xf]
        %v1645 = vld [vmem:[%s1637 + $0x1c] sm:$0xf]
        %v1646 = vld [vmem:[%s1637 + $0x20] sm:$0xf]
        %v1647 = vld [vmem:[%s1637 + $0x24] sm:$0xf]
        %v1648 = vld [vmem:[%s1637 + $0x28] sm:$0xf]
        %v1649 = vld [vmem:[%s1637 + $0x2c] sm:$0xf]
        %v1650 = vld [vmem:[%s1637 + $0x30] sm:$0xf]
        %v1651 = vld [vmem:[%s1637 + $0x34] sm:$0xf]
        %v1652 = vld [vmem:[%s1637 + $0x38] sm:$0xf]
        %v1653 = vld [vmem:[%s1637 + $0x3c] sm:$0xf]
        %v1670 = vunpack.c.l.b16 %v1638
        %v1671 = vunpack.c.l.b16 %v1639
        %v1672 = vunpack.c.l.b16 %v1640
        %v1673 = vunpack.c.l.b16 %v1641
        %v1674 = vunpack.c.l.b16 %v1642
        %v1675 = vunpack.c.l.b16 %v1643
        %v1676 = vunpack.c.l.b16 %v1644
        %v1677 = vunpack.c.l.b16 %v1645
        %v1678 = vunpack.c.l.b16 %v1646
        %v1679 = vunpack.c.l.b16 %v1647
        %v1680 = vunpack.c.l.b16 %v1648
        %v1681 = vunpack.c.l.b16 %v1649
        %v1682 = vunpack.c.l.b16 %v1650
        %v1683 = vunpack.c.l.b16 %v1651
        %v1684 = vunpack.c.l.b16 %v1652
        %v1685 = vunpack.c.l.b16 %v1653
        %v1686 = vpack.c.b16 %v1671, %v1670
        %v1687 = vpack.c.b16 %v1673, %v1672
        %v1688 = vpack.c.b16 %v1675, %v1674
        %v1689 = vpack.c.b16 %v1677, %v1676
        %v1690 = vpack.c.b16 %v1679, %v1678
        %v1691 = vpack.c.b16 %v1681, %v1680
        %v1692 = vpack.c.b16 %v1683, %v1682
        %v1693 = vpack.c.b16 %v1685, %v1684
        %1702 = vmatprep.subr.bf16.mxu0 0
        %1703 = vmatpush1.bf16.msra.mxu0 %v1686
        %1704 = vmatprep.subr.bf16.mxu0 0
        %1705 = vmatpush1.bf16.msra.mxu0 %v1687
        %1706 = vmatprep.subr.bf16.mxu0 0
        %1707 = vmatpush1.bf16.msra.mxu0 %v1688
        %1708 = vmatprep.subr.bf16.mxu0 0
        %1709 = vmatpush1.bf16.msra.mxu0 %v1689
        %1710 = vmatprep.subr.bf16.mxu0 0
        %1711 = vmatpush1.bf16.msra.mxu0 %v1690
        %1712 = vmatprep.subr.bf16.mxu0 0
        %1713 = vmatpush1.bf16.msra.mxu0 %v1691
        %1714 = vmatprep.subr.bf16.mxu0 0
        %1715 = vmatpush1.bf16.msra.mxu0 %v1692
        %1716 = vmatprep.subr.bf16.mxu0 0
        %1717 = vmatpush1.bf16.msra.mxu0 %v1693
        %1718 = vmatprep.subr.bf16.mxu0 0
        %1719 = vmatpush1.bf16.msra.mxu0 0
        %1720 = vmatprep.subr.bf16.mxu0 0
        %1721 = vmatpush1.bf16.msra.mxu0 0
        %1722 = vmatprep.subr.bf16.mxu0 0
        %1723 = vmatpush1.bf16.msra.mxu0 0
        %1724 = vmatprep.subr.bf16.mxu0 0
        %1725 = vmatpush1.bf16.msra.mxu0 0
        %1726 = vmatprep.subr.bf16.mxu0 0
        %1727 = vmatpush1.bf16.msra.mxu0 0
        %1728 = vmatprep.subr.bf16.mxu0 0
        %1729 = vmatpush1.bf16.msra.mxu0 0
        %1730 = vmatprep.subr.bf16.mxu0 0
        %1731 = vmatpush1.bf16.msra.mxu0 0
        %1732 = vmatprep.subr.bf16.mxu0 0
        %1733 = vmatpush1.bf16.msra.mxu0 0
        %1734 = vmatprep.mubr.bf16.mxu0 0
        %1735 = vmatmul.mubr.bf16.gmra.mrb[0].mxu0 %v1636
        %v1736 = vpop.f32.mrb[0].mxu0
        %v1737 = vadd.f32 0.0, %v1736
        %v1738 = vpop.f32.mrb[0].mxu0
        %v1739 = vpop.f32.mrb[0].mxu0
        %v1740 = vadd.f32 0.0, %v1739
        %v1741 = vpop.f32.mrb[0].mxu0
        %1742 = vdwg.mxu0
        %v1743 = vadd.f32 %v1632, %v1737
        %v1744 = vadd.f32 %v1633, %v1740
        %v1745 = vld [vmem:[#allocation2 + $0x9] sm:$0xff]
        %v1746 = vld [vmem:[#allocation2 + $0x11] sm:$0xff]
        %v1747 = vpack.c.bf16 %v1746, %v1745
        %s1748 = scalar_lea.vmem [#allocation6], 256
        %v1749 = vld [vmem:[%s1748] sm:$0xf]
        %v1750 = vld [vmem:[%s1748 + $0x4] sm:$0xf]
        %v1751 = vld [vmem:[%s1748 + $0x8] sm:$0xf]
        %v1752 = vld [vmem:[%s1748 + $0xc] sm:$0xf]
        %v1753 = vld [vmem:[%s1748 + $0x10] sm:$0xf]
        %v1754 = vld [vmem:[%s1748 + $0x14] sm:$0xf]
        %v1755 = vld [vmem:[%s1748 + $0x18] sm:$0xf]
        %v1756 = vld [vmem:[%s1748 + $0x1c] sm:$0xf]
        %v1757 = vld [vmem:[%s1748 + $0x20] sm:$0xf]
        %v1758 = vld [vmem:[%s1748 + $0x24] sm:$0xf]
        %v1759 = vld [vmem:[%s1748 + $0x28] sm:$0xf]
        %v1760 = vld [vmem:[%s1748 + $0x2c] sm:$0xf]
        %v1761 = vld [vmem:[%s1748 + $0x30] sm:$0xf]
        %v1762 = vld [vmem:[%s1748 + $0x34] sm:$0xf]
        %v1763 = vld [vmem:[%s1748 + $0x38] sm:$0xf]
        %v1764 = vld [vmem:[%s1748 + $0x3c] sm:$0xf]
        %v1781 = vunpack.c.l.b16 %v1749
        %v1782 = vunpack.c.l.b16 %v1750
        %v1783 = vunpack.c.l.b16 %v1751
        %v1784 = vunpack.c.l.b16 %v1752
        %v1785 = vunpack.c.l.b16 %v1753
        %v1786 = vunpack.c.l.b16 %v1754
        %v1787 = vunpack.c.l.b16 %v1755
        %v1788 = vunpack.c.l.b16 %v1756
        %v1789 = vunpack.c.l.b16 %v1757
        %v1790 = vunpack.c.l.b16 %v1758
        %v1791 = vunpack.c.l.b16 %v1759
        %v1792 = vunpack.c.l.b16 %v1760
        %v1793 = vunpack.c.l.b16 %v1761
        %v1794 = vunpack.c.l.b16 %v1762
        %v1795 = vunpack.c.l.b16 %v1763
        %v1796 = vunpack.c.l.b16 %v1764
        %v1797 = vpack.c.b16 %v1782, %v1781
        %v1798 = vpack.c.b16 %v1784, %v1783
        %v1799 = vpack.c.b16 %v1786, %v1785
        %v1800 = vpack.c.b16 %v1788, %v1787
        %v1801 = vpack.c.b16 %v1790, %v1789
        %v1802 = vpack.c.b16 %v1792, %v1791
        %v1803 = vpack.c.b16 %v1794, %v1793
        %v1804 = vpack.c.b16 %v1796, %v1795
        %1813 = vmatprep.subr.bf16.mxu0 0
        %1814 = vmatpush1.bf16.msra.mxu0 %v1797
        %1815 = vmatprep.subr.bf16.mxu0 0
        %1816 = vmatpush1.bf16.msra.mxu0 %v1798
        %1817 = vmatprep.subr.bf16.mxu0 0
        %1818 = vmatpush1.bf16.msra.mxu0 %v1799
        %1819 = vmatprep.subr.bf16.mxu0 0
        %1820 = vmatpush1.bf16.msra.mxu0 %v1800
        %1821 = vmatprep.subr.bf16.mxu0 0
        %1822 = vmatpush1.bf16.msra.mxu0 %v1801
        %1823 = vmatprep.subr.bf16.mxu0 0
        %1824 = vmatpush1.bf16.msra.mxu0 %v1802
        %1825 = vmatprep.subr.bf16.mxu0 0
        %1826 = vmatpush1.bf16.msra.mxu0 %v1803
        %1827 = vmatprep.subr.bf16.mxu0 0
        %1828 = vmatpush1.bf16.msra.mxu0 %v1804
        %1829 = vmatprep.subr.bf16.mxu0 0
        %1830 = vmatpush1.bf16.msra.mxu0 0
        %1831 = vmatprep.subr.bf16.mxu0 0
        %1832 = vmatpush1.bf16.msra.mxu0 0
        %1833 = vmatprep.subr.bf16.mxu0 0
        %1834 = vmatpush1.bf16.msra.mxu0 0
        %1835 = vmatprep.subr.bf16.mxu0 0
        %1836 = vmatpush1.bf16.msra.mxu0 0
        %1837 = vmatprep.subr.bf16.mxu0 0
        %1838 = vmatpush1.bf16.msra.mxu0 0
        %1839 = vmatprep.subr.bf16.mxu0 0
        %1840 = vmatpush1.bf16.msra.mxu0 0
        %1841 = vmatprep.subr.bf16.mxu0 0
        %1842 = vmatpush1.bf16.msra.mxu0 0
        %1843 = vmatprep.subr.bf16.mxu0 0
        %1844 = vmatpush1.bf16.msra.mxu0 0
        %1845 = vmatprep.mubr.bf16.mxu0 0
        %1846 = vmatmul.mubr.bf16.gmra.mrb[0].mxu0 %v1747
        %v1847 = vpop.f32.mrb[0].mxu0
        %v1848 = vadd.f32 0.0, %v1847
        %v1849 = vpop.f32.mrb[0].mxu0
        %v1850 = vpop.f32.mrb[0].mxu0
        %v1851 = vadd.f32 0.0, %v1850
        %v1852 = vpop.f32.mrb[0].mxu0
        %1853 = vdwg.mxu0
        %v1854 = vadd.f32 %v1743, %v1848
        %v1855 = vadd.f32 %v1744, %v1851
        %v1856 = vld [vmem:[#allocation2 + $0xa] sm:$0xff]
        %v1857 = vld [vmem:[#allocation2 + $0x12] sm:$0xff]
        %v1858 = vpack.c.bf16 %v1857, %v1856
        %s1859 = scalar_lea.vmem [#allocation6], 320
        %v1860 = vld [vmem:[%s1859] sm:$0xf]
        %v1861 = vld [vmem:[%s1859 + $0x4] sm:$0xf]
        %v1862 = vld [vmem:[%s1859 + $0x8] sm:$0xf]
        %v1863 = vld [vmem:[%s1859 + $0xc] sm:$0xf]
        %v1864 = vld [vmem:[%s1859 + $0x10] sm:$0xf]
        %v1865 = vld [vmem:[%s1859 + $0x14] sm:$0xf]
        %v1866 = vld [vmem:[%s1859 + $0x18] sm:$0xf]
        %v1867 = vld [vmem:[%s1859 + $0x1c] sm:$0xf]
        %v1868 = vld [vmem:[%s1859 + $0x20] sm:$0xf]
        %v1869 = vld [vmem:[%s1859 + $0x24] sm:$0xf]
        %v1870 = vld [vmem:[%s1859 + $0x28] sm:$0xf]
        %v1871 = vld [vmem:[%s1859 + $0x2c] sm:$0xf]
        %v1872 = vld [vmem:[%s1859 + $0x30] sm:$0xf]
        %v1873 = vld [vmem:[%s1859 + $0x34] sm:$0xf]
        %v1874 = vld [vmem:[%s1859 + $0x38] sm:$0xf]
        %v1875 = vld [vmem:[%s1859 + $0x3c] sm:$0xf]
        %v1892 = vunpack.c.l.b16 %v1860
        %v1893 = vunpack.c.l.b16 %v1861
        %v1894 = vunpack.c.l.b16 %v1862
        %v1895 = vunpack.c.l.b16 %v1863
        %v1896 = vunpack.c.l.b16 %v1864
        %v1897 = vunpack.c.l.b16 %v1865
        %v1898 = vunpack.c.l.b16 %v1866
        %v1899 = vunpack.c.l.b16 %v1867
        %v1900 = vunpack.c.l.b16 %v1868
        %v1901 = vunpack.c.l.b16 %v1869
        %v1902 = vunpack.c.l.b16 %v1870
        %v1903 = vunpack.c.l.b16 %v1871
        %v1904 = vunpack.c.l.b16 %v1872
        %v1905 = vunpack.c.l.b16 %v1873
        %v1906 = vunpack.c.l.b16 %v1874
        %v1907 = vunpack.c.l.b16 %v1875
        %v1908 = vpack.c.b16 %v1893, %v1892
        %v1909 = vpack.c.b16 %v1895, %v1894
        %v1910 = vpack.c.b16 %v1897, %v1896
        %v1911 = vpack.c.b16 %v1899, %v1898
        %v1912 = vpack.c.b16 %v1901, %v1900
        %v1913 = vpack.c.b16 %v1903, %v1902
        %v1914 = vpack.c.b16 %v1905, %v1904
        %v1915 = vpack.c.b16 %v1907, %v1906
        %1924 = vmatprep.subr.bf16.mxu0 0
        %1925 = vmatpush1.bf16.msra.mxu0 %v1908
        %1926 = vmatprep.subr.bf16.mxu0 0
        %1927 = vmatpush1.bf16.msra.mxu0 %v1909
        %1928 = vmatprep.subr.bf16.mxu0 0
        %1929 = vmatpush1.bf16.msra.mxu0 %v1910
        %1930 = vmatprep.subr.bf16.mxu0 0
        %1931 = vmatpush1.bf16.msra.mxu0 %v1911
        %1932 = vmatprep.subr.bf16.mxu0 0
        %1933 = vmatpush1.bf16.msra.mxu0 %v1912
        %1934 = vmatprep.subr.bf16.mxu0 0
        %1935 = vmatpush1.bf16.msra.mxu0 %v1913
        %1936 = vmatprep.subr.bf16.mxu0 0
        %1937 = vmatpush1.bf16.msra.mxu0 %v1914
        %1938 = vmatprep.subr.bf16.mxu0 0
        %1939 = vmatpush1.bf16.msra.mxu0 %v1915
        %1940 = vmatprep.subr.bf16.mxu0 0
        %1941 = vmatpush1.bf16.msra.mxu0 0
        %1942 = vmatprep.subr.bf16.mxu0 0
        %1943 = vmatpush1.bf16.msra.mxu0 0
        %1944 = vmatprep.subr.bf16.mxu0 0
        %1945 = vmatpush1.bf16.msra.mxu0 0
        %1946 = vmatprep.subr.bf16.mxu0 0
        %1947 = vmatpush1.bf16.msra.mxu0 0
        %1948 = vmatprep.subr.bf16.mxu0 0
        %1949 = vmatpush1.bf16.msra.mxu0 0
        %1950 = vmatprep.subr.bf16.mxu0 0
        %1951 = vmatpush1.bf16.msra.mxu0 0
        %1952 = vmatprep.subr.bf16.mxu0 0
        %1953 = vmatpush1.bf16.msra.mxu0 0
        %1954 = vmatprep.subr.bf16.mxu0 0
        %1955 = vmatpush1.bf16.msra.mxu0 0
        %1956 = vmatprep.mubr.bf16.mxu0 0
        %1957 = vmatmul.mubr.bf16.gmra.mrb[0].mxu0 %v1858
        %v1958 = vpop.f32.mrb[0].mxu0
        %v1959 = vadd.f32 0.0, %v1958
        %v1960 = vpop.f32.mrb[0].mxu0
        %v1961 = vpop.f32.mrb[0].mxu0
        %v1962 = vadd.f32 0.0, %v1961
        %v1963 = vpop.f32.mrb[0].mxu0
        %1964 = vdwg.mxu0
        %v1965 = vadd.f32 %v1854, %v1959
        %v1966 = vadd.f32 %v1855, %v1962
        %v1967 = vld [vmem:[#allocation2 + $0xb] sm:$0xff]
        %v1968 = vld [vmem:[#allocation2 + $0x13] sm:$0xff]
        %v1969 = vpack.c.bf16 %v1968, %v1967
        %s1970 = scalar_lea.vmem [#allocation6], 384
        %v1971 = vld [vmem:[%s1970] sm:$0xf]
        %v1972 = vld [vmem:[%s1970 + $0x4] sm:$0xf]
        %v1973 = vld [vmem:[%s1970 + $0x8] sm:$0xf]
        %v1974 = vld [vmem:[%s1970 + $0xc] sm:$0xf]
        %v1975 = vld [vmem:[%s1970 + $0x10] sm:$0xf]
        %v1976 = vld [vmem:[%s1970 + $0x14] sm:$0xf]
        %v1977 = vld [vmem:[%s1970 + $0x18] sm:$0xf]
        %v1978 = vld [vmem:[%s1970 + $0x1c] sm:$0xf]
        %v1979 = vld [vmem:[%s1970 + $0x20] sm:$0xf]
        %v1980 = vld [vmem:[%s1970 + $0x24] sm:$0xf]
        %v1981 = vld [vmem:[%s1970 + $0x28] sm:$0xf]
        %v1982 = vld [vmem:[%s1970 + $0x2c] sm:$0xf]
        %v1983 = vld [vmem:[%s1970 + $0x30] sm:$0xf]
        %v1984 = vld [vmem:[%s1970 + $0x34] sm:$0xf]
        %v1985 = vld [vmem:[%s1970 + $0x38] sm:$0xf]
        %v1986 = vld [vmem:[%s1970 + $0x3c] sm:$0xf]
        %v2003 = vunpack.c.l.b16 %v1971
        %v2004 = vunpack.c.l.b16 %v1972
        %v2005 = vunpack.c.l.b16 %v1973
        %v2006 = vunpack.c.l.b16 %v1974
        %v2007 = vunpack.c.l.b16 %v1975
        %v2008 = vunpack.c.l.b16 %v1976
        %v2009 = vunpack.c.l.b16 %v1977
        %v2010 = vunpack.c.l.b16 %v1978
        %v2011 = vunpack.c.l.b16 %v1979
        %v2012 = vunpack.c.l.b16 %v1980
        %v2013 = vunpack.c.l.b16 %v1981
        %v2014 = vunpack.c.l.b16 %v1982
        %v2015 = vunpack.c.l.b16 %v1983
        %v2016 = vunpack.c.l.b16 %v1984
        %v2017 = vunpack.c.l.b16 %v1985
        %v2018 = vunpack.c.l.b16 %v1986
        %v2019 = vpack.c.b16 %v2004, %v2003
        %v2020 = vpack.c.b16 %v2006, %v2005
        %v2021 = vpack.c.b16 %v2008, %v2007
        %v2022 = vpack.c.b16 %v2010, %v2009
        %v2023 = vpack.c.b16 %v2012, %v2011
        %v2024 = vpack.c.b16 %v2014, %v2013
        %v2025 = vpack.c.b16 %v2016, %v2015
        %v2026 = vpack.c.b16 %v2018, %v2017
        %2035 = vmatprep.subr.bf16.mxu0 0
        %2036 = vmatpush1.bf16.msra.mxu0 %v2019
        %2037 = vmatprep.subr.bf16.mxu0 0
        %2038 = vmatpush1.bf16.msra.mxu0 %v2020
        %2039 = vmatprep.subr.bf16.mxu0 0
        %2040 = vmatpush1.bf16.msra.mxu0 %v2021
        %2041 = vmatprep.subr.bf16.mxu0 0
        %2042 = vmatpush1.bf16.msra.mxu0 %v2022
        %2043 = vmatprep.subr.bf16.mxu0 0
        %2044 = vmatpush1.bf16.msra.mxu0 %v2023
        %2045 = vmatprep.subr.bf16.mxu0 0
        %2046 = vmatpush1.bf16.msra.mxu0 %v2024
        %2047 = vmatprep.subr.bf16.mxu0 0
        %2048 = vmatpush1.bf16.msra.mxu0 %v2025
        %2049 = vmatprep.subr.bf16.mxu0 0
        %2050 = vmatpush1.bf16.msra.mxu0 %v2026
        %2051 = vmatprep.subr.bf16.mxu0 0
        %2052 = vmatpush1.bf16.msra.mxu0 0
        %2053 = vmatprep.subr.bf16.mxu0 0
        %2054 = vmatpush1.bf16.msra.mxu0 0
        %2055 = vmatprep.subr.bf16.mxu0 0
        %2056 = vmatpush1.bf16.msra.mxu0 0
        %2057 = vmatprep.subr.bf16.mxu0 0
        %2058 = vmatpush1.bf16.msra.mxu0 0
        %2059 = vmatprep.subr.bf16.mxu0 0
        %2060 = vmatpush1.bf16.msra.mxu0 0
        %2061 = vmatprep.subr.bf16.mxu0 0
        %2062 = vmatpush1.bf16.msra.mxu0 0
        %2063 = vmatprep.subr.bf16.mxu0 0
        %2064 = vmatpush1.bf16.msra.mxu0 0
        %2065 = vmatprep.subr.bf16.mxu0 0
        %2066 = vmatpush1.bf16.msra.mxu0 0
        %2067 = vmatprep.mubr.bf16.mxu0 0
        %2068 = vmatmul.mubr.bf16.gmra.mrb[0].mxu0 %v1969
        %v2069 = vpop.f32.mrb[0].mxu0
        %v2070 = vadd.f32 0.0, %v2069
        %v2071 = vpop.f32.mrb[0].mxu0
        %v2072 = vpop.f32.mrb[0].mxu0
        %v2073 = vadd.f32 0.0, %v2072
        %v2074 = vpop.f32.mrb[0].mxu0
        %2075 = vdwg.mxu0
        %v2076 = vadd.f32 %v1965, %v2070
        %v2077 = vadd.f32 %v1966, %v2073
        %v2078 = vld [vmem:[%s4] sm:$0x1]
        %v2080 = vlaneseq
        %v2081 = vshrl.u32 %v2080, 7
        %v2082 = vsub.s32 0, %v2081
        %v2083 = vrot.slane %v2078, %v2082
        %v2085 = vadd.f32 %v2076, %v2083
        %v2086 = vadd.f32 %v2077, %v2083
        %v2087 = vmax.f32 %v2085, 0.0
        %v2088 = vmax.f32 %v2086, 0.0
        %2089 = vst [vmem:[#allocation2 + $0x8] sm:$0xff] %v2087
        %2090 = vst [vmem:[#allocation2 + $0x10] sm:$0xff] %v2088
        %v2091 = vld [vmem:[#allocation2 + $0x6] sm:$0xff]
        %v2092 = vld [vmem:[#allocation2 + $0xe] sm:$0xff]
        %v2093 = vpack.c.bf16 %v2092, %v2091
        %v2094 = vld [vmem:[#allocation8] sm:$0xf]
        %v2095 = vld [vmem:[#allocation8 + $0x4] sm:$0xf]
        %v2096 = vld [vmem:[#allocation8 + $0x8] sm:$0xf]
        %v2097 = vld [vmem:[#allocation8 + $0xc] sm:$0xf]
        %v2098 = vld [vmem:[#allocation8 + $0x10] sm:$0xf]
        %v2099 = vld [vmem:[#allocation8 + $0x14] sm:$0xf]
        %v2100 = vld [vmem:[#allocation8 + $0x18] sm:$0xf]
        %v2101 = vld [vmem:[#allocation8 + $0x1c] sm:$0xf]
        %v2102 = vld [vmem:[#allocation8 + $0x20] sm:$0xf]
        %v2103 = vld [vmem:[#allocation8 + $0x24] sm:$0xf]
        %v2104 = vld [vmem:[#allocation8 + $0x28] sm:$0xf]
        %v2105 = vld [vmem:[#allocation8 + $0x2c] sm:$0xf]
        %v2106 = vld [vmem:[#allocation8 + $0x30] sm:$0xf]
        %v2107 = vld [vmem:[#allocation8 + $0x34] sm:$0xf]
        %v2108 = vld [vmem:[#allocation8 + $0x38] sm:$0xf]
        %v2109 = vld [vmem:[#allocation8 + $0x3c] sm:$0xf]
        %v2110 = vld [vmem:[#allocation2 + $0x7] sm:$0xff]
        %v2111 = vld [vmem:[#allocation2 + $0xf] sm:$0xff]
        %v2112 = vpack.c.bf16 %v2111, %v2110
        %s2113 = scalar_lea.vmem [#allocation8], 64
        %v2114 = vld [vmem:[%s2113] sm:$0xf]
        %v2115 = vld [vmem:[%s2113 + $0x4] sm:$0xf]
        %v2116 = vld [vmem:[%s2113 + $0x8] sm:$0xf]
        %v2117 = vld [vmem:[%s2113 + $0xc] sm:$0xf]
        %v2118 = vld [vmem:[%s2113 + $0x10] sm:$0xf]
        %v2119 = vld [vmem:[%s2113 + $0x14] sm:$0xf]
        %v2120 = vld [vmem:[%s2113 + $0x18] sm:$0xf]
        %v2121 = vld [vmem:[%s2113 + $0x1c] sm:$0xf]
        %v2122 = vld [vmem:[%s2113 + $0x20] sm:$0xf]
        %v2123 = vld [vmem:[%s2113 + $0x24] sm:$0xf]
        %v2124 = vld [vmem:[%s2113 + $0x28] sm:$0xf]
        %v2125 = vld [vmem:[%s2113 + $0x2c] sm:$0xf]
        %v2126 = vld [vmem:[%s2113 + $0x30] sm:$0xf]
        %v2127 = vld [vmem:[%s2113 + $0x34] sm:$0xf]
        %v2128 = vld [vmem:[%s2113 + $0x38] sm:$0xf]
        %v2129 = vld [vmem:[%s2113 + $0x3c] sm:$0xf]
        %v2146 = vunpack.c.l.b16 %v2114
        %v2147 = vunpack.c.l.b16 %v2115
        %v2148 = vunpack.c.l.b16 %v2116
        %v2149 = vunpack.c.l.b16 %v2117
        %v2150 = vunpack.c.l.b16 %v2118
        %v2151 = vunpack.c.l.b16 %v2119
        %v2152 = vunpack.c.l.b16 %v2120
        %v2153 = vunpack.c.l.b16 %v2121
        %v2154 = vunpack.c.l.b16 %v2122
        %v2155 = vunpack.c.l.b16 %v2123
        %v2156 = vunpack.c.l.b16 %v2124
        %v2157 = vunpack.c.l.b16 %v2125
        %v2158 = vunpack.c.l.b16 %v2126
        %v2159 = vunpack.c.l.b16 %v2127
        %v2160 = vunpack.c.l.b16 %v2128
        %v2161 = vunpack.c.l.b16 %v2129
        %v2162 = vpack.c.b16 %v2147, %v2146
        %v2163 = vpack.c.b16 %v2149, %v2148
        %v2164 = vpack.c.b16 %v2151, %v2150
        %v2165 = vpack.c.b16 %v2153, %v2152
        %v2166 = vpack.c.b16 %v2155, %v2154
        %v2167 = vpack.c.b16 %v2157, %v2156
        %v2168 = vpack.c.b16 %v2159, %v2158
        %v2169 = vpack.c.b16 %v2161, %v2160
        %2178 = vmatprep.subr.bf16.mxu0 0
        %2179 = vmatpush1.bf16.msra.mxu0 %v2162
        %2180 = vmatprep.subr.bf16.mxu0 0
        %2181 = vmatpush1.bf16.msra.mxu0 %v2163
        %2182 = vmatprep.subr.bf16.mxu0 0
        %2183 = vmatpush1.bf16.msra.mxu0 %v2164
        %2184 = vmatprep.subr.bf16.mxu0 0
        %2185 = vmatpush1.bf16.msra.mxu0 %v2165
        %2186 = vmatprep.subr.bf16.mxu0 0
        %2187 = vmatpush1.bf16.msra.mxu0 %v2166
        %2188 = vmatprep.subr.bf16.mxu0 0
        %2189 = vmatpush1.bf16.msra.mxu0 %v2167
        %2190 = vmatprep.subr.bf16.mxu0 0
        %2191 = vmatpush1.bf16.msra.mxu0 %v2168
        %2192 = vmatprep.subr.bf16.mxu0 0
        %2193 = vmatpush1.bf16.msra.mxu0 %v2169
        %2194 = vmatprep.subr.bf16.mxu0 0
        %2195 = vmatpush1.bf16.msra.mxu0 0
        %2196 = vmatprep.subr.bf16.mxu0 0
        %2197 = vmatpush1.bf16.msra.mxu0 0
        %2198 = vmatprep.subr.bf16.mxu0 0
        %2199 = vmatpush1.bf16.msra.mxu0 0
        %2200 = vmatprep.subr.bf16.mxu0 0
        %2201 = vmatpush1.bf16.msra.mxu0 0
        %2202 = vmatprep.subr.bf16.mxu0 0
        %2203 = vmatpush1.bf16.msra.mxu0 0
        %2204 = vmatprep.subr.bf16.mxu0 0
        %2205 = vmatpush1.bf16.msra.mxu0 0
        %2206 = vmatprep.subr.bf16.mxu0 0
        %2207 = vmatpush1.bf16.msra.mxu0 0
        %2208 = vmatprep.subr.bf16.mxu0 0
        %2209 = vmatpush1.bf16.msra.mxu0 0
        %2210 = vmatprep.mubr.bf16.mxu0 0
        %2211 = vmatmul.mubr.bf16.gmra.mrb[0].mxu0 %v2112
        %v2212 = vpop.f32.mrb[0].mxu0
        %v2213 = vadd.f32 0.0, %v2212
        %v2214 = vpop.f32.mrb[0].mxu0
        %v2215 = vpop.f32.mrb[0].mxu0
        %v2216 = vadd.f32 0.0, %v2215
        %v2217 = vpop.f32.mrb[0].mxu0
        %2218 = vdwg.mxu0
        %v2235 = vunpack.c.l.b16 %v2094
        %v2236 = vunpack.c.l.b16 %v2095
        %v2237 = vunpack.c.l.b16 %v2096
        %v2238 = vunpack.c.l.b16 %v2097
        %v2239 = vunpack.c.l.b16 %v2098
        %v2240 = vunpack.c.l.b16 %v2099
        %v2241 = vunpack.c.l.b16 %v2100
        %v2242 = vunpack.c.l.b16 %v2101
        %v2243 = vunpack.c.l.b16 %v2102
        %v2244 = vunpack.c.l.b16 %v2103
        %v2245 = vunpack.c.l.b16 %v2104
        %v2246 = vunpack.c.l.b16 %v2105
        %v2247 = vunpack.c.l.b16 %v2106
        %v2248 = vunpack.c.l.b16 %v2107
        %v2249 = vunpack.c.l.b16 %v2108
        %v2250 = vunpack.c.l.b16 %v2109
        %v2251 = vpack.c.b16 %v2236, %v2235
        %v2252 = vpack.c.b16 %v2238, %v2237
        %v2253 = vpack.c.b16 %v2240, %v2239
        %v2254 = vpack.c.b16 %v2242, %v2241
        %v2255 = vpack.c.b16 %v2244, %v2243
        %v2256 = vpack.c.b16 %v2246, %v2245
        %v2257 = vpack.c.b16 %v2248, %v2247
        %v2258 = vpack.c.b16 %v2250, %v2249
        %2267 = vmatprep.subr.bf16.mxu0 0
        %2268 = vmatpush1.bf16.msra.mxu0 %v2251
        %2269 = vmatprep.subr.bf16.mxu0 0
        %2270 = vmatpush1.bf16.msra.mxu0 %v2252
        %2271 = vmatprep.subr.bf16.mxu0 0
        %2272 = vmatpush1.bf16.msra.mxu0 %v2253
        %2273 = vmatprep.subr.bf16.mxu0 0
        %2274 = vmatpush1.bf16.msra.mxu0 %v2254
        %2275 = vmatprep.subr.bf16.mxu0 0
        %2276 = vmatpush1.bf16.msra.mxu0 %v2255
        %2277 = vmatprep.subr.bf16.mxu0 0
        %2278 = vmatpush1.bf16.msra.mxu0 %v2256
        %2279 = vmatprep.subr.bf16.mxu0 0
        %2280 = vmatpush1.bf16.msra.mxu0 %v2257
        %2281 = vmatprep.subr.bf16.mxu0 0
        %2282 = vmatpush1.bf16.msra.mxu0 %v2258
        %2283 = vmatprep.subr.bf16.mxu0 0
        %2284 = vmatpush1.bf16.msra.mxu0 0
        %2285 = vmatprep.subr.bf16.mxu0 0
        %2286 = vmatpush1.bf16.msra.mxu0 0
        %2287 = vmatprep.subr.bf16.mxu0 0
        %2288 = vmatpush1.bf16.msra.mxu0 0
        %2289 = vmatprep.subr.bf16.mxu0 0
        %2290 = vmatpush1.bf16.msra.mxu0 0
        %2291 = vmatprep.subr.bf16.mxu0 0
        %2292 = vmatpush1.bf16.msra.mxu0 0
        %2293 = vmatprep.subr.bf16.mxu0 0
        %2294 = vmatpush1.bf16.msra.mxu0 0
        %2295 = vmatprep.subr.bf16.mxu0 0
        %2296 = vmatpush1.bf16.msra.mxu0 0
        %2297 = vmatprep.subr.bf16.mxu0 0
        %2298 = vmatpush1.bf16.msra.mxu0 0
        %2299 = vmatprep.mubr.bf16.mxu0 0
        %2300 = vmatmul.mubr.bf16.gmra.mrb[0].mxu0 %v2093
        %v2301 = vpop.f32.mrb[0].mxu0
        %v2302 = vadd.f32 %v2213, %v2301
        %v2303 = vpop.f32.mrb[0].mxu0
        %v2304 = vpop.f32.mrb[0].mxu0
        %v2305 = vadd.f32 %v2216, %v2304
        %v2306 = vpop.f32.mrb[0].mxu0
        %2307 = vdwg.mxu0
        %v2308 = vld [vmem:[#allocation2 + $0x8] sm:$0xff]
        %v2309 = vld [vmem:[#allocation2 + $0x10] sm:$0xff]
        %v2310 = vpack.c.bf16 %v2309, %v2308
        %s2311 = scalar_lea.vmem [#allocation8], 128
        %v2312 = vld [vmem:[%s2311] sm:$0xf]
        %v2313 = vld [vmem:[%s2311 + $0x4] sm:$0xf]
        %v2314 = vld [vmem:[%s2311 + $0x8] sm:$0xf]
        %v2315 = vld [vmem:[%s2311 + $0xc] sm:$0xf]
        %v2316 = vld [vmem:[%s2311 + $0x10] sm:$0xf]
        %v2317 = vld [vmem:[%s2311 + $0x14] sm:$0xf]
        %v2318 = vld [vmem:[%s2311 + $0x18] sm:$0xf]
        %v2319 = vld [vmem:[%s2311 + $0x1c] sm:$0xf]
        %v2320 = vld [vmem:[%s2311 + $0x20] sm:$0xf]
        %v2321 = vld [vmem:[%s2311 + $0x24] sm:$0xf]
        %v2322 = vld [vmem:[%s2311 + $0x28] sm:$0xf]
        %v2323 = vld [vmem:[%s2311 + $0x2c] sm:$0xf]
        %v2324 = vld [vmem:[%s2311 + $0x30] sm:$0xf]
        %v2325 = vld [vmem:[%s2311 + $0x34] sm:$0xf]
        %v2326 = vld [vmem:[%s2311 + $0x38] sm:$0xf]
        %v2327 = vld [vmem:[%s2311 + $0x3c] sm:$0xf]
        %v2344 = vunpack.c.l.b16 %v2312
        %v2345 = vunpack.c.l.b16 %v2313
        %v2346 = vunpack.c.l.b16 %v2314
        %v2347 = vunpack.c.l.b16 %v2315
        %v2348 = vunpack.c.l.b16 %v2316
        %v2349 = vunpack.c.l.b16 %v2317
        %v2350 = vunpack.c.l.b16 %v2318
        %v2351 = vunpack.c.l.b16 %v2319
        %v2352 = vunpack.c.l.b16 %v2320
        %v2353 = vunpack.c.l.b16 %v2321
        %v2354 = vunpack.c.l.b16 %v2322
        %v2355 = vunpack.c.l.b16 %v2323
        %v2356 = vunpack.c.l.b16 %v2324
        %v2357 = vunpack.c.l.b16 %v2325
        %v2358 = vunpack.c.l.b16 %v2326
        %v2359 = vunpack.c.l.b16 %v2327
        %v2360 = vpack.c.b16 %v2345, %v2344
        %v2361 = vpack.c.b16 %v2347, %v2346
        %v2362 = vpack.c.b16 %v2349, %v2348
        %v2363 = vpack.c.b16 %v2351, %v2350
        %v2364 = vpack.c.b16 %v2353, %v2352
        %v2365 = vpack.c.b16 %v2355, %v2354
        %v2366 = vpack.c.b16 %v2357, %v2356
        %v2367 = vpack.c.b16 %v2359, %v2358
        %2376 = vmatprep.subr.bf16.mxu0 0
        %2377 = vmatpush1.bf16.msra.mxu0 %v2360
        %2378 = vmatprep.subr.bf16.mxu0 0
        %2379 = vmatpush1.bf16.msra.mxu0 %v2361
        %2380 = vmatprep.subr.bf16.mxu0 0
        %2381 = vmatpush1.bf16.msra.mxu0 %v2362
        %2382 = vmatprep.subr.bf16.mxu0 0
        %2383 = vmatpush1.bf16.msra.mxu0 %v2363
        %2384 = vmatprep.subr.bf16.mxu0 0
        %2385 = vmatpush1.bf16.msra.mxu0 %v2364
        %2386 = vmatprep.subr.bf16.mxu0 0
        %2387 = vmatpush1.bf16.msra.mxu0 %v2365
        %2388 = vmatprep.subr.bf16.mxu0 0
        %2389 = vmatpush1.bf16.msra.mxu0 %v2366
        %2390 = vmatprep.subr.bf16.mxu0 0
        %2391 = vmatpush1.bf16.msra.mxu0 %v2367
        %2392 = vmatprep.subr.bf16.mxu0 0
        %2393 = vmatpush1.bf16.msra.mxu0 0
        %2394 = vmatprep.subr.bf16.mxu0 0
        %2395 = vmatpush1.bf16.msra.mxu0 0
        %2396 = vmatprep.subr.bf16.mxu0 0
        %2397 = vmatpush1.bf16.msra.mxu0 0
        %2398 = vmatprep.subr.bf16.mxu0 0
        %2399 = vmatpush1.bf16.msra.mxu0 0
        %2400 = vmatprep.subr.bf16.mxu0 0
        %2401 = vmatpush1.bf16.msra.mxu0 0
        %2402 = vmatprep.subr.bf16.mxu0 0
        %2403 = vmatpush1.bf16.msra.mxu0 0
        %2404 = vmatprep.subr.bf16.mxu0 0
        %2405 = vmatpush1.bf16.msra.mxu0 0
        %2406 = vmatprep.subr.bf16.mxu0 0
        %2407 = vmatpush1.bf16.msra.mxu0 0
        %2408 = vmatprep.mubr.bf16.mxu0 0
        %2409 = vmatmul.mubr.bf16.gmra.mrb[0].mxu0 %v2310
        %v2410 = vpop.f32.mrb[0].mxu0
        %v2411 = vadd.f32 0.0, %v2410
        %v2412 = vpop.f32.mrb[0].mxu0
        %v2413 = vpop.f32.mrb[0].mxu0
        %v2414 = vadd.f32 0.0, %v2413
        %v2415 = vpop.f32.mrb[0].mxu0
        %2416 = vdwg.mxu0
        %v2417 = vadd.f32 %v2302, %v2411
        %v2418 = vadd.f32 %v2305, %v2414
        %v2419 = vld [vmem:[#allocation2 + $0x9] sm:$0xff]
        %v2420 = vld [vmem:[#allocation2 + $0x11] sm:$0xff]
        %v2421 = vpack.c.bf16 %v2420, %v2419
        %s2422 = scalar_lea.vmem [#allocation8], 192
        %v2423 = vld [vmem:[%s2422] sm:$0xf]
        %v2424 = vld [vmem:[%s2422 + $0x4] sm:$0xf]
        %v2425 = vld [vmem:[%s2422 + $0x8] sm:$0xf]
        %v2426 = vld [vmem:[%s2422 + $0xc] sm:$0xf]
        %v2427 = vld [vmem:[%s2422 + $0x10] sm:$0xf]
        %v2428 = vld [vmem:[%s2422 + $0x14] sm:$0xf]
        %v2429 = vld [vmem:[%s2422 + $0x18] sm:$0xf]
        %v2430 = vld [vmem:[%s2422 + $0x1c] sm:$0xf]
        %v2431 = vld [vmem:[%s2422 + $0x20] sm:$0xf]
        %v2432 = vld [vmem:[%s2422 + $0x24] sm:$0xf]
        %v2433 = vld [vmem:[%s2422 + $0x28] sm:$0xf]
        %v2434 = vld [vmem:[%s2422 + $0x2c] sm:$0xf]
        %v2435 = vld [vmem:[%s2422 + $0x30] sm:$0xf]
        %v2436 = vld [vmem:[%s2422 + $0x34] sm:$0xf]
        %v2437 = vld [vmem:[%s2422 + $0x38] sm:$0xf]
        %v2438 = vld [vmem:[%s2422 + $0x3c] sm:$0xf]
        %v2455 = vunpack.c.l.b16 %v2423
        %v2456 = vunpack.c.l.b16 %v2424
        %v2457 = vunpack.c.l.b16 %v2425
        %v2458 = vunpack.c.l.b16 %v2426
        %v2459 = vunpack.c.l.b16 %v2427
        %v2460 = vunpack.c.l.b16 %v2428
        %v2461 = vunpack.c.l.b16 %v2429
        %v2462 = vunpack.c.l.b16 %v2430
        %v2463 = vunpack.c.l.b16 %v2431
        %v2464 = vunpack.c.l.b16 %v2432
        %v2465 = vunpack.c.l.b16 %v2433
        %v2466 = vunpack.c.l.b16 %v2434
        %v2467 = vunpack.c.l.b16 %v2435
        %v2468 = vunpack.c.l.b16 %v2436
        %v2469 = vunpack.c.l.b16 %v2437
        %v2470 = vunpack.c.l.b16 %v2438
        %v2471 = vpack.c.b16 %v2456, %v2455
        %v2472 = vpack.c.b16 %v2458, %v2457
        %v2473 = vpack.c.b16 %v2460, %v2459
        %v2474 = vpack.c.b16 %v2462, %v2461
        %v2475 = vpack.c.b16 %v2464, %v2463
        %v2476 = vpack.c.b16 %v2466, %v2465
        %v2477 = vpack.c.b16 %v2468, %v2467
        %v2478 = vpack.c.b16 %v2470, %v2469
        %2487 = vmatprep.subr.bf16.mxu0 0
        %2488 = vmatpush1.bf16.msra.mxu0 %v2471
        %2489 = vmatprep.subr.bf16.mxu0 0
        %2490 = vmatpush1.bf16.msra.mxu0 %v2472
        %2491 = vmatprep.subr.bf16.mxu0 0
        %2492 = vmatpush1.bf16.msra.mxu0 %v2473
        %2493 = vmatprep.subr.bf16.mxu0 0
        %2494 = vmatpush1.bf16.msra.mxu0 %v2474
        %2495 = vmatprep.subr.bf16.mxu0 0
        %2496 = vmatpush1.bf16.msra.mxu0 %v2475
        %2497 = vmatprep.subr.bf16.mxu0 0
        %2498 = vmatpush1.bf16.msra.mxu0 %v2476
        %2499 = vmatprep.subr.bf16.mxu0 0
        %2500 = vmatpush1.bf16.msra.mxu0 %v2477
        %2501 = vmatprep.subr.bf16.mxu0 0
        %2502 = vmatpush1.bf16.msra.mxu0 %v2478
        %2503 = vmatprep.subr.bf16.mxu0 0
        %2504 = vmatpush1.bf16.msra.mxu0 0
        %2505 = vmatprep.subr.bf16.mxu0 0
        %2506 = vmatpush1.bf16.msra.mxu0 0
        %2507 = vmatprep.subr.bf16.mxu0 0
        %2508 = vmatpush1.bf16.msra.mxu0 0
        %2509 = vmatprep.subr.bf16.mxu0 0
        %2510 = vmatpush1.bf16.msra.mxu0 0
        %2511 = vmatprep.subr.bf16.mxu0 0
        %2512 = vmatpush1.bf16.msra.mxu0 0
        %2513 = vmatprep.subr.bf16.mxu0 0
        %2514 = vmatpush1.bf16.msra.mxu0 0
        %2515 = vmatprep.subr.bf16.mxu0 0
        %2516 = vmatpush1.bf16.msra.mxu0 0
        %2517 = vmatprep.subr.bf16.mxu0 0
        %2518 = vmatpush1.bf16.msra.mxu0 0
        %2519 = vmatprep.mubr.bf16.mxu0 0
        %2520 = vmatmul.mubr.bf16.gmra.mrb[0].mxu0 %v2421
        %v2521 = vpop.f32.mrb[0].mxu0
        %v2522 = vadd.f32 0.0, %v2521
        %v2523 = vpop.f32.mrb[0].mxu0
        %v2524 = vpop.f32.mrb[0].mxu0
        %v2525 = vadd.f32 0.0, %v2524
        %v2526 = vpop.f32.mrb[0].mxu0
        %2527 = vdwg.mxu0
        %v2528 = vadd.f32 %v2417, %v2522
        %v2529 = vadd.f32 %v2418, %v2525
        %v2530 = vld [vmem:[#allocation2 + $0xa] sm:$0xff]
        %v2531 = vld [vmem:[#allocation2 + $0x12] sm:$0xff]
        %v2532 = vpack.c.bf16 %v2531, %v2530
        %s2533 = scalar_lea.vmem [#allocation8], 256
        %v2534 = vld [vmem:[%s2533] sm:$0xf]
        %v2535 = vld [vmem:[%s2533 + $0x4] sm:$0xf]
        %v2536 = vld [vmem:[%s2533 + $0x8] sm:$0xf]
        %v2537 = vld [vmem:[%s2533 + $0xc] sm:$0xf]
        %v2538 = vld [vmem:[%s2533 + $0x10] sm:$0xf]
        %v2539 = vld [vmem:[%s2533 + $0x14] sm:$0xf]
        %v2540 = vld [vmem:[%s2533 + $0x18] sm:$0xf]
        %v2541 = vld [vmem:[%s2533 + $0x1c] sm:$0xf]
        %v2542 = vld [vmem:[%s2533 + $0x20] sm:$0xf]
        %v2543 = vld [vmem:[%s2533 + $0x24] sm:$0xf]
        %v2544 = vld [vmem:[%s2533 + $0x28] sm:$0xf]
        %v2545 = vld [vmem:[%s2533 + $0x2c] sm:$0xf]
        %v2546 = vld [vmem:[%s2533 + $0x30] sm:$0xf]
        %v2547 = vld [vmem:[%s2533 + $0x34] sm:$0xf]
        %v2548 = vld [vmem:[%s2533 + $0x38] sm:$0xf]
        %v2549 = vld [vmem:[%s2533 + $0x3c] sm:$0xf]
        %v2566 = vunpack.c.l.b16 %v2534
        %v2567 = vunpack.c.l.b16 %v2535
        %v2568 = vunpack.c.l.b16 %v2536
        %v2569 = vunpack.c.l.b16 %v2537
        %v2570 = vunpack.c.l.b16 %v2538
        %v2571 = vunpack.c.l.b16 %v2539
        %v2572 = vunpack.c.l.b16 %v2540
        %v2573 = vunpack.c.l.b16 %v2541
        %v2574 = vunpack.c.l.b16 %v2542
        %v2575 = vunpack.c.l.b16 %v2543
        %v2576 = vunpack.c.l.b16 %v2544
        %v2577 = vunpack.c.l.b16 %v2545
        %v2578 = vunpack.c.l.b16 %v2546
        %v2579 = vunpack.c.l.b16 %v2547
        %v2580 = vunpack.c.l.b16 %v2548
        %v2581 = vunpack.c.l.b16 %v2549
        %v2582 = vpack.c.b16 %v2567, %v2566
        %v2583 = vpack.c.b16 %v2569, %v2568
        %v2584 = vpack.c.b16 %v2571, %v2570
        %v2585 = vpack.c.b16 %v2573, %v2572
        %v2586 = vpack.c.b16 %v2575, %v2574
        %v2587 = vpack.c.b16 %v2577, %v2576
        %v2588 = vpack.c.b16 %v2579, %v2578
        %v2589 = vpack.c.b16 %v2581, %v2580
        %2598 = vmatprep.subr.bf16.mxu0 0
        %2599 = vmatpush1.bf16.msra.mxu0 %v2582
        %2600 = vmatprep.subr.bf16.mxu0 0
        %2601 = vmatpush1.bf16.msra.mxu0 %v2583
        %2602 = vmatprep.subr.bf16.mxu0 0
        %2603 = vmatpush1.bf16.msra.mxu0 %v2584
        %2604 = vmatprep.subr.bf16.mxu0 0
        %2605 = vmatpush1.bf16.msra.mxu0 %v2585
        %2606 = vmatprep.subr.bf16.mxu0 0
        %2607 = vmatpush1.bf16.msra.mxu0 %v2586
        %2608 = vmatprep.subr.bf16.mxu0 0
        %2609 = vmatpush1.bf16.msra.mxu0 %v2587
        %2610 = vmatprep.subr.bf16.mxu0 0
        %2611 = vmatpush1.bf16.msra.mxu0 %v2588
        %2612 = vmatprep.subr.bf16.mxu0 0
        %2613 = vmatpush1.bf16.msra.mxu0 %v2589
        %2614 = vmatprep.subr.bf16.mxu0 0
        %2615 = vmatpush1.bf16.msra.mxu0 0
        %2616 = vmatprep.subr.bf16.mxu0 0
        %2617 = vmatpush1.bf16.msra.mxu0 0
        %2618 = vmatprep.subr.bf16.mxu0 0
        %2619 = vmatpush1.bf16.msra.mxu0 0
        %2620 = vmatprep.subr.bf16.mxu0 0
        %2621 = vmatpush1.bf16.msra.mxu0 0
        %2622 = vmatprep.subr.bf16.mxu0 0
        %2623 = vmatpush1.bf16.msra.mxu0 0
        %2624 = vmatprep.subr.bf16.mxu0 0
        %2625 = vmatpush1.bf16.msra.mxu0 0
        %2626 = vmatprep.subr.bf16.mxu0 0
        %2627 = vmatpush1.bf16.msra.mxu0 0
        %2628 = vmatprep.subr.bf16.mxu0 0
        %2629 = vmatpush1.bf16.msra.mxu0 0
        %2630 = vmatprep.mubr.bf16.mxu0 0
        %2631 = vmatmul.mubr.bf16.gmra.mrb[0].mxu0 %v2532
        %v2632 = vpop.f32.mrb[0].mxu0
        %v2633 = vadd.f32 0.0, %v2632
        %v2634 = vpop.f32.mrb[0].mxu0
        %v2635 = vpop.f32.mrb[0].mxu0
        %v2636 = vadd.f32 0.0, %v2635
        %v2637 = vpop.f32.mrb[0].mxu0
        %2638 = vdwg.mxu0
        %v2639 = vadd.f32 %v2528, %v2633
        %v2640 = vadd.f32 %v2529, %v2636
        %v2641 = vld [vmem:[%s6] sm:$0x1]
        %v2643 = vlaneseq
        %v2644 = vshrl.u32 %v2643, 7
        %v2645 = vsub.s32 0, %v2644
        %v2646 = vrot.slane %v2641, %v2645
        %v2648 = vadd.f32 %v2639, %v2646
        %v2649 = vadd.f32 %v2640, %v2646
        %v2650 = vmax.f32 %v2648, 0.0
        %v2651 = vmax.f32 %v2649, 0.0
        %2652 = vst [vmem:[#allocation2 + $0x8] sm:$0xff] %v2650
        %2653 = vst [vmem:[#allocation2 + $0x10] sm:$0xff] %v2651
        %v2654 = vld [vmem:[#allocation2 + $0x7] sm:$0xff]
        %v2655 = vld [vmem:[#allocation2 + $0xf] sm:$0xff]
        %v2656 = vpack.c.bf16 %v2655, %v2654
        %v2657 = vld [vmem:[#allocation9] sm:$0xf]
        %v2658 = vld [vmem:[#allocation9 + $0x4] sm:$0xf]
        %v2659 = vld [vmem:[#allocation9 + $0x8] sm:$0xf]
        %v2660 = vld [vmem:[#allocation9 + $0xc] sm:$0xf]
        %v2661 = vld [vmem:[#allocation9 + $0x10] sm:$0xf]
        %v2662 = vld [vmem:[#allocation9 + $0x14] sm:$0xf]
        %v2663 = vld [vmem:[#allocation9 + $0x18] sm:$0xf]
        %v2664 = vld [vmem:[#allocation9 + $0x1c] sm:$0xf]
        %v2665 = vld [vmem:[#allocation9 + $0x20] sm:$0xf]
        %v2666 = vld [vmem:[#allocation9 + $0x24] sm:$0xf]
        %v2667 = vld [vmem:[#allocation9 + $0x28] sm:$0xf]
        %v2668 = vld [vmem:[#allocation9 + $0x2c] sm:$0xf]
        %v2669 = vld [vmem:[#allocation9 + $0x30] sm:$0xf]
        %v2670 = vld [vmem:[#allocation9 + $0x34] sm:$0xf]
        %v2671 = vld [vmem:[#allocation9 + $0x38] sm:$0xf]
        %v2672 = vld [vmem:[#allocation9 + $0x3c] sm:$0xf]
        %v2673 = vld [vmem:[#allocation2 + $0x8] sm:$0xff]
        %v2674 = vld [vmem:[#allocation2 + $0x10] sm:$0xff]
        %v2675 = vpack.c.bf16 %v2674, %v2673
        %s2676 = scalar_lea.vmem [#allocation9], 64
        %v2677 = vld [vmem:[%s2676] sm:$0xf]
        %v2678 = vld [vmem:[%s2676 + $0x4] sm:$0xf]
        %v2679 = vld [vmem:[%s2676 + $0x8] sm:$0xf]
        %v2680 = vld [vmem:[%s2676 + $0xc] sm:$0xf]
        %v2681 = vld [vmem:[%s2676 + $0x10] sm:$0xf]
        %v2682 = vld [vmem:[%s2676 + $0x14] sm:$0xf]
        %v2683 = vld [vmem:[%s2676 + $0x18] sm:$0xf]
        %v2684 = vld [vmem:[%s2676 + $0x1c] sm:$0xf]
        %v2685 = vld [vmem:[%s2676 + $0x20] sm:$0xf]
        %v2686 = vld [vmem:[%s2676 + $0x24] sm:$0xf]
        %v2687 = vld [vmem:[%s2676 + $0x28] sm:$0xf]
        %v2688 = vld [vmem:[%s2676 + $0x2c] sm:$0xf]
        %v2689 = vld [vmem:[%s2676 + $0x30] sm:$0xf]
        %v2690 = vld [vmem:[%s2676 + $0x34] sm:$0xf]
        %v2691 = vld [vmem:[%s2676 + $0x38] sm:$0xf]
        %v2692 = vld [vmem:[%s2676 + $0x3c] sm:$0xf]
        %v2709 = vunpack.c.l.b16 %v2677
        %v2710 = vunpack.c.l.b16 %v2678
        %v2711 = vunpack.c.l.b16 %v2679
        %v2712 = vunpack.c.l.b16 %v2680
        %v2713 = vunpack.c.l.b16 %v2681
        %v2714 = vunpack.c.l.b16 %v2682
        %v2715 = vunpack.c.l.b16 %v2683
        %v2716 = vunpack.c.l.b16 %v2684
        %v2717 = vunpack.c.l.b16 %v2685
        %v2718 = vunpack.c.l.b16 %v2686
        %v2719 = vunpack.c.l.b16 %v2687
        %v2720 = vunpack.c.l.b16 %v2688
        %v2721 = vunpack.c.l.b16 %v2689
        %v2722 = vunpack.c.l.b16 %v2690
        %v2723 = vunpack.c.l.b16 %v2691
        %v2724 = vunpack.c.l.b16 %v2692
        %v2725 = vpack.c.b16 %v2710, %v2709
        %v2726 = vpack.c.b16 %v2712, %v2711
        %v2727 = vpack.c.b16 %v2714, %v2713
        %v2728 = vpack.c.b16 %v2716, %v2715
        %v2729 = vpack.c.b16 %v2718, %v2717
        %v2730 = vpack.c.b16 %v2720, %v2719
        %v2731 = vpack.c.b16 %v2722, %v2721
        %v2732 = vpack.c.b16 %v2724, %v2723
        %2741 = vmatprep.subr.bf16.mxu0 0
        %2742 = vmatpush1.bf16.msra.mxu0 %v2725
        %2743 = vmatprep.subr.bf16.mxu0 0
        %2744 = vmatpush1.bf16.msra.mxu0 %v2726
        %2745 = vmatprep.subr.bf16.mxu0 0
        %2746 = vmatpush1.bf16.msra.mxu0 %v2727
        %2747 = vmatprep.subr.bf16.mxu0 0
        %2748 = vmatpush1.bf16.msra.mxu0 %v2728
        %2749 = vmatprep.subr.bf16.mxu0 0
        %2750 = vmatpush1.bf16.msra.mxu0 %v2729
        %2751 = vmatprep.subr.bf16.mxu0 0
        %2752 = vmatpush1.bf16.msra.mxu0 %v2730
        %2753 = vmatprep.subr.bf16.mxu0 0
        %2754 = vmatpush1.bf16.msra.mxu0 %v2731
        %2755 = vmatprep.subr.bf16.mxu0 0
        %2756 = vmatpush1.bf16.msra.mxu0 %v2732
        %2757 = vmatprep.subr.bf16.mxu0 0
        %2758 = vmatpush1.bf16.msra.mxu0 0
        %2759 = vmatprep.subr.bf16.mxu0 0
        %2760 = vmatpush1.bf16.msra.mxu0 0
        %2761 = vmatprep.subr.bf16.mxu0 0
        %2762 = vmatpush1.bf16.msra.mxu0 0
        %2763 = vmatprep.subr.bf16.mxu0 0
        %2764 = vmatpush1.bf16.msra.mxu0 0
        %2765 = vmatprep.subr.bf16.mxu0 0
        %2766 = vmatpush1.bf16.msra.mxu0 0
        %2767 = vmatprep.subr.bf16.mxu0 0
        %2768 = vmatpush1.bf16.msra.mxu0 0
        %2769 = vmatprep.subr.bf16.mxu0 0
        %2770 = vmatpush1.bf16.msra.mxu0 0
        %2771 = vmatprep.subr.bf16.mxu0 0
        %2772 = vmatpush1.bf16.msra.mxu0 0
        %2773 = vmatprep.mubr.bf16.mxu0 0
        %2774 = vmatmul.mubr.bf16.gmra.mrb[0].mxu0 %v2675
        %v2775 = vpop.f32.mrb[0].mxu0
        %v2776 = vadd.f32 0.0, %v2775
        %v2777 = vpop.f32.mrb[0].mxu0
        %v2778 = vpop.f32.mrb[0].mxu0
        %v2779 = vadd.f32 0.0, %v2778
        %v2780 = vpop.f32.mrb[0].mxu0
        %2781 = vdwg.mxu0
        %v2798 = vunpack.c.l.b16 %v2657
        %v2799 = vunpack.c.l.b16 %v2658
        %v2800 = vunpack.c.l.b16 %v2659
        %v2801 = vunpack.c.l.b16 %v2660
        %v2802 = vunpack.c.l.b16 %v2661
        %v2803 = vunpack.c.l.b16 %v2662
        %v2804 = vunpack.c.l.b16 %v2663
        %v2805 = vunpack.c.l.b16 %v2664
        %v2806 = vunpack.c.l.b16 %v2665
        %v2807 = vunpack.c.l.b16 %v2666
        %v2808 = vunpack.c.l.b16 %v2667
        %v2809 = vunpack.c.l.b16 %v2668
        %v2810 = vunpack.c.l.b16 %v2669
        %v2811 = vunpack.c.l.b16 %v2670
        %v2812 = vunpack.c.l.b16 %v2671
        %v2813 = vunpack.c.l.b16 %v2672
        %v2814 = vpack.c.b16 %v2799, %v2798
        %v2815 = vpack.c.b16 %v2801, %v2800
        %v2816 = vpack.c.b16 %v2803, %v2802
        %v2817 = vpack.c.b16 %v2805, %v2804
        %v2818 = vpack.c.b16 %v2807, %v2806
        %v2819 = vpack.c.b16 %v2809, %v2808
        %v2820 = vpack.c.b16 %v2811, %v2810
        %v2821 = vpack.c.b16 %v2813, %v2812
        %2830 = vmatprep.subr.bf16.mxu0 0
        %2831 = vmatpush1.bf16.msra.mxu0 %v2814
        %2832 = vmatprep.subr.bf16.mxu0 0
        %2833 = vmatpush1.bf16.msra.mxu0 %v2815
        %2834 = vmatprep.subr.bf16.mxu0 0
        %2835 = vmatpush1.bf16.msra.mxu0 %v2816
        %2836 = vmatprep.subr.bf16.mxu0 0
        %2837 = vmatpush1.bf16.msra.mxu0 %v2817
        %2838 = vmatprep.subr.bf16.mxu0 0
        %2839 = vmatpush1.bf16.msra.mxu0 %v2818
        %2840 = vmatprep.subr.bf16.mxu0 0
        %2841 = vmatpush1.bf16.msra.mxu0 %v2819
        %2842 = vmatprep.subr.bf16.mxu0 0
        %2843 = vmatpush1.bf16.msra.mxu0 %v2820
        %2844 = vmatprep.subr.bf16.mxu0 0
        %2845 = vmatpush1.bf16.msra.mxu0 %v2821
        %2846 = vmatprep.subr.bf16.mxu0 0
        %2847 = vmatpush1.bf16.msra.mxu0 0
        %2848 = vmatprep.subr.bf16.mxu0 0
        %2849 = vmatpush1.bf16.msra.mxu0 0
        %2850 = vmatprep.subr.bf16.mxu0 0
        %2851 = vmatpush1.bf16.msra.mxu0 0
        %2852 = vmatprep.subr.bf16.mxu0 0
        %2853 = vmatpush1.bf16.msra.mxu0 0
        %2854 = vmatprep.subr.bf16.mxu0 0
        %2855 = vmatpush1.bf16.msra.mxu0 0
        %2856 = vmatprep.subr.bf16.mxu0 0
        %2857 = vmatpush1.bf16.msra.mxu0 0
        %2858 = vmatprep.subr.bf16.mxu0 0
        %2859 = vmatpush1.bf16.msra.mxu0 0
        %2860 = vmatprep.subr.bf16.mxu0 0
        %2861 = vmatpush1.bf16.msra.mxu0 0
        %2862 = vmatprep.mubr.bf16.mxu0 0
        %2863 = vmatmul.mubr.bf16.gmra.mrb[0].mxu0 %v2656
        %v2864 = vpop.f32.mrb[0].mxu0
        %v2865 = vadd.f32 %v2776, %v2864
        %v2866 = vpop.f32.mrb[0].mxu0
        %v2867 = vpop.f32.mrb[0].mxu0
        %v2868 = vadd.f32 %v2779, %v2867
        %v2869 = vpop.f32.mrb[0].mxu0
        %2870 = vdwg.mxu0
        %v2871 = vld [vmem:[#allocation2 + $0x9] sm:$0xff]
        %v2872 = vld [vmem:[#allocation2 + $0x11] sm:$0xff]
        %v2873 = vpack.c.bf16 %v2872, %v2871
        %s2874 = scalar_lea.vmem [#allocation9], 128
        %v2875 = vld [vmem:[%s2874] sm:$0xf]
        %v2876 = vld [vmem:[%s2874 + $0x4] sm:$0xf]
        %v2877 = vld [vmem:[%s2874 + $0x8] sm:$0xf]
        %v2878 = vld [vmem:[%s2874 + $0xc] sm:$0xf]
        %v2879 = vld [vmem:[%s2874 + $0x10] sm:$0xf]
        %v2880 = vld [vmem:[%s2874 + $0x14] sm:$0xf]
        %v2881 = vld [vmem:[%s2874 + $0x18] sm:$0xf]
        %v2882 = vld [vmem:[%s2874 + $0x1c] sm:$0xf]
        %v2883 = vld [vmem:[%s2874 + $0x20] sm:$0xf]
        %v2884 = vld [vmem:[%s2874 + $0x24] sm:$0xf]
        %v2885 = vld [vmem:[%s2874 + $0x28] sm:$0xf]
        %v2886 = vld [vmem:[%s2874 + $0x2c] sm:$0xf]
        %v2887 = vld [vmem:[%s2874 + $0x30] sm:$0xf]
        %v2888 = vld [vmem:[%s2874 + $0x34] sm:$0xf]
        %v2889 = vld [vmem:[%s2874 + $0x38] sm:$0xf]
        %v2890 = vld [vmem:[%s2874 + $0x3c] sm:$0xf]
        %v2907 = vunpack.c.l.b16 %v2875
        %v2908 = vunpack.c.l.b16 %v2876
        %v2909 = vunpack.c.l.b16 %v2877
        %v2910 = vunpack.c.l.b16 %v2878
        %v2911 = vunpack.c.l.b16 %v2879
        %v2912 = vunpack.c.l.b16 %v2880
        %v2913 = vunpack.c.l.b16 %v2881
        %v2914 = vunpack.c.l.b16 %v2882
        %v2915 = vunpack.c.l.b16 %v2883
        %v2916 = vunpack.c.l.b16 %v2884
        %v2917 = vunpack.c.l.b16 %v2885
        %v2918 = vunpack.c.l.b16 %v2886
        %v2919 = vunpack.c.l.b16 %v2887
        %v2920 = vunpack.c.l.b16 %v2888
        %v2921 = vunpack.c.l.b16 %v2889
        %v2922 = vunpack.c.l.b16 %v2890
        %v2923 = vpack.c.b16 %v2908, %v2907
        %v2924 = vpack.c.b16 %v2910, %v2909
        %v2925 = vpack.c.b16 %v2912, %v2911
        %v2926 = vpack.c.b16 %v2914, %v2913
        %v2927 = vpack.c.b16 %v2916, %v2915
        %v2928 = vpack.c.b16 %v2918, %v2917
        %v2929 = vpack.c.b16 %v2920, %v2919
        %v2930 = vpack.c.b16 %v2922, %v2921
        %2939 = vmatprep.subr.bf16.mxu0 0
        %2940 = vmatpush1.bf16.msra.mxu0 %v2923
        %2941 = vmatprep.subr.bf16.mxu0 0
        %2942 = vmatpush1.bf16.msra.mxu0 %v2924
        %2943 = vmatprep.subr.bf16.mxu0 0
        %2944 = vmatpush1.bf16.msra.mxu0 %v2925
        %2945 = vmatprep.subr.bf16.mxu0 0
        %2946 = vmatpush1.bf16.msra.mxu0 %v2926
        %2947 = vmatprep.subr.bf16.mxu0 0
        %2948 = vmatpush1.bf16.msra.mxu0 %v2927
        %2949 = vmatprep.subr.bf16.mxu0 0
        %2950 = vmatpush1.bf16.msra.mxu0 %v2928
        %2951 = vmatprep.subr.bf16.mxu0 0
        %2952 = vmatpush1.bf16.msra.mxu0 %v2929
        %2953 = vmatprep.subr.bf16.mxu0 0
        %2954 = vmatpush1.bf16.msra.mxu0 %v2930
        %2955 = vmatprep.subr.bf16.mxu0 0
        %2956 = vmatpush1.bf16.msra.mxu0 0
        %2957 = vmatprep.subr.bf16.mxu0 0
        %2958 = vmatpush1.bf16.msra.mxu0 0
        %2959 = vmatprep.subr.bf16.mxu0 0
        %2960 = vmatpush1.bf16.msra.mxu0 0
        %2961 = vmatprep.subr.bf16.mxu0 0
        %2962 = vmatpush1.bf16.msra.mxu0 0
        %2963 = vmatprep.subr.bf16.mxu0 0
        %2964 = vmatpush1.bf16.msra.mxu0 0
        %2965 = vmatprep.subr.bf16.mxu0 0
        %2966 = vmatpush1.bf16.msra.mxu0 0
        %2967 = vmatprep.subr.bf16.mxu0 0
        %2968 = vmatpush1.bf16.msra.mxu0 0
        %2969 = vmatprep.subr.bf16.mxu0 0
        %2970 = vmatpush1.bf16.msra.mxu0 0
        %2971 = vmatprep.mubr.bf16.mxu0 0
        %2972 = vmatmul.mubr.bf16.gmra.mrb[0].mxu0 %v2873
        %v2973 = vpop.f32.mrb[0].mxu0
        %v2974 = vadd.f32 0.0, %v2973
        %v2975 = vpop.f32.mrb[0].mxu0
        %v2976 = vpop.f32.mrb[0].mxu0
        %v2977 = vadd.f32 0.0, %v2976
        %v2978 = vpop.f32.mrb[0].mxu0
        %2979 = vdwg.mxu0
        %v2980 = vadd.f32 %v2865, %v2974
        %v2981 = vadd.f32 %v2868, %v2977
        %v2982 = vld [vmem:[%s8] sm:$0x1]
        %v2984 = vlaneseq
        %v2985 = vshrl.u32 %v2984, 7
        %v2986 = vsub.s32 0, %v2985
        %v2987 = vrot.slane %v2982, %v2986
        %v2989 = vadd.f32 %v2980, %v2987
        %v2990 = vadd.f32 %v2981, %v2987
        %v2991 = vmax.f32 %v2989, 0.0
        %v2992 = vmax.f32 %v2990, 0.0
        %2993 = vst [vmem:[#allocation2 + $0x8] sm:$0xff] %v2991
        %2994 = vst [vmem:[#allocation2 + $0x10] sm:$0xff] %v2992
        %v2995 = vld [vmem:[#allocation2 + $0x8] sm:$0x1]
        %v2996 = vpack.c.bf16 %v2995, %v2995
        %v2997 = vld [vmem:[#allocation11] sm:$0xf]
        %v2998 = vld [vmem:[#allocation11 + $0x4] sm:$0xf]
        %v2999 = vld [vmem:[#allocation11 + $0x8] sm:$0xf]
        %v3000 = vld [vmem:[#allocation11 + $0xc] sm:$0xf]
        %v3001 = vld [vmem:[#allocation11 + $0x10] sm:$0xf]
        %v3002 = vld [vmem:[#allocation11 + $0x14] sm:$0xf]
        %v3003 = vld [vmem:[#allocation11 + $0x18] sm:$0xf]
        %v3004 = vld [vmem:[#allocation11 + $0x1c] sm:$0xf]
        %v3005 = vld [vmem:[#allocation11 + $0x20] sm:$0xf]
        %v3006 = vld [vmem:[#allocation11 + $0x24] sm:$0xf]
        %v3007 = vld [vmem:[#allocation11 + $0x28] sm:$0xf]
        %v3008 = vld [vmem:[#allocation11 + $0x2c] sm:$0xf]
        %v3009 = vld [vmem:[#allocation11 + $0x30] sm:$0xf]
        %v3010 = vld [vmem:[#allocation11 + $0x34] sm:$0xf]
        %v3011 = vld [vmem:[#allocation11 + $0x38] sm:$0xf]
        %v3012 = vld [vmem:[#allocation11 + $0x3c] sm:$0xf]
        %v3013 = vld [vmem:[#allocation2 + $0x9] sm:$0x1]
        %v3014 = vpack.c.bf16 %v3013, %v3013
        %s3015 = scalar_lea.vmem [#allocation11], 64
        %v3016 = vld [vmem:[%s3015] sm:$0xf]
        %v3017 = vld [vmem:[%s3015 + $0x4] sm:$0xf]
        %v3018 = vld [vmem:[%s3015 + $0x8] sm:$0xf]
        %v3019 = vld [vmem:[%s3015 + $0xc] sm:$0xf]
        %v3020 = vld [vmem:[%s3015 + $0x10] sm:$0xf]
        %v3021 = vld [vmem:[%s3015 + $0x14] sm:$0xf]
        %v3022 = vld [vmem:[%s3015 + $0x18] sm:$0xf]
        %v3023 = vld [vmem:[%s3015 + $0x1c] sm:$0xf]
        %v3024 = vld [vmem:[%s3015 + $0x20] sm:$0xf]
        %v3025 = vld [vmem:[%s3015 + $0x24] sm:$0xf]
        %v3026 = vld [vmem:[%s3015 + $0x28] sm:$0xf]
        %v3027 = vld [vmem:[%s3015 + $0x2c] sm:$0xf]
        %v3028 = vld [vmem:[%s3015 + $0x30] sm:$0xf]
        %v3029 = vld [vmem:[%s3015 + $0x34] sm:$0xf]
        %v3030 = vld [vmem:[%s3015 + $0x38] sm:$0xf]
        %v3031 = vld [vmem:[%s3015 + $0x3c] sm:$0xf]
        %v3048 = vunpack.c.l.b16 %v3016
        %v3049 = vunpack.c.l.b16 %v3017
        %v3050 = vunpack.c.l.b16 %v3018
        %v3051 = vunpack.c.l.b16 %v3019
        %v3052 = vunpack.c.l.b16 %v3020
        %v3053 = vunpack.c.l.b16 %v3021
        %v3054 = vunpack.c.l.b16 %v3022
        %v3055 = vunpack.c.l.b16 %v3023
        %v3056 = vunpack.c.l.b16 %v3024
        %v3057 = vunpack.c.l.b16 %v3025
        %v3058 = vunpack.c.l.b16 %v3026
        %v3059 = vunpack.c.l.b16 %v3027
        %v3060 = vunpack.c.l.b16 %v3028
        %v3061 = vunpack.c.l.b16 %v3029
        %v3062 = vunpack.c.l.b16 %v3030
        %v3063 = vunpack.c.l.b16 %v3031
        %v3064 = vpack.c.b16 %v3049, %v3048
        %v3065 = vpack.c.b16 %v3051, %v3050
        %v3066 = vpack.c.b16 %v3053, %v3052
        %v3067 = vpack.c.b16 %v3055, %v3054
        %v3068 = vpack.c.b16 %v3057, %v3056
        %v3069 = vpack.c.b16 %v3059, %v3058
        %v3070 = vpack.c.b16 %v3061, %v3060
        %v3071 = vpack.c.b16 %v3063, %v3062
        %3080 = vmatprep.subr.bf16.mxu0 0
        %3081 = vmatpush1.bf16.msra.mxu0 %v3064
        %3082 = vmatprep.subr.bf16.mxu0 0
        %3083 = vmatpush1.bf16.msra.mxu0 %v3065
        %3084 = vmatprep.subr.bf16.mxu0 0
        %3085 = vmatpush1.bf16.msra.mxu0 %v3066
        %3086 = vmatprep.subr.bf16.mxu0 0
        %3087 = vmatpush1.bf16.msra.mxu0 %v3067
        %3088 = vmatprep.subr.bf16.mxu0 0
        %3089 = vmatpush1.bf16.msra.mxu0 %v3068
        %3090 = vmatprep.subr.bf16.mxu0 0
        %3091 = vmatpush1.bf16.msra.mxu0 %v3069
        %3092 = vmatprep.subr.bf16.mxu0 0
        %3093 = vmatpush1.bf16.msra.mxu0 %v3070
        %3094 = vmatprep.subr.bf16.mxu0 0
        %3095 = vmatpush1.bf16.msra.mxu0 %v3071
        %3096 = vmatprep.subr.bf16.mxu0 0
        %3097 = vmatpush1.bf16.msra.mxu0 0
        %3098 = vmatprep.subr.bf16.mxu0 0
        %3099 = vmatpush1.bf16.msra.mxu0 0
        %3100 = vmatprep.subr.bf16.mxu0 0
        %3101 = vmatpush1.bf16.msra.mxu0 0
        %3102 = vmatprep.subr.bf16.mxu0 0
        %3103 = vmatpush1.bf16.msra.mxu0 0
        %3104 = vmatprep.subr.bf16.mxu0 0
        %3105 = vmatpush1.bf16.msra.mxu0 0
        %3106 = vmatprep.subr.bf16.mxu0 0
        %3107 = vmatpush1.bf16.msra.mxu0 0
        %3108 = vmatprep.subr.bf16.mxu0 0
        %3109 = vmatpush1.bf16.msra.mxu0 0
        %3110 = vmatprep.subr.bf16.mxu0 0
        %3111 = vmatpush1.bf16.msra.mxu0 0
        %3112 = vmatprep.mubr.bf16.mxu0 0
        %3113 = vmatmul.mubr.bf16.gmra.mrb[0].mxu0 %v3014
        %v3114 = vpop.f32.mrb[0].mxu0
        %v3115 = vadd.f32 0.0, %v3114
        %v3116 = vpop.f32.mrb[0].mxu0
        %v3117 = vpop.f32.mrb[0].mxu0
        %v3118 = vpop.f32.mrb[0].mxu0
        %3119 = vdwg.mxu0
        %v3136 = vunpack.c.l.b16 %v2997
        %v3137 = vunpack.c.l.b16 %v2998
        %v3138 = vunpack.c.l.b16 %v2999
        %v3139 = vunpack.c.l.b16 %v3000
        %v3140 = vunpack.c.l.b16 %v3001
        %v3141 = vunpack.c.l.b16 %v3002
        %v3142 = vunpack.c.l.b16 %v3003
        %v3143 = vunpack.c.l.b16 %v3004
        %v3144 = vunpack.c.l.b16 %v3005
        %v3145 = vunpack.c.l.b16 %v3006
        %v3146 = vunpack.c.l.b16 %v3007
        %v3147 = vunpack.c.l.b16 %v3008
        %v3148 = vunpack.c.l.b16 %v3009
        %v3149 = vunpack.c.l.b16 %v3010
        %v3150 = vunpack.c.l.b16 %v3011
        %v3151 = vunpack.c.l.b16 %v3012
        %v3152 = vpack.c.b16 %v3137, %v3136
        %v3153 = vpack.c.b16 %v3139, %v3138
        %v3154 = vpack.c.b16 %v3141, %v3140
        %v3155 = vpack.c.b16 %v3143, %v3142
        %v3156 = vpack.c.b16 %v3145, %v3144
        %v3157 = vpack.c.b16 %v3147, %v3146
        %v3158 = vpack.c.b16 %v3149, %v3148
        %v3159 = vpack.c.b16 %v3151, %v3150
        %3168 = vmatprep.subr.bf16.mxu0 0
        %3169 = vmatpush1.bf16.msra.mxu0 %v3152
        %3170 = vmatprep.subr.bf16.mxu0 0
        %3171 = vmatpush1.bf16.msra.mxu0 %v3153
        %3172 = vmatprep.subr.bf16.mxu0 0
        %3173 = vmatpush1.bf16.msra.mxu0 %v3154
        %3174 = vmatprep.subr.bf16.mxu0 0
        %3175 = vmatpush1.bf16.msra.mxu0 %v3155
        %3176 = vmatprep.subr.bf16.mxu0 0
        %3177 = vmatpush1.bf16.msra.mxu0 %v3156
        %3178 = vmatprep.subr.bf16.mxu0 0
        %3179 = vmatpush1.bf16.msra.mxu0 %v3157
        %3180 = vmatprep.subr.bf16.mxu0 0
        %3181 = vmatpush1.bf16.msra.mxu0 %v3158
        %3182 = vmatprep.subr.bf16.mxu0 0
        %3183 = vmatpush1.bf16.msra.mxu0 %v3159
        %3184 = vmatprep.subr.bf16.mxu0 0
        %3185 = vmatpush1.bf16.msra.mxu0 0
        %3186 = vmatprep.subr.bf16.mxu0 0
        %3187 = vmatpush1.bf16.msra.mxu0 0
        %3188 = vmatprep.subr.bf16.mxu0 0
        %3189 = vmatpush1.bf16.msra.mxu0 0
        %3190 = vmatprep.subr.bf16.mxu0 0
        %3191 = vmatpush1.bf16.msra.mxu0 0
        %3192 = vmatprep.subr.bf16.mxu0 0
        %3193 = vmatpush1.bf16.msra.mxu0 0
        %3194 = vmatprep.subr.bf16.mxu0 0
        %3195 = vmatpush1.bf16.msra.mxu0 0
        %3196 = vmatprep.subr.bf16.mxu0 0
        %3197 = vmatpush1.bf16.msra.mxu0 0
        %3198 = vmatprep.subr.bf16.mxu0 0
        %3199 = vmatpush1.bf16.msra.mxu0 0
        %3200 = vmatprep.mubr.bf16.mxu0 0
        %3201 = vmatmul.mubr.bf16.gmra.mrb[0].mxu0 %v2996
        %v3202 = vpop.f32.mrb[0].mxu0
        %v3203 = vadd.f32 %v3115, %v3202
        %v3204 = vpop.f32.mrb[0].mxu0
        %v3205 = vpop.f32.mrb[0].mxu0
        %v3206 = vpop.f32.mrb[0].mxu0
        %3207 = vdwg.mxu0
        %v3208 = vld [vmem:[#allocation2 + $0xa] sm:$0x1]
        %v3209 = vpack.c.bf16 %v3208, %v3208
        %s3210 = scalar_lea.vmem [#allocation11], 128
        %v3211 = vld [vmem:[%s3210] sm:$0xf]
        %v3212 = vld [vmem:[%s3210 + $0x4] sm:$0xf]
        %v3213 = vld [vmem:[%s3210 + $0x8] sm:$0xf]
        %v3214 = vld [vmem:[%s3210 + $0xc] sm:$0xf]
        %v3215 = vld [vmem:[%s3210 + $0x10] sm:$0xf]
        %v3216 = vld [vmem:[%s3210 + $0x14] sm:$0xf]
        %v3217 = vld [vmem:[%s3210 + $0x18] sm:$0xf]
        %v3218 = vld [vmem:[%s3210 + $0x1c] sm:$0xf]
        %v3219 = vld [vmem:[%s3210 + $0x20] sm:$0xf]
        %v3220 = vld [vmem:[%s3210 + $0x24] sm:$0xf]
        %v3221 = vld [vmem:[%s3210 + $0x28] sm:$0xf]
        %v3222 = vld [vmem:[%s3210 + $0x2c] sm:$0xf]
        %v3223 = vld [vmem:[%s3210 + $0x30] sm:$0xf]
        %v3224 = vld [vmem:[%s3210 + $0x34] sm:$0xf]
        %v3225 = vld [vmem:[%s3210 + $0x38] sm:$0xf]
        %v3226 = vld [vmem:[%s3210 + $0x3c] sm:$0xf]
        %v3243 = vunpack.c.l.b16 %v3211
        %v3244 = vunpack.c.l.b16 %v3212
        %v3245 = vunpack.c.l.b16 %v3213
        %v3246 = vunpack.c.l.b16 %v3214
        %v3247 = vunpack.c.l.b16 %v3215
        %v3248 = vunpack.c.l.b16 %v3216
        %v3249 = vunpack.c.l.b16 %v3217
        %v3250 = vunpack.c.l.b16 %v3218
        %v3251 = vunpack.c.l.b16 %v3219
        %v3252 = vunpack.c.l.b16 %v3220
        %v3253 = vunpack.c.l.b16 %v3221
        %v3254 = vunpack.c.l.b16 %v3222
        %v3255 = vunpack.c.l.b16 %v3223
        %v3256 = vunpack.c.l.b16 %v3224
        %v3257 = vunpack.c.l.b16 %v3225
        %v3258 = vunpack.c.l.b16 %v3226
        %v3259 = vpack.c.b16 %v3244, %v3243
        %v3260 = vpack.c.b16 %v3246, %v3245
        %v3261 = vpack.c.b16 %v3248, %v3247
        %v3262 = vpack.c.b16 %v3250, %v3249
        %v3263 = vpack.c.b16 %v3252, %v3251
        %v3264 = vpack.c.b16 %v3254, %v3253
        %v3265 = vpack.c.b16 %v3256, %v3255
        %v3266 = vpack.c.b16 %v3258, %v3257
        %3275 = vmatprep.subr.bf16.mxu0 0
        %3276 = vmatpush1.bf16.msra.mxu0 %v3259
        %3277 = vmatprep.subr.bf16.mxu0 0
        %3278 = vmatpush1.bf16.msra.mxu0 %v3260
        %3279 = vmatprep.subr.bf16.mxu0 0
        %3280 = vmatpush1.bf16.msra.mxu0 %v3261
        %3281 = vmatprep.subr.bf16.mxu0 0
        %3282 = vmatpush1.bf16.msra.mxu0 %v3262
        %3283 = vmatprep.subr.bf16.mxu0 0
        %3284 = vmatpush1.bf16.msra.mxu0 %v3263
        %3285 = vmatprep.subr.bf16.mxu0 0
        %3286 = vmatpush1.bf16.msra.mxu0 %v3264
        %3287 = vmatprep.subr.bf16.mxu0 0
        %3288 = vmatpush1.bf16.msra.mxu0 %v3265
        %3289 = vmatprep.subr.bf16.mxu0 0
        %3290 = vmatpush1.bf16.msra.mxu0 %v3266
        %3291 = vmatprep.subr.bf16.mxu0 0
        %3292 = vmatpush1.bf16.msra.mxu0 0
        %3293 = vmatprep.subr.bf16.mxu0 0
        %3294 = vmatpush1.bf16.msra.mxu0 0
        %3295 = vmatprep.subr.bf16.mxu0 0
        %3296 = vmatpush1.bf16.msra.mxu0 0
        %3297 = vmatprep.subr.bf16.mxu0 0
        %3298 = vmatpush1.bf16.msra.mxu0 0
        %3299 = vmatprep.subr.bf16.mxu0 0
        %3300 = vmatpush1.bf16.msra.mxu0 0
        %3301 = vmatprep.subr.bf16.mxu0 0
        %3302 = vmatpush1.bf16.msra.mxu0 0
        %3303 = vmatprep.subr.bf16.mxu0 0
        %3304 = vmatpush1.bf16.msra.mxu0 0
        %3305 = vmatprep.subr.bf16.mxu0 0
        %3306 = vmatpush1.bf16.msra.mxu0 0
        %3307 = vmatprep.mubr.bf16.mxu0 0
        %3308 = vmatmul.mubr.bf16.gmra.mrb[0].mxu0 %v3209
        %v3309 = vpop.f32.mrb[0].mxu0
        %v3310 = vadd.f32 0.0, %v3309
        %v3311 = vpop.f32.mrb[0].mxu0
        %v3312 = vpop.f32.mrb[0].mxu0
        %v3313 = vpop.f32.mrb[0].mxu0
        %3314 = vdwg.mxu0
        %v3315 = vadd.f32 %v3203, %v3310
        %v3316 = vld [vmem:[#allocation2 + $0xb] sm:$0x1]
        %v3317 = vpack.c.bf16 %v3316, %v3316
        %s3318 = scalar_lea.vmem [#allocation11], 192
        %v3319 = vld [vmem:[%s3318] sm:$0xf]
        %v3320 = vld [vmem:[%s3318 + $0x4] sm:$0xf]
        %v3321 = vld [vmem:[%s3318 + $0x8] sm:$0xf]
        %v3322 = vld [vmem:[%s3318 + $0xc] sm:$0xf]
        %v3323 = vld [vmem:[%s3318 + $0x10] sm:$0xf]
        %v3324 = vld [vmem:[%s3318 + $0x14] sm:$0xf]
        %v3325 = vld [vmem:[%s3318 + $0x18] sm:$0xf]
        %v3326 = vld [vmem:[%s3318 + $0x1c] sm:$0xf]
        %v3327 = vld [vmem:[%s3318 + $0x20] sm:$0xf]
        %v3328 = vld [vmem:[%s3318 + $0x24] sm:$0xf]
        %v3329 = vld [vmem:[%s3318 + $0x28] sm:$0xf]
        %v3330 = vld [vmem:[%s3318 + $0x2c] sm:$0xf]
        %v3331 = vld [vmem:[%s3318 + $0x30] sm:$0xf]
        %v3332 = vld [vmem:[%s3318 + $0x34] sm:$0xf]
        %v3333 = vld [vmem:[%s3318 + $0x38] sm:$0xf]
        %v3334 = vld [vmem:[%s3318 + $0x3c] sm:$0xf]
        %v3351 = vunpack.c.l.b16 %v3319
        %v3352 = vunpack.c.l.b16 %v3320
        %v3353 = vunpack.c.l.b16 %v3321
        %v3354 = vunpack.c.l.b16 %v3322
        %v3355 = vunpack.c.l.b16 %v3323
        %v3356 = vunpack.c.l.b16 %v3324
        %v3357 = vunpack.c.l.b16 %v3325
        %v3358 = vunpack.c.l.b16 %v3326
        %v3359 = vunpack.c.l.b16 %v3327
        %v3360 = vunpack.c.l.b16 %v3328
        %v3361 = vunpack.c.l.b16 %v3329
        %v3362 = vunpack.c.l.b16 %v3330
        %v3363 = vunpack.c.l.b16 %v3331
        %v3364 = vunpack.c.l.b16 %v3332
        %v3365 = vunpack.c.l.b16 %v3333
        %v3366 = vunpack.c.l.b16 %v3334
        %v3367 = vpack.c.b16 %v3352, %v3351
        %v3368 = vpack.c.b16 %v3354, %v3353
        %v3369 = vpack.c.b16 %v3356, %v3355
        %v3370 = vpack.c.b16 %v3358, %v3357
        %v3371 = vpack.c.b16 %v3360, %v3359
        %v3372 = vpack.c.b16 %v3362, %v3361
        %v3373 = vpack.c.b16 %v3364, %v3363
        %v3374 = vpack.c.b16 %v3366, %v3365
        %3383 = vmatprep.subr.bf16.mxu0 0
        %3384 = vmatpush1.bf16.msra.mxu0 %v3367
        %3385 = vmatprep.subr.bf16.mxu0 0
        %3386 = vmatpush1.bf16.msra.mxu0 %v3368
        %3387 = vmatprep.subr.bf16.mxu0 0
        %3388 = vmatpush1.bf16.msra.mxu0 %v3369
        %3389 = vmatprep.subr.bf16.mxu0 0
        %3390 = vmatpush1.bf16.msra.mxu0 %v3370
        %3391 = vmatprep.subr.bf16.mxu0 0
        %3392 = vmatpush1.bf16.msra.mxu0 %v3371
        %3393 = vmatprep.subr.bf16.mxu0 0
        %3394 = vmatpush1.bf16.msra.mxu0 %v3372
        %3395 = vmatprep.subr.bf16.mxu0 0
        %3396 = vmatpush1.bf16.msra.mxu0 %v3373
        %3397 = vmatprep.subr.bf16.mxu0 0
        %3398 = vmatpush1.bf16.msra.mxu0 %v3374
        %3399 = vmatprep.subr.bf16.mxu0 0
        %3400 = vmatpush1.bf16.msra.mxu0 0
        %3401 = vmatprep.subr.bf16.mxu0 0
        %3402 = vmatpush1.bf16.msra.mxu0 0
        %3403 = vmatprep.subr.bf16.mxu0 0
        %3404 = vmatpush1.bf16.msra.mxu0 0
        %3405 = vmatprep.subr.bf16.mxu0 0
        %3406 = vmatpush1.bf16.msra.mxu0 0
        %3407 = vmatprep.subr.bf16.mxu0 0
        %3408 = vmatpush1.bf16.msra.mxu0 0
        %3409 = vmatprep.subr.bf16.mxu0 0
        %3410 = vmatpush1.bf16.msra.mxu0 0
        %3411 = vmatprep.subr.bf16.mxu0 0
        %3412 = vmatpush1.bf16.msra.mxu0 0
        %3413 = vmatprep.subr.bf16.mxu0 0
        %3414 = vmatpush1.bf16.msra.mxu0 0
        %3415 = vmatprep.mubr.bf16.mxu0 0
        %3416 = vmatmul.mubr.bf16.gmra.mrb[0].mxu0 %v3317
        %v3417 = vpop.f32.mrb[0].mxu0
        %v3418 = vadd.f32 0.0, %v3417
        %v3419 = vpop.f32.mrb[0].mxu0
        %v3420 = vpop.f32.mrb[0].mxu0
        %v3421 = vpop.f32.mrb[0].mxu0
        %3422 = vdwg.mxu0
        %v3423 = vadd.f32 %v3315, %v3418
        %v3424 = vld [vmem:[#allocation2 + $0xc] sm:$0x1]
        %v3425 = vpack.c.bf16 %v3424, %v3424
        %s3426 = scalar_lea.vmem [#allocation11], 256
        %v3427 = vld [vmem:[%s3426] sm:$0xf]
        %v3428 = vld [vmem:[%s3426 + $0x4] sm:$0xf]
        %v3429 = vld [vmem:[%s3426 + $0x8] sm:$0xf]
        %v3430 = vld [vmem:[%s3426 + $0xc] sm:$0xf]
        %v3431 = vld [vmem:[%s3426 + $0x10] sm:$0xf]
        %v3432 = vld [vmem:[%s3426 + $0x14] sm:$0xf]
        %v3433 = vld [vmem:[%s3426 + $0x18] sm:$0xf]
        %v3434 = vld [vmem:[%s3426 + $0x1c] sm:$0xf]
        %v3435 = vld [vmem:[%s3426 + $0x20] sm:$0xf]
        %v3436 = vld [vmem:[%s3426 + $0x24] sm:$0xf]
        %v3437 = vld [vmem:[%s3426 + $0x28] sm:$0xf]
        %v3438 = vld [vmem:[%s3426 + $0x2c] sm:$0xf]
        %v3439 = vld [vmem:[%s3426 + $0x30] sm:$0xf]
        %v3440 = vld [vmem:[%s3426 + $0x34] sm:$0xf]
        %v3441 = vld [vmem:[%s3426 + $0x38] sm:$0xf]
        %v3442 = vld [vmem:[%s3426 + $0x3c] sm:$0xf]
        %v3459 = vunpack.c.l.b16 %v3427
        %v3460 = vunpack.c.l.b16 %v3428
        %v3461 = vunpack.c.l.b16 %v3429
        %v3462 = vunpack.c.l.b16 %v3430
        %v3463 = vunpack.c.l.b16 %v3431
        %v3464 = vunpack.c.l.b16 %v3432
        %v3465 = vunpack.c.l.b16 %v3433
        %v3466 = vunpack.c.l.b16 %v3434
        %v3467 = vunpack.c.l.b16 %v3435
        %v3468 = vunpack.c.l.b16 %v3436
        %v3469 = vunpack.c.l.b16 %v3437
        %v3470 = vunpack.c.l.b16 %v3438
        %v3471 = vunpack.c.l.b16 %v3439
        %v3472 = vunpack.c.l.b16 %v3440
        %v3473 = vunpack.c.l.b16 %v3441
        %v3474 = vunpack.c.l.b16 %v3442
        %v3475 = vpack.c.b16 %v3460, %v3459
        %v3476 = vpack.c.b16 %v3462, %v3461
        %v3477 = vpack.c.b16 %v3464, %v3463
        %v3478 = vpack.c.b16 %v3466, %v3465
        %v3479 = vpack.c.b16 %v3468, %v3467
        %v3480 = vpack.c.b16 %v3470, %v3469
        %v3481 = vpack.c.b16 %v3472, %v3471
        %v3482 = vpack.c.b16 %v3474, %v3473
        %3491 = vmatprep.subr.bf16.mxu0 0
        %3492 = vmatpush1.bf16.msra.mxu0 %v3475
        %3493 = vmatprep.subr.bf16.mxu0 0
        %3494 = vmatpush1.bf16.msra.mxu0 %v3476
        %3495 = vmatprep.subr.bf16.mxu0 0
        %3496 = vmatpush1.bf16.msra.mxu0 %v3477
        %3497 = vmatprep.subr.bf16.mxu0 0
        %3498 = vmatpush1.bf16.msra.mxu0 %v3478
        %3499 = vmatprep.subr.bf16.mxu0 0
        %3500 = vmatpush1.bf16.msra.mxu0 %v3479
        %3501 = vmatprep.subr.bf16.mxu0 0
        %3502 = vmatpush1.bf16.msra.mxu0 %v3480
        %3503 = vmatprep.subr.bf16.mxu0 0
        %3504 = vmatpush1.bf16.msra.mxu0 %v3481
        %3505 = vmatprep.subr.bf16.mxu0 0
        %3506 = vmatpush1.bf16.msra.mxu0 %v3482
        %3507 = vmatprep.subr.bf16.mxu0 0
        %3508 = vmatpush1.bf16.msra.mxu0 0
        %3509 = vmatprep.subr.bf16.mxu0 0
        %3510 = vmatpush1.bf16.msra.mxu0 0
        %3511 = vmatprep.subr.bf16.mxu0 0
        %3512 = vmatpush1.bf16.msra.mxu0 0
        %3513 = vmatprep.subr.bf16.mxu0 0
        %3514 = vmatpush1.bf16.msra.mxu0 0
        %3515 = vmatprep.subr.bf16.mxu0 0
        %3516 = vmatpush1.bf16.msra.mxu0 0
        %3517 = vmatprep.subr.bf16.mxu0 0
        %3518 = vmatpush1.bf16.msra.mxu0 0
        %3519 = vmatprep.subr.bf16.mxu0 0
        %3520 = vmatpush1.bf16.msra.mxu0 0
        %3521 = vmatprep.subr.bf16.mxu0 0
        %3522 = vmatpush1.bf16.msra.mxu0 0
        %3523 = vmatprep.mubr.bf16.mxu0 0
        %3524 = vmatmul.mubr.bf16.gmra.mrb[0].mxu0 %v3425
        %v3525 = vpop.f32.mrb[0].mxu0
        %v3526 = vadd.f32 0.0, %v3525
        %v3527 = vpop.f32.mrb[0].mxu0
        %v3528 = vpop.f32.mrb[0].mxu0
        %v3529 = vpop.f32.mrb[0].mxu0
        %3530 = vdwg.mxu0
        %v3531 = vadd.f32 %v3423, %v3526
        %v3532 = vld [vmem:[#allocation2 + $0xd] sm:$0x1]
        %v3533 = vpack.c.bf16 %v3532, %v3532
        %s3534 = scalar_lea.vmem [#allocation11], 320
        %v3535 = vld [vmem:[%s3534] sm:$0xf]
        %v3536 = vld [vmem:[%s3534 + $0x4] sm:$0xf]
        %v3537 = vld [vmem:[%s3534 + $0x8] sm:$0xf]
        %v3538 = vld [vmem:[%s3534 + $0xc] sm:$0xf]
        %v3539 = vld [vmem:[%s3534 + $0x10] sm:$0xf]
        %v3540 = vld [vmem:[%s3534 + $0x14] sm:$0xf]
        %v3541 = vld [vmem:[%s3534 + $0x18] sm:$0xf]
        %v3542 = vld [vmem:[%s3534 + $0x1c] sm:$0xf]
        %v3543 = vld [vmem:[%s3534 + $0x20] sm:$0xf]
        %v3544 = vld [vmem:[%s3534 + $0x24] sm:$0xf]
        %v3545 = vld [vmem:[%s3534 + $0x28] sm:$0xf]
        %v3546 = vld [vmem:[%s3534 + $0x2c] sm:$0xf]
        %v3547 = vld [vmem:[%s3534 + $0x30] sm:$0xf]
        %v3548 = vld [vmem:[%s3534 + $0x34] sm:$0xf]
        %v3549 = vld [vmem:[%s3534 + $0x38] sm:$0xf]
        %v3550 = vld [vmem:[%s3534 + $0x3c] sm:$0xf]
        %v3567 = vunpack.c.l.b16 %v3535
        %v3568 = vunpack.c.l.b16 %v3536
        %v3569 = vunpack.c.l.b16 %v3537
        %v3570 = vunpack.c.l.b16 %v3538
        %v3571 = vunpack.c.l.b16 %v3539
        %v3572 = vunpack.c.l.b16 %v3540
        %v3573 = vunpack.c.l.b16 %v3541
        %v3574 = vunpack.c.l.b16 %v3542
        %v3575 = vunpack.c.l.b16 %v3543
        %v3576 = vunpack.c.l.b16 %v3544
        %v3577 = vunpack.c.l.b16 %v3545
        %v3578 = vunpack.c.l.b16 %v3546
        %v3579 = vunpack.c.l.b16 %v3547
        %v3580 = vunpack.c.l.b16 %v3548
        %v3581 = vunpack.c.l.b16 %v3549
        %v3582 = vunpack.c.l.b16 %v3550
        %v3583 = vpack.c.b16 %v3568, %v3567
        %v3584 = vpack.c.b16 %v3570, %v3569
        %v3585 = vpack.c.b16 %v3572, %v3571
        %v3586 = vpack.c.b16 %v3574, %v3573
        %v3587 = vpack.c.b16 %v3576, %v3575
        %v3588 = vpack.c.b16 %v3578, %v3577
        %v3589 = vpack.c.b16 %v3580, %v3579
        %v3590 = vpack.c.b16 %v3582, %v3581
        %3599 = vmatprep.subr.bf16.mxu0 0
        %3600 = vmatpush1.bf16.msra.mxu0 %v3583
        %3601 = vmatprep.subr.bf16.mxu0 0
        %3602 = vmatpush1.bf16.msra.mxu0 %v3584
        %3603 = vmatprep.subr.bf16.mxu0 0
        %3604 = vmatpush1.bf16.msra.mxu0 %v3585
        %3605 = vmatprep.subr.bf16.mxu0 0
        %3606 = vmatpush1.bf16.msra.mxu0 %v3586
        %3607 = vmatprep.subr.bf16.mxu0 0
        %3608 = vmatpush1.bf16.msra.mxu0 %v3587
        %3609 = vmatprep.subr.bf16.mxu0 0
        %3610 = vmatpush1.bf16.msra.mxu0 %v3588
        %3611 = vmatprep.subr.bf16.mxu0 0
        %3612 = vmatpush1.bf16.msra.mxu0 %v3589
        %3613 = vmatprep.subr.bf16.mxu0 0
        %3614 = vmatpush1.bf16.msra.mxu0 %v3590
        %3615 = vmatprep.subr.bf16.mxu0 0
        %3616 = vmatpush1.bf16.msra.mxu0 0
        %3617 = vmatprep.subr.bf16.mxu0 0
        %3618 = vmatpush1.bf16.msra.mxu0 0
        %3619 = vmatprep.subr.bf16.mxu0 0
        %3620 = vmatpush1.bf16.msra.mxu0 0
        %3621 = vmatprep.subr.bf16.mxu0 0
        %3622 = vmatpush1.bf16.msra.mxu0 0
        %3623 = vmatprep.subr.bf16.mxu0 0
        %3624 = vmatpush1.bf16.msra.mxu0 0
        %3625 = vmatprep.subr.bf16.mxu0 0
        %3626 = vmatpush1.bf16.msra.mxu0 0
        %3627 = vmatprep.subr.bf16.mxu0 0
        %3628 = vmatpush1.bf16.msra.mxu0 0
        %3629 = vmatprep.subr.bf16.mxu0 0
        %3630 = vmatpush1.bf16.msra.mxu0 0
        %3631 = vmatprep.mubr.bf16.mxu0 0
        %3632 = vmatmul.mubr.bf16.gmra.mrb[0].mxu0 %v3533
        %v3633 = vpop.f32.mrb[0].mxu0
        %v3634 = vadd.f32 0.0, %v3633
        %v3635 = vpop.f32.mrb[0].mxu0
        %v3636 = vpop.f32.mrb[0].mxu0
        %v3637 = vpop.f32.mrb[0].mxu0
        %3638 = vdwg.mxu0
        %v3639 = vadd.f32 %v3531, %v3634
        %v3640 = vld [vmem:[#allocation2 + $0xe] sm:$0x1]
        %v3641 = vpack.c.bf16 %v3640, %v3640
        %s3642 = scalar_lea.vmem [#allocation11], 384
        %v3643 = vld [vmem:[%s3642] sm:$0xf]
        %v3644 = vld [vmem:[%s3642 + $0x4] sm:$0xf]
        %v3645 = vld [vmem:[%s3642 + $0x8] sm:$0xf]
        %v3646 = vld [vmem:[%s3642 + $0xc] sm:$0xf]
        %v3647 = vld [vmem:[%s3642 + $0x10] sm:$0xf]
        %v3648 = vld [vmem:[%s3642 + $0x14] sm:$0xf]
        %v3649 = vld [vmem:[%s3642 + $0x18] sm:$0xf]
        %v3650 = vld [vmem:[%s3642 + $0x1c] sm:$0xf]
        %v3651 = vld [vmem:[%s3642 + $0x20] sm:$0xf]
        %v3652 = vld [vmem:[%s3642 + $0x24] sm:$0xf]
        %v3653 = vld [vmem:[%s3642 + $0x28] sm:$0xf]
        %v3654 = vld [vmem:[%s3642 + $0x2c] sm:$0xf]
        %v3655 = vld [vmem:[%s3642 + $0x30] sm:$0xf]
        %v3656 = vld [vmem:[%s3642 + $0x34] sm:$0xf]
        %v3657 = vld [vmem:[%s3642 + $0x38] sm:$0xf]
        %v3658 = vld [vmem:[%s3642 + $0x3c] sm:$0xf]
        %v3675 = vunpack.c.l.b16 %v3643
        %v3676 = vunpack.c.l.b16 %v3644
        %v3677 = vunpack.c.l.b16 %v3645
        %v3678 = vunpack.c.l.b16 %v3646
        %v3679 = vunpack.c.l.b16 %v3647
        %v3680 = vunpack.c.l.b16 %v3648
        %v3681 = vunpack.c.l.b16 %v3649
        %v3682 = vunpack.c.l.b16 %v3650
        %v3683 = vunpack.c.l.b16 %v3651
        %v3684 = vunpack.c.l.b16 %v3652
        %v3685 = vunpack.c.l.b16 %v3653
        %v3686 = vunpack.c.l.b16 %v3654
        %v3687 = vunpack.c.l.b16 %v3655
        %v3688 = vunpack.c.l.b16 %v3656
        %v3689 = vunpack.c.l.b16 %v3657
        %v3690 = vunpack.c.l.b16 %v3658
        %v3691 = vpack.c.b16 %v3676, %v3675
        %v3692 = vpack.c.b16 %v3678, %v3677
        %v3693 = vpack.c.b16 %v3680, %v3679
        %v3694 = vpack.c.b16 %v3682, %v3681
        %v3695 = vpack.c.b16 %v3684, %v3683
        %v3696 = vpack.c.b16 %v3686, %v3685
        %v3697 = vpack.c.b16 %v3688, %v3687
        %v3698 = vpack.c.b16 %v3690, %v3689
        %3707 = vmatprep.subr.bf16.mxu0 0
        %3708 = vmatpush1.bf16.msra.mxu0 %v3691
        %3709 = vmatprep.subr.bf16.mxu0 0
        %3710 = vmatpush1.bf16.msra.mxu0 %v3692
        %3711 = vmatprep.subr.bf16.mxu0 0
        %3712 = vmatpush1.bf16.msra.mxu0 %v3693
        %3713 = vmatprep.subr.bf16.mxu0 0
        %3714 = vmatpush1.bf16.msra.mxu0 %v3694
        %3715 = vmatprep.subr.bf16.mxu0 0
        %3716 = vmatpush1.bf16.msra.mxu0 %v3695
        %3717 = vmatprep.subr.bf16.mxu0 0
        %3718 = vmatpush1.bf16.msra.mxu0 %v3696
        %3719 = vmatprep.subr.bf16.mxu0 0
        %3720 = vmatpush1.bf16.msra.mxu0 %v3697
        %3721 = vmatprep.subr.bf16.mxu0 0
        %3722 = vmatpush1.bf16.msra.mxu0 %v3698
        %3723 = vmatprep.subr.bf16.mxu0 0
        %3724 = vmatpush1.bf16.msra.mxu0 0
        %3725 = vmatprep.subr.bf16.mxu0 0
        %3726 = vmatpush1.bf16.msra.mxu0 0
        %3727 = vmatprep.subr.bf16.mxu0 0
        %3728 = vmatpush1.bf16.msra.mxu0 0
        %3729 = vmatprep.subr.bf16.mxu0 0
        %3730 = vmatpush1.bf16.msra.mxu0 0
        %3731 = vmatprep.subr.bf16.mxu0 0
        %3732 = vmatpush1.bf16.msra.mxu0 0
        %3733 = vmatprep.subr.bf16.mxu0 0
        %3734 = vmatpush1.bf16.msra.mxu0 0
        %3735 = vmatprep.subr.bf16.mxu0 0
        %3736 = vmatpush1.bf16.msra.mxu0 0
        %3737 = vmatprep.subr.bf16.mxu0 0
        %3738 = vmatpush1.bf16.msra.mxu0 0
        %3739 = vmatprep.mubr.bf16.mxu0 0
        %3740 = vmatmul.mubr.bf16.gmra.mrb[0].mxu0 %v3641
        %v3741 = vpop.f32.mrb[0].mxu0
        %v3742 = vadd.f32 0.0, %v3741
        %v3743 = vpop.f32.mrb[0].mxu0
        %v3744 = vpop.f32.mrb[0].mxu0
        %v3745 = vpop.f32.mrb[0].mxu0
        %3746 = vdwg.mxu0
        %v3747 = vadd.f32 %v3639, %v3742
        %v3748 = vld [vmem:[#allocation2 + $0xf] sm:$0x1]
        %v3749 = vpack.c.bf16 %v3748, %v3748
        %s3750 = scalar_lea.vmem [#allocation11], 448
        %v3751 = vld [vmem:[%s3750] sm:$0xf]
        %v3752 = vld [vmem:[%s3750 + $0x4] sm:$0xf]
        %v3753 = vld [vmem:[%s3750 + $0x8] sm:$0xf]
        %v3754 = vld [vmem:[%s3750 + $0xc] sm:$0xf]
        %v3755 = vld [vmem:[%s3750 + $0x10] sm:$0xf]
        %v3756 = vld [vmem:[%s3750 + $0x14] sm:$0xf]
        %v3757 = vld [vmem:[%s3750 + $0x18] sm:$0xf]
        %v3758 = vld [vmem:[%s3750 + $0x1c] sm:$0xf]
        %v3759 = vld [vmem:[%s3750 + $0x20] sm:$0xf]
        %v3760 = vld [vmem:[%s3750 + $0x24] sm:$0xf]
        %v3761 = vld [vmem:[%s3750 + $0x28] sm:$0xf]
        %v3762 = vld [vmem:[%s3750 + $0x2c] sm:$0xf]
        %v3763 = vld [vmem:[%s3750 + $0x30] sm:$0xf]
        %v3764 = vld [vmem:[%s3750 + $0x34] sm:$0xf]
        %v3765 = vld [vmem:[%s3750 + $0x38] sm:$0xf]
        %v3766 = vld [vmem:[%s3750 + $0x3c] sm:$0xf]
        %v3783 = vunpack.c.l.b16 %v3751
        %v3784 = vunpack.c.l.b16 %v3752
        %v3785 = vunpack.c.l.b16 %v3753
        %v3786 = vunpack.c.l.b16 %v3754
        %v3787 = vunpack.c.l.b16 %v3755
        %v3788 = vunpack.c.l.b16 %v3756
        %v3789 = vunpack.c.l.b16 %v3757
        %v3790 = vunpack.c.l.b16 %v3758
        %v3791 = vunpack.c.l.b16 %v3759
        %v3792 = vunpack.c.l.b16 %v3760
        %v3793 = vunpack.c.l.b16 %v3761
        %v3794 = vunpack.c.l.b16 %v3762
        %v3795 = vunpack.c.l.b16 %v3763
        %v3796 = vunpack.c.l.b16 %v3764
        %v3797 = vunpack.c.l.b16 %v3765
        %v3798 = vunpack.c.l.b16 %v3766
        %v3799 = vpack.c.b16 %v3784, %v3783
        %v3800 = vpack.c.b16 %v3786, %v3785
        %v3801 = vpack.c.b16 %v3788, %v3787
        %v3802 = vpack.c.b16 %v3790, %v3789
        %v3803 = vpack.c.b16 %v3792, %v3791
        %v3804 = vpack.c.b16 %v3794, %v3793
        %v3805 = vpack.c.b16 %v3796, %v3795
        %v3806 = vpack.c.b16 %v3798, %v3797
        %3815 = vmatprep.subr.bf16.mxu0 0
        %3816 = vmatpush1.bf16.msra.mxu0 %v3799
        %3817 = vmatprep.subr.bf16.mxu0 0
        %3818 = vmatpush1.bf16.msra.mxu0 %v3800
        %3819 = vmatprep.subr.bf16.mxu0 0
        %3820 = vmatpush1.bf16.msra.mxu0 %v3801
        %3821 = vmatprep.subr.bf16.mxu0 0
        %3822 = vmatpush1.bf16.msra.mxu0 %v3802
        %3823 = vmatprep.subr.bf16.mxu0 0
        %3824 = vmatpush1.bf16.msra.mxu0 %v3803
        %3825 = vmatprep.subr.bf16.mxu0 0
        %3826 = vmatpush1.bf16.msra.mxu0 %v3804
        %3827 = vmatprep.subr.bf16.mxu0 0
        %3828 = vmatpush1.bf16.msra.mxu0 %v3805
        %3829 = vmatprep.subr.bf16.mxu0 0
        %3830 = vmatpush1.bf16.msra.mxu0 %v3806
        %3831 = vmatprep.subr.bf16.mxu0 0
        %3832 = vmatpush1.bf16.msra.mxu0 0
        %3833 = vmatprep.subr.bf16.mxu0 0
        %3834 = vmatpush1.bf16.msra.mxu0 0
        %3835 = vmatprep.subr.bf16.mxu0 0
        %3836 = vmatpush1.bf16.msra.mxu0 0
        %3837 = vmatprep.subr.bf16.mxu0 0
        %3838 = vmatpush1.bf16.msra.mxu0 0
        %3839 = vmatprep.subr.bf16.mxu0 0
        %3840 = vmatpush1.bf16.msra.mxu0 0
        %3841 = vmatprep.subr.bf16.mxu0 0
        %3842 = vmatpush1.bf16.msra.mxu0 0
        %3843 = vmatprep.subr.bf16.mxu0 0
        %3844 = vmatpush1.bf16.msra.mxu0 0
        %3845 = vmatprep.subr.bf16.mxu0 0
        %3846 = vmatpush1.bf16.msra.mxu0 0
        %3847 = vmatprep.mubr.bf16.mxu0 0
        %3848 = vmatmul.mubr.bf16.gmra.mrb[0].mxu0 %v3749
        %v3849 = vpop.f32.mrb[0].mxu0
        %v3850 = vadd.f32 0.0, %v3849
        %v3851 = vpop.f32.mrb[0].mxu0
        %v3852 = vpop.f32.mrb[0].mxu0
        %v3853 = vpop.f32.mrb[0].mxu0
        %3854 = vdwg.mxu0
        %v3855 = vadd.f32 %v3747, %v3850
        %v3856 = vld [vmem:[#allocation2 + $0x10] sm:$0x1]
        %v3857 = vpack.c.bf16 %v3856, %v3856
        %s3858 = scalar_lea.vmem [#allocation11], 512
        %v3859 = vld [vmem:[%s3858] sm:$0xf]
        %v3860 = vld [vmem:[%s3858 + $0x4] sm:$0xf]
        %v3861 = vld [vmem:[%s3858 + $0x8] sm:$0xf]
        %v3862 = vld [vmem:[%s3858 + $0xc] sm:$0xf]
        %v3863 = vld [vmem:[%s3858 + $0x10] sm:$0xf]
        %v3864 = vld [vmem:[%s3858 + $0x14] sm:$0xf]
        %v3865 = vld [vmem:[%s3858 + $0x18] sm:$0xf]
        %v3866 = vld [vmem:[%s3858 + $0x1c] sm:$0xf]
        %v3867 = vld [vmem:[%s3858 + $0x20] sm:$0xf]
        %v3868 = vld [vmem:[%s3858 + $0x24] sm:$0xf]
        %v3869 = vld [vmem:[%s3858 + $0x28] sm:$0xf]
        %v3870 = vld [vmem:[%s3858 + $0x2c] sm:$0xf]
        %v3871 = vld [vmem:[%s3858 + $0x30] sm:$0xf]
        %v3872 = vld [vmem:[%s3858 + $0x34] sm:$0xf]
        %v3873 = vld [vmem:[%s3858 + $0x38] sm:$0xf]
        %v3874 = vld [vmem:[%s3858 + $0x3c] sm:$0xf]
        %v3891 = vunpack.c.l.b16 %v3859
        %v3892 = vunpack.c.l.b16 %v3860
        %v3893 = vunpack.c.l.b16 %v3861
        %v3894 = vunpack.c.l.b16 %v3862
        %v3895 = vunpack.c.l.b16 %v3863
        %v3896 = vunpack.c.l.b16 %v3864
        %v3897 = vunpack.c.l.b16 %v3865
        %v3898 = vunpack.c.l.b16 %v3866
        %v3899 = vunpack.c.l.b16 %v3867
        %v3900 = vunpack.c.l.b16 %v3868
        %v3901 = vunpack.c.l.b16 %v3869
        %v3902 = vunpack.c.l.b16 %v3870
        %v3903 = vunpack.c.l.b16 %v3871
        %v3904 = vunpack.c.l.b16 %v3872
        %v3905 = vunpack.c.l.b16 %v3873
        %v3906 = vunpack.c.l.b16 %v3874
        %v3907 = vpack.c.b16 %v3892, %v3891
        %v3908 = vpack.c.b16 %v3894, %v3893
        %v3909 = vpack.c.b16 %v3896, %v3895
        %v3910 = vpack.c.b16 %v3898, %v3897
        %v3911 = vpack.c.b16 %v3900, %v3899
        %v3912 = vpack.c.b16 %v3902, %v3901
        %v3913 = vpack.c.b16 %v3904, %v3903
        %v3914 = vpack.c.b16 %v3906, %v3905
        %3923 = vmatprep.subr.bf16.mxu0 0
        %3924 = vmatpush1.bf16.msra.mxu0 %v3907
        %3925 = vmatprep.subr.bf16.mxu0 0
        %3926 = vmatpush1.bf16.msra.mxu0 %v3908
        %3927 = vmatprep.subr.bf16.mxu0 0
        %3928 = vmatpush1.bf16.msra.mxu0 %v3909
        %3929 = vmatprep.subr.bf16.mxu0 0
        %3930 = vmatpush1.bf16.msra.mxu0 %v3910
        %3931 = vmatprep.subr.bf16.mxu0 0
        %3932 = vmatpush1.bf16.msra.mxu0 %v3911
        %3933 = vmatprep.subr.bf16.mxu0 0
        %3934 = vmatpush1.bf16.msra.mxu0 %v3912
        %3935 = vmatprep.subr.bf16.mxu0 0
        %3936 = vmatpush1.bf16.msra.mxu0 %v3913
        %3937 = vmatprep.subr.bf16.mxu0 0
        %3938 = vmatpush1.bf16.msra.mxu0 %v3914
        %3939 = vmatprep.subr.bf16.mxu0 0
        %3940 = vmatpush1.bf16.msra.mxu0 0
        %3941 = vmatprep.subr.bf16.mxu0 0
        %3942 = vmatpush1.bf16.msra.mxu0 0
        %3943 = vmatprep.subr.bf16.mxu0 0
        %3944 = vmatpush1.bf16.msra.mxu0 0
        %3945 = vmatprep.subr.bf16.mxu0 0
        %3946 = vmatpush1.bf16.msra.mxu0 0
        %3947 = vmatprep.subr.bf16.mxu0 0
        %3948 = vmatpush1.bf16.msra.mxu0 0
        %3949 = vmatprep.subr.bf16.mxu0 0
        %3950 = vmatpush1.bf16.msra.mxu0 0
        %3951 = vmatprep.subr.bf16.mxu0 0
        %3952 = vmatpush1.bf16.msra.mxu0 0
        %3953 = vmatprep.subr.bf16.mxu0 0
        %3954 = vmatpush1.bf16.msra.mxu0 0
        %3955 = vmatprep.mubr.bf16.mxu0 0
        %3956 = vmatmul.mubr.bf16.gmra.mrb[0].mxu0 %v3857
        %v3957 = vpop.f32.mrb[0].mxu0
        %v3958 = vadd.f32 0.0, %v3957
        %v3959 = vpop.f32.mrb[0].mxu0
        %v3960 = vpop.f32.mrb[0].mxu0
        %v3961 = vpop.f32.mrb[0].mxu0
        %3962 = vdwg.mxu0
        %v3963 = vadd.f32 %v3855, %v3958
        %v3964 = vld [vmem:[#allocation2 + $0x11] sm:$0x1]
        %v3965 = vpack.c.bf16 %v3964, %v3964
        %s3966 = scalar_lea.vmem [#allocation11], 576
        %v3967 = vld [vmem:[%s3966] sm:$0xf]
        %v3968 = vld [vmem:[%s3966 + $0x4] sm:$0xf]
        %v3969 = vld [vmem:[%s3966 + $0x8] sm:$0xf]
        %v3970 = vld [vmem:[%s3966 + $0xc] sm:$0xf]
        %v3971 = vld [vmem:[%s3966 + $0x10] sm:$0xf]
        %v3972 = vld [vmem:[%s3966 + $0x14] sm:$0xf]
        %v3973 = vld [vmem:[%s3966 + $0x18] sm:$0xf]
        %v3974 = vld [vmem:[%s3966 + $0x1c] sm:$0xf]
        %v3975 = vld [vmem:[%s3966 + $0x20] sm:$0xf]
        %v3976 = vld [vmem:[%s3966 + $0x24] sm:$0xf]
        %v3977 = vld [vmem:[%s3966 + $0x28] sm:$0xf]
        %v3978 = vld [vmem:[%s3966 + $0x2c] sm:$0xf]
        %v3979 = vld [vmem:[%s3966 + $0x30] sm:$0xf]
        %v3980 = vld [vmem:[%s3966 + $0x34] sm:$0xf]
        %v3981 = vld [vmem:[%s3966 + $0x38] sm:$0xf]
        %v3982 = vld [vmem:[%s3966 + $0x3c] sm:$0xf]
        %v3999 = vunpack.c.l.b16 %v3967
        %v4000 = vunpack.c.l.b16 %v3968
        %v4001 = vunpack.c.l.b16 %v3969
        %v4002 = vunpack.c.l.b16 %v3970
        %v4003 = vunpack.c.l.b16 %v3971
        %v4004 = vunpack.c.l.b16 %v3972
        %v4005 = vunpack.c.l.b16 %v3973
        %v4006 = vunpack.c.l.b16 %v3974
        %v4007 = vunpack.c.l.b16 %v3975
        %v4008 = vunpack.c.l.b16 %v3976
        %v4009 = vunpack.c.l.b16 %v3977
        %v4010 = vunpack.c.l.b16 %v3978
        %v4011 = vunpack.c.l.b16 %v3979
        %v4012 = vunpack.c.l.b16 %v3980
        %v4013 = vunpack.c.l.b16 %v3981
        %v4014 = vunpack.c.l.b16 %v3982
        %v4015 = vpack.c.b16 %v4000, %v3999
        %v4016 = vpack.c.b16 %v4002, %v4001
        %v4017 = vpack.c.b16 %v4004, %v4003
        %v4018 = vpack.c.b16 %v4006, %v4005
        %v4019 = vpack.c.b16 %v4008, %v4007
        %v4020 = vpack.c.b16 %v4010, %v4009
        %v4021 = vpack.c.b16 %v4012, %v4011
        %v4022 = vpack.c.b16 %v4014, %v4013
        %4031 = vmatprep.subr.bf16.mxu0 0
        %4032 = vmatpush1.bf16.msra.mxu0 %v4015
        %4033 = vmatprep.subr.bf16.mxu0 0
        %4034 = vmatpush1.bf16.msra.mxu0 %v4016
        %4035 = vmatprep.subr.bf16.mxu0 0
        %4036 = vmatpush1.bf16.msra.mxu0 %v4017
        %4037 = vmatprep.subr.bf16.mxu0 0
        %4038 = vmatpush1.bf16.msra.mxu0 %v4018
        %4039 = vmatprep.subr.bf16.mxu0 0
        %4040 = vmatpush1.bf16.msra.mxu0 %v4019
        %4041 = vmatprep.subr.bf16.mxu0 0
        %4042 = vmatpush1.bf16.msra.mxu0 %v4020
        %4043 = vmatprep.subr.bf16.mxu0 0
        %4044 = vmatpush1.bf16.msra.mxu0 %v4021
        %4045 = vmatprep.subr.bf16.mxu0 0
        %4046 = vmatpush1.bf16.msra.mxu0 %v4022
        %4047 = vmatprep.subr.bf16.mxu0 0
        %4048 = vmatpush1.bf16.msra.mxu0 0
        %4049 = vmatprep.subr.bf16.mxu0 0
        %4050 = vmatpush1.bf16.msra.mxu0 0
        %4051 = vmatprep.subr.bf16.mxu0 0
        %4052 = vmatpush1.bf16.msra.mxu0 0
        %4053 = vmatprep.subr.bf16.mxu0 0
        %4054 = vmatpush1.bf16.msra.mxu0 0
        %4055 = vmatprep.subr.bf16.mxu0 0
        %4056 = vmatpush1.bf16.msra.mxu0 0
        %4057 = vmatprep.subr.bf16.mxu0 0
        %4058 = vmatpush1.bf16.msra.mxu0 0
        %4059 = vmatprep.subr.bf16.mxu0 0
        %4060 = vmatpush1.bf16.msra.mxu0 0
        %4061 = vmatprep.subr.bf16.mxu0 0
        %4062 = vmatpush1.bf16.msra.mxu0 0
        %4063 = vmatprep.mubr.bf16.mxu0 0
        %4064 = vmatmul.mubr.bf16.gmra.mrb[0].mxu0 %v3965
        %v4065 = vpop.f32.mrb[0].mxu0
        %v4066 = vadd.f32 0.0, %v4065
        %v4067 = vpop.f32.mrb[0].mxu0
        %v4068 = vpop.f32.mrb[0].mxu0
        %v4069 = vpop.f32.mrb[0].mxu0
        %4070 = vdwg.mxu0
        %v4071 = vadd.f32 %v3963, %v4066
        %v4072 = vld [vmem:[#allocation2 + $0x12] sm:$0x1]
        %v4073 = vpack.c.bf16 %v4072, %v4072
        %s4074 = scalar_lea.vmem [#allocation11], 640
        %v4075 = vld [vmem:[%s4074] sm:$0xf]
        %v4076 = vld [vmem:[%s4074 + $0x4] sm:$0xf]
        %v4077 = vld [vmem:[%s4074 + $0x8] sm:$0xf]
        %v4078 = vld [vmem:[%s4074 + $0xc] sm:$0xf]
        %v4079 = vld [vmem:[%s4074 + $0x10] sm:$0xf]
        %v4080 = vld [vmem:[%s4074 + $0x14] sm:$0xf]
        %v4081 = vld [vmem:[%s4074 + $0x18] sm:$0xf]
        %v4082 = vld [vmem:[%s4074 + $0x1c] sm:$0xf]
        %v4083 = vld [vmem:[%s4074 + $0x20] sm:$0xf]
        %v4084 = vld [vmem:[%s4074 + $0x24] sm:$0xf]
        %v4085 = vld [vmem:[%s4074 + $0x28] sm:$0xf]
        %v4086 = vld [vmem:[%s4074 + $0x2c] sm:$0xf]
        %v4087 = vld [vmem:[%s4074 + $0x30] sm:$0xf]
        %v4088 = vld [vmem:[%s4074 + $0x34] sm:$0xf]
        %v4089 = vld [vmem:[%s4074 + $0x38] sm:$0xf]
        %v4090 = vld [vmem:[%s4074 + $0x3c] sm:$0xf]
        %v4107 = vunpack.c.l.b16 %v4075
        %v4108 = vunpack.c.l.b16 %v4076
        %v4109 = vunpack.c.l.b16 %v4077
        %v4110 = vunpack.c.l.b16 %v4078
        %v4111 = vunpack.c.l.b16 %v4079
        %v4112 = vunpack.c.l.b16 %v4080
        %v4113 = vunpack.c.l.b16 %v4081
        %v4114 = vunpack.c.l.b16 %v4082
        %v4115 = vunpack.c.l.b16 %v4083
        %v4116 = vunpack.c.l.b16 %v4084
        %v4117 = vunpack.c.l.b16 %v4085
        %v4118 = vunpack.c.l.b16 %v4086
        %v4119 = vunpack.c.l.b16 %v4087
        %v4120 = vunpack.c.l.b16 %v4088
        %v4121 = vunpack.c.l.b16 %v4089
        %v4122 = vunpack.c.l.b16 %v4090
        %v4123 = vpack.c.b16 %v4108, %v4107
        %v4124 = vpack.c.b16 %v4110, %v4109
        %v4125 = vpack.c.b16 %v4112, %v4111
        %v4126 = vpack.c.b16 %v4114, %v4113
        %v4127 = vpack.c.b16 %v4116, %v4115
        %v4128 = vpack.c.b16 %v4118, %v4117
        %v4129 = vpack.c.b16 %v4120, %v4119
        %v4130 = vpack.c.b16 %v4122, %v4121
        %4139 = vmatprep.subr.bf16.mxu0 0
        %4140 = vmatpush1.bf16.msra.mxu0 %v4123
        %4141 = vmatprep.subr.bf16.mxu0 0
        %4142 = vmatpush1.bf16.msra.mxu0 %v4124
        %4143 = vmatprep.subr.bf16.mxu0 0
        %4144 = vmatpush1.bf16.msra.mxu0 %v4125
        %4145 = vmatprep.subr.bf16.mxu0 0
        %4146 = vmatpush1.bf16.msra.mxu0 %v4126
        %4147 = vmatprep.subr.bf16.mxu0 0
        %4148 = vmatpush1.bf16.msra.mxu0 %v4127
        %4149 = vmatprep.subr.bf16.mxu0 0
        %4150 = vmatpush1.bf16.msra.mxu0 %v4128
        %4151 = vmatprep.subr.bf16.mxu0 0
        %4152 = vmatpush1.bf16.msra.mxu0 %v4129
        %4153 = vmatprep.subr.bf16.mxu0 0
        %4154 = vmatpush1.bf16.msra.mxu0 %v4130
        %4155 = vmatprep.subr.bf16.mxu0 0
        %4156 = vmatpush1.bf16.msra.mxu0 0
        %4157 = vmatprep.subr.bf16.mxu0 0
        %4158 = vmatpush1.bf16.msra.mxu0 0
        %4159 = vmatprep.subr.bf16.mxu0 0
        %4160 = vmatpush1.bf16.msra.mxu0 0
        %4161 = vmatprep.subr.bf16.mxu0 0
        %4162 = vmatpush1.bf16.msra.mxu0 0
        %4163 = vmatprep.subr.bf16.mxu0 0
        %4164 = vmatpush1.bf16.msra.mxu0 0
        %4165 = vmatprep.subr.bf16.mxu0 0
        %4166 = vmatpush1.bf16.msra.mxu0 0
        %4167 = vmatprep.subr.bf16.mxu0 0
        %4168 = vmatpush1.bf16.msra.mxu0 0
        %4169 = vmatprep.subr.bf16.mxu0 0
        %4170 = vmatpush1.bf16.msra.mxu0 0
        %4171 = vmatprep.mubr.bf16.mxu0 0
        %4172 = vmatmul.mubr.bf16.gmra.mrb[0].mxu0 %v4073
        %v4173 = vpop.f32.mrb[0].mxu0
        %v4174 = vadd.f32 0.0, %v4173
        %v4175 = vpop.f32.mrb[0].mxu0
        %v4176 = vpop.f32.mrb[0].mxu0
        %v4177 = vpop.f32.mrb[0].mxu0
        %4178 = vdwg.mxu0
        %v4179 = vadd.f32 %v4071, %v4174
        %v4180 = vld [vmem:[#allocation2 + $0x13] sm:$0x1]
        %v4181 = vpack.c.bf16 %v4180, %v4180
        %s4182 = scalar_lea.vmem [#allocation11], 704
        %v4183 = vld [vmem:[%s4182] sm:$0xf]
        %v4184 = vld [vmem:[%s4182 + $0x4] sm:$0xf]
        %v4185 = vld [vmem:[%s4182 + $0x8] sm:$0xf]
        %v4186 = vld [vmem:[%s4182 + $0xc] sm:$0xf]
        %v4187 = vld [vmem:[%s4182 + $0x10] sm:$0xf]
        %v4188 = vld [vmem:[%s4182 + $0x14] sm:$0xf]
        %v4189 = vld [vmem:[%s4182 + $0x18] sm:$0xf]
        %v4190 = vld [vmem:[%s4182 + $0x1c] sm:$0xf]
        %v4191 = vld [vmem:[%s4182 + $0x20] sm:$0xf]
        %v4192 = vld [vmem:[%s4182 + $0x24] sm:$0xf]
        %v4193 = vld [vmem:[%s4182 + $0x28] sm:$0xf]
        %v4194 = vld [vmem:[%s4182 + $0x2c] sm:$0xf]
        %v4195 = vld [vmem:[%s4182 + $0x30] sm:$0xf]
        %v4196 = vld [vmem:[%s4182 + $0x34] sm:$0xf]
        %v4197 = vld [vmem:[%s4182 + $0x38] sm:$0xf]
        %v4198 = vld [vmem:[%s4182 + $0x3c] sm:$0xf]
        %v4215 = vunpack.c.l.b16 %v4183
        %v4216 = vunpack.c.l.b16 %v4184
        %v4217 = vunpack.c.l.b16 %v4185
        %v4218 = vunpack.c.l.b16 %v4186
        %v4219 = vunpack.c.l.b16 %v4187
        %v4220 = vunpack.c.l.b16 %v4188
        %v4221 = vunpack.c.l.b16 %v4189
        %v4222 = vunpack.c.l.b16 %v4190
        %v4223 = vunpack.c.l.b16 %v4191
        %v4224 = vunpack.c.l.b16 %v4192
        %v4225 = vunpack.c.l.b16 %v4193
        %v4226 = vunpack.c.l.b16 %v4194
        %v4227 = vunpack.c.l.b16 %v4195
        %v4228 = vunpack.c.l.b16 %v4196
        %v4229 = vunpack.c.l.b16 %v4197
        %v4230 = vunpack.c.l.b16 %v4198
        %v4231 = vpack.c.b16 %v4216, %v4215
        %v4232 = vpack.c.b16 %v4218, %v4217
        %v4233 = vpack.c.b16 %v4220, %v4219
        %v4234 = vpack.c.b16 %v4222, %v4221
        %v4235 = vpack.c.b16 %v4224, %v4223
        %v4236 = vpack.c.b16 %v4226, %v4225
        %v4237 = vpack.c.b16 %v4228, %v4227
        %v4238 = vpack.c.b16 %v4230, %v4229
        %4247 = vmatprep.subr.bf16.mxu0 0
        %4248 = vmatpush1.bf16.msra.mxu0 %v4231
        %4249 = vmatprep.subr.bf16.mxu0 0
        %4250 = vmatpush1.bf16.msra.mxu0 %v4232
        %4251 = vmatprep.subr.bf16.mxu0 0
        %4252 = vmatpush1.bf16.msra.mxu0 %v4233
        %4253 = vmatprep.subr.bf16.mxu0 0
        %4254 = vmatpush1.bf16.msra.mxu0 %v4234
        %4255 = vmatprep.subr.bf16.mxu0 0
        %4256 = vmatpush1.bf16.msra.mxu0 %v4235
        %4257 = vmatprep.subr.bf16.mxu0 0
        %4258 = vmatpush1.bf16.msra.mxu0 %v4236
        %4259 = vmatprep.subr.bf16.mxu0 0
        %4260 = vmatpush1.bf16.msra.mxu0 %v4237
        %4261 = vmatprep.subr.bf16.mxu0 0
        %4262 = vmatpush1.bf16.msra.mxu0 %v4238
        %4263 = vmatprep.subr.bf16.mxu0 0
        %4264 = vmatpush1.bf16.msra.mxu0 0
        %4265 = vmatprep.subr.bf16.mxu0 0
        %4266 = vmatpush1.bf16.msra.mxu0 0
        %4267 = vmatprep.subr.bf16.mxu0 0
        %4268 = vmatpush1.bf16.msra.mxu0 0
        %4269 = vmatprep.subr.bf16.mxu0 0
        %4270 = vmatpush1.bf16.msra.mxu0 0
        %4271 = vmatprep.subr.bf16.mxu0 0
        %4272 = vmatpush1.bf16.msra.mxu0 0
        %4273 = vmatprep.subr.bf16.mxu0 0
        %4274 = vmatpush1.bf16.msra.mxu0 0
        %4275 = vmatprep.subr.bf16.mxu0 0
        %4276 = vmatpush1.bf16.msra.mxu0 0
        %4277 = vmatprep.subr.bf16.mxu0 0
        %4278 = vmatpush1.bf16.msra.mxu0 0
        %4279 = vmatprep.mubr.bf16.mxu0 0
        %4280 = vmatmul.mubr.bf16.gmra.mrb[0].mxu0 %v4181
        %v4281 = vpop.f32.mrb[0].mxu0
        %v4282 = vadd.f32 0.0, %v4281
        %v4283 = vpop.f32.mrb[0].mxu0
        %v4284 = vpop.f32.mrb[0].mxu0
        %v4285 = vpop.f32.mrb[0].mxu0
        %4286 = vdwg.mxu0
        %v4287 = vadd.f32 %v4179, %v4282
        %v4288 = vld [vmem:[#allocation2 + $0x14] sm:$0x1]
        %v4289 = vpack.c.bf16 %v4288, %v4288
        %s4290 = scalar_lea.vmem [#allocation11], 768
        %v4291 = vld [vmem:[%s4290] sm:$0xf]
        %v4292 = vld [vmem:[%s4290 + $0x4] sm:$0xf]
        %v4293 = vld [vmem:[%s4290 + $0x8] sm:$0xf]
        %v4294 = vld [vmem:[%s4290 + $0xc] sm:$0xf]
        %v4295 = vld [vmem:[%s4290 + $0x10] sm:$0xf]
        %v4296 = vld [vmem:[%s4290 + $0x14] sm:$0xf]
        %v4297 = vld [vmem:[%s4290 + $0x18] sm:$0xf]
        %v4298 = vld [vmem:[%s4290 + $0x1c] sm:$0xf]
        %v4299 = vld [vmem:[%s4290 + $0x20] sm:$0xf]
        %v4300 = vld [vmem:[%s4290 + $0x24] sm:$0xf]
        %v4301 = vld [vmem:[%s4290 + $0x28] sm:$0xf]
        %v4302 = vld [vmem:[%s4290 + $0x2c] sm:$0xf]
        %v4303 = vld [vmem:[%s4290 + $0x30] sm:$0xf]
        %v4304 = vld [vmem:[%s4290 + $0x34] sm:$0xf]
        %v4305 = vld [vmem:[%s4290 + $0x38] sm:$0xf]
        %v4306 = vld [vmem:[%s4290 + $0x3c] sm:$0xf]
        %v4323 = vunpack.c.l.b16 %v4291
        %v4324 = vunpack.c.l.b16 %v4292
        %v4325 = vunpack.c.l.b16 %v4293
        %v4326 = vunpack.c.l.b16 %v4294
        %v4327 = vunpack.c.l.b16 %v4295
        %v4328 = vunpack.c.l.b16 %v4296
        %v4329 = vunpack.c.l.b16 %v4297
        %v4330 = vunpack.c.l.b16 %v4298
        %v4331 = vunpack.c.l.b16 %v4299
        %v4332 = vunpack.c.l.b16 %v4300
        %v4333 = vunpack.c.l.b16 %v4301
        %v4334 = vunpack.c.l.b16 %v4302
        %v4335 = vunpack.c.l.b16 %v4303
        %v4336 = vunpack.c.l.b16 %v4304
        %v4337 = vunpack.c.l.b16 %v4305
        %v4338 = vunpack.c.l.b16 %v4306
        %v4339 = vpack.c.b16 %v4324, %v4323
        %v4340 = vpack.c.b16 %v4326, %v4325
        %v4341 = vpack.c.b16 %v4328, %v4327
        %v4342 = vpack.c.b16 %v4330, %v4329
        %v4343 = vpack.c.b16 %v4332, %v4331
        %v4344 = vpack.c.b16 %v4334, %v4333
        %v4345 = vpack.c.b16 %v4336, %v4335
        %v4346 = vpack.c.b16 %v4338, %v4337
        %4355 = vmatprep.subr.bf16.mxu0 0
        %4356 = vmatpush1.bf16.msra.mxu0 %v4339
        %4357 = vmatprep.subr.bf16.mxu0 0
        %4358 = vmatpush1.bf16.msra.mxu0 %v4340
        %4359 = vmatprep.subr.bf16.mxu0 0
        %4360 = vmatpush1.bf16.msra.mxu0 %v4341
        %4361 = vmatprep.subr.bf16.mxu0 0
        %4362 = vmatpush1.bf16.msra.mxu0 %v4342
        %4363 = vmatprep.subr.bf16.mxu0 0
        %4364 = vmatpush1.bf16.msra.mxu0 %v4343
        %4365 = vmatprep.subr.bf16.mxu0 0
        %4366 = vmatpush1.bf16.msra.mxu0 %v4344
        %4367 = vmatprep.subr.bf16.mxu0 0
        %4368 = vmatpush1.bf16.msra.mxu0 %v4345
        %4369 = vmatprep.subr.bf16.mxu0 0
        %4370 = vmatpush1.bf16.msra.mxu0 %v4346
        %4371 = vmatprep.subr.bf16.mxu0 0
        %4372 = vmatpush1.bf16.msra.mxu0 0
        %4373 = vmatprep.subr.bf16.mxu0 0
        %4374 = vmatpush1.bf16.msra.mxu0 0
        %4375 = vmatprep.subr.bf16.mxu0 0
        %4376 = vmatpush1.bf16.msra.mxu0 0
        %4377 = vmatprep.subr.bf16.mxu0 0
        %4378 = vmatpush1.bf16.msra.mxu0 0
        %4379 = vmatprep.subr.bf16.mxu0 0
        %4380 = vmatpush1.bf16.msra.mxu0 0
        %4381 = vmatprep.subr.bf16.mxu0 0
        %4382 = vmatpush1.bf16.msra.mxu0 0
        %4383 = vmatprep.subr.bf16.mxu0 0
        %4384 = vmatpush1.bf16.msra.mxu0 0
        %4385 = vmatprep.subr.bf16.mxu0 0
        %4386 = vmatpush1.bf16.msra.mxu0 0
        %4387 = vmatprep.mubr.bf16.mxu0 0
        %4388 = vmatmul.mubr.bf16.gmra.mrb[0].mxu0 %v4289
        %v4389 = vpop.f32.mrb[0].mxu0
        %v4390 = vadd.f32 0.0, %v4389
        %v4391 = vpop.f32.mrb[0].mxu0
        %v4392 = vpop.f32.mrb[0].mxu0
        %v4393 = vpop.f32.mrb[0].mxu0
        %4394 = vdwg.mxu0
        %v4395 = vadd.f32 %v4287, %v4390
        %v4396 = vld [vmem:[#allocation2 + $0x15] sm:$0x1]
        %v4397 = vpack.c.bf16 %v4396, %v4396
        %s4398 = scalar_lea.vmem [#allocation11], 832
        %v4399 = vld [vmem:[%s4398] sm:$0xf]
        %v4400 = vld [vmem:[%s4398 + $0x4] sm:$0xf]
        %v4401 = vld [vmem:[%s4398 + $0x8] sm:$0xf]
        %v4402 = vld [vmem:[%s4398 + $0xc] sm:$0xf]
        %v4403 = vld [vmem:[%s4398 + $0x10] sm:$0xf]
        %v4404 = vld [vmem:[%s4398 + $0x14] sm:$0xf]
        %v4405 = vld [vmem:[%s4398 + $0x18] sm:$0xf]
        %v4406 = vld [vmem:[%s4398 + $0x1c] sm:$0xf]
        %v4407 = vld [vmem:[%s4398 + $0x20] sm:$0xf]
        %v4408 = vld [vmem:[%s4398 + $0x24] sm:$0xf]
        %v4409 = vld [vmem:[%s4398 + $0x28] sm:$0xf]
        %v4410 = vld [vmem:[%s4398 + $0x2c] sm:$0xf]
        %v4411 = vld [vmem:[%s4398 + $0x30] sm:$0xf]
        %v4412 = vld [vmem:[%s4398 + $0x34] sm:$0xf]
        %v4413 = vld [vmem:[%s4398 + $0x38] sm:$0xf]
        %v4414 = vld [vmem:[%s4398 + $0x3c] sm:$0xf]
        %v4431 = vunpack.c.l.b16 %v4399
        %v4432 = vunpack.c.l.b16 %v4400
        %v4433 = vunpack.c.l.b16 %v4401
        %v4434 = vunpack.c.l.b16 %v4402
        %v4435 = vunpack.c.l.b16 %v4403
        %v4436 = vunpack.c.l.b16 %v4404
        %v4437 = vunpack.c.l.b16 %v4405
        %v4438 = vunpack.c.l.b16 %v4406
        %v4439 = vunpack.c.l.b16 %v4407
        %v4440 = vunpack.c.l.b16 %v4408
        %v4441 = vunpack.c.l.b16 %v4409
        %v4442 = vunpack.c.l.b16 %v4410
        %v4443 = vunpack.c.l.b16 %v4411
        %v4444 = vunpack.c.l.b16 %v4412
        %v4445 = vunpack.c.l.b16 %v4413
        %v4446 = vunpack.c.l.b16 %v4414
        %v4447 = vpack.c.b16 %v4432, %v4431
        %v4448 = vpack.c.b16 %v4434, %v4433
        %v4449 = vpack.c.b16 %v4436, %v4435
        %v4450 = vpack.c.b16 %v4438, %v4437
        %v4451 = vpack.c.b16 %v4440, %v4439
        %v4452 = vpack.c.b16 %v4442, %v4441
        %v4453 = vpack.c.b16 %v4444, %v4443
        %v4454 = vpack.c.b16 %v4446, %v4445
        %4463 = vmatprep.subr.bf16.mxu0 0
        %4464 = vmatpush1.bf16.msra.mxu0 %v4447
        %4465 = vmatprep.subr.bf16.mxu0 0
        %4466 = vmatpush1.bf16.msra.mxu0 %v4448
        %4467 = vmatprep.subr.bf16.mxu0 0
        %4468 = vmatpush1.bf16.msra.mxu0 %v4449
        %4469 = vmatprep.subr.bf16.mxu0 0
        %4470 = vmatpush1.bf16.msra.mxu0 %v4450
        %4471 = vmatprep.subr.bf16.mxu0 0
        %4472 = vmatpush1.bf16.msra.mxu0 %v4451
        %4473 = vmatprep.subr.bf16.mxu0 0
        %4474 = vmatpush1.bf16.msra.mxu0 %v4452
        %4475 = vmatprep.subr.bf16.mxu0 0
        %4476 = vmatpush1.bf16.msra.mxu0 %v4453
        %4477 = vmatprep.subr.bf16.mxu0 0
        %4478 = vmatpush1.bf16.msra.mxu0 %v4454
        %4479 = vmatprep.subr.bf16.mxu0 0
        %4480 = vmatpush1.bf16.msra.mxu0 0
        %4481 = vmatprep.subr.bf16.mxu0 0
        %4482 = vmatpush1.bf16.msra.mxu0 0
        %4483 = vmatprep.subr.bf16.mxu0 0
        %4484 = vmatpush1.bf16.msra.mxu0 0
        %4485 = vmatprep.subr.bf16.mxu0 0
        %4486 = vmatpush1.bf16.msra.mxu0 0
        %4487 = vmatprep.subr.bf16.mxu0 0
        %4488 = vmatpush1.bf16.msra.mxu0 0
        %4489 = vmatprep.subr.bf16.mxu0 0
        %4490 = vmatpush1.bf16.msra.mxu0 0
        %4491 = vmatprep.subr.bf16.mxu0 0
        %4492 = vmatpush1.bf16.msra.mxu0 0
        %4493 = vmatprep.subr.bf16.mxu0 0
        %4494 = vmatpush1.bf16.msra.mxu0 0
        %4495 = vmatprep.mubr.bf16.mxu0 0
        %4496 = vmatmul.mubr.bf16.gmra.mrb[0].mxu0 %v4397
        %v4497 = vpop.f32.mrb[0].mxu0
        %v4498 = vadd.f32 0.0, %v4497
        %v4499 = vpop.f32.mrb[0].mxu0
        %v4500 = vpop.f32.mrb[0].mxu0
        %v4501 = vpop.f32.mrb[0].mxu0
        %4502 = vdwg.mxu0
        %v4503 = vadd.f32 %v4395, %v4498
        %v4504 = vld [vmem:[#allocation2 + $0x16] sm:$0x1]
        %v4505 = vpack.c.bf16 %v4504, %v4504
        %s4506 = scalar_lea.vmem [#allocation11], 896
        %v4507 = vld [vmem:[%s4506] sm:$0xf]
        %v4508 = vld [vmem:[%s4506 + $0x4] sm:$0xf]
        %v4509 = vld [vmem:[%s4506 + $0x8] sm:$0xf]
        %v4510 = vld [vmem:[%s4506 + $0xc] sm:$0xf]
        %v4511 = vld [vmem:[%s4506 + $0x10] sm:$0xf]
        %v4512 = vld [vmem:[%s4506 + $0x14] sm:$0xf]
        %v4513 = vld [vmem:[%s4506 + $0x18] sm:$0xf]
        %v4514 = vld [vmem:[%s4506 + $0x1c] sm:$0xf]
        %v4515 = vld [vmem:[%s4506 + $0x20] sm:$0xf]
        %v4516 = vld [vmem:[%s4506 + $0x24] sm:$0xf]
        %v4517 = vld [vmem:[%s4506 + $0x28] sm:$0xf]
        %v4518 = vld [vmem:[%s4506 + $0x2c] sm:$0xf]
        %v4519 = vld [vmem:[%s4506 + $0x30] sm:$0xf]
        %v4520 = vld [vmem:[%s4506 + $0x34] sm:$0xf]
        %v4521 = vld [vmem:[%s4506 + $0x38] sm:$0xf]
        %v4522 = vld [vmem:[%s4506 + $0x3c] sm:$0xf]
        %v4539 = vunpack.c.l.b16 %v4507
        %v4540 = vunpack.c.l.b16 %v4508
        %v4541 = vunpack.c.l.b16 %v4509
        %v4542 = vunpack.c.l.b16 %v4510
        %v4543 = vunpack.c.l.b16 %v4511
        %v4544 = vunpack.c.l.b16 %v4512
        %v4545 = vunpack.c.l.b16 %v4513
        %v4546 = vunpack.c.l.b16 %v4514
        %v4547 = vunpack.c.l.b16 %v4515
        %v4548 = vunpack.c.l.b16 %v4516
        %v4549 = vunpack.c.l.b16 %v4517
        %v4550 = vunpack.c.l.b16 %v4518
        %v4551 = vunpack.c.l.b16 %v4519
        %v4552 = vunpack.c.l.b16 %v4520
        %v4553 = vunpack.c.l.b16 %v4521
        %v4554 = vunpack.c.l.b16 %v4522
        %v4555 = vpack.c.b16 %v4540, %v4539
        %v4556 = vpack.c.b16 %v4542, %v4541
        %v4557 = vpack.c.b16 %v4544, %v4543
        %v4558 = vpack.c.b16 %v4546, %v4545
        %v4559 = vpack.c.b16 %v4548, %v4547
        %v4560 = vpack.c.b16 %v4550, %v4549
        %v4561 = vpack.c.b16 %v4552, %v4551
        %v4562 = vpack.c.b16 %v4554, %v4553
        %4571 = vmatprep.subr.bf16.mxu0 0
        %4572 = vmatpush1.bf16.msra.mxu0 %v4555
        %4573 = vmatprep.subr.bf16.mxu0 0
        %4574 = vmatpush1.bf16.msra.mxu0 %v4556
        %4575 = vmatprep.subr.bf16.mxu0 0
        %4576 = vmatpush1.bf16.msra.mxu0 %v4557
        %4577 = vmatprep.subr.bf16.mxu0 0
        %4578 = vmatpush1.bf16.msra.mxu0 %v4558
        %4579 = vmatprep.subr.bf16.mxu0 0
        %4580 = vmatpush1.bf16.msra.mxu0 %v4559
        %4581 = vmatprep.subr.bf16.mxu0 0
        %4582 = vmatpush1.bf16.msra.mxu0 %v4560
        %4583 = vmatprep.subr.bf16.mxu0 0
        %4584 = vmatpush1.bf16.msra.mxu0 %v4561
        %4585 = vmatprep.subr.bf16.mxu0 0
        %4586 = vmatpush1.bf16.msra.mxu0 %v4562
        %4587 = vmatprep.subr.bf16.mxu0 0
        %4588 = vmatpush1.bf16.msra.mxu0 0
        %4589 = vmatprep.subr.bf16.mxu0 0
        %4590 = vmatpush1.bf16.msra.mxu0 0
        %4591 = vmatprep.subr.bf16.mxu0 0
        %4592 = vmatpush1.bf16.msra.mxu0 0
        %4593 = vmatprep.subr.bf16.mxu0 0
        %4594 = vmatpush1.bf16.msra.mxu0 0
        %4595 = vmatprep.subr.bf16.mxu0 0
        %4596 = vmatpush1.bf16.msra.mxu0 0
        %4597 = vmatprep.subr.bf16.mxu0 0
        %4598 = vmatpush1.bf16.msra.mxu0 0
        %4599 = vmatprep.subr.bf16.mxu0 0
        %4600 = vmatpush1.bf16.msra.mxu0 0
        %4601 = vmatprep.subr.bf16.mxu0 0
        %4602 = vmatpush1.bf16.msra.mxu0 0
        %4603 = vmatprep.mubr.bf16.mxu0 0
        %4604 = vmatmul.mubr.bf16.gmra.mrb[0].mxu0 %v4505
        %v4605 = vpop.f32.mrb[0].mxu0
        %v4606 = vadd.f32 0.0, %v4605
        %v4607 = vpop.f32.mrb[0].mxu0
        %v4608 = vpop.f32.mrb[0].mxu0
        %v4609 = vpop.f32.mrb[0].mxu0
        %4610 = vdwg.mxu0
        %v4611 = vadd.f32 %v4503, %v4606
        %v4612 = vld [vmem:[#allocation2 + $0x17] sm:$0x1]
        %v4613 = vpack.c.bf16 %v4612, %v4612
        %s4614 = scalar_lea.vmem [#allocation11], 960
        %v4615 = vld [vmem:[%s4614] sm:$0xf]
        %v4616 = vld [vmem:[%s4614 + $0x4] sm:$0xf]
        %v4617 = vld [vmem:[%s4614 + $0x8] sm:$0xf]
        %v4618 = vld [vmem:[%s4614 + $0xc] sm:$0xf]
        %v4619 = vld [vmem:[%s4614 + $0x10] sm:$0xf]
        %v4620 = vld [vmem:[%s4614 + $0x14] sm:$0xf]
        %v4621 = vld [vmem:[%s4614 + $0x18] sm:$0xf]
        %v4622 = vld [vmem:[%s4614 + $0x1c] sm:$0xf]
        %v4623 = vld [vmem:[%s4614 + $0x20] sm:$0xf]
        %v4624 = vld [vmem:[%s4614 + $0x24] sm:$0xf]
        %v4625 = vld [vmem:[%s4614 + $0x28] sm:$0xf]
        %v4626 = vld [vmem:[%s4614 + $0x2c] sm:$0xf]
        %v4627 = vld [vmem:[%s4614 + $0x30] sm:$0xf]
        %v4628 = vld [vmem:[%s4614 + $0x34] sm:$0xf]
        %v4629 = vld [vmem:[%s4614 + $0x38] sm:$0xf]
        %v4630 = vld [vmem:[%s4614 + $0x3c] sm:$0xf]
        %v4647 = vunpack.c.l.b16 %v4615
        %v4648 = vunpack.c.l.b16 %v4616
        %v4649 = vunpack.c.l.b16 %v4617
        %v4650 = vunpack.c.l.b16 %v4618
        %v4651 = vunpack.c.l.b16 %v4619
        %v4652 = vunpack.c.l.b16 %v4620
        %v4653 = vunpack.c.l.b16 %v4621
        %v4654 = vunpack.c.l.b16 %v4622
        %v4655 = vunpack.c.l.b16 %v4623
        %v4656 = vunpack.c.l.b16 %v4624
        %v4657 = vunpack.c.l.b16 %v4625
        %v4658 = vunpack.c.l.b16 %v4626
        %v4659 = vunpack.c.l.b16 %v4627
        %v4660 = vunpack.c.l.b16 %v4628
        %v4661 = vunpack.c.l.b16 %v4629
        %v4662 = vunpack.c.l.b16 %v4630
        %v4663 = vpack.c.b16 %v4648, %v4647
        %v4664 = vpack.c.b16 %v4650, %v4649
        %v4665 = vpack.c.b16 %v4652, %v4651
        %v4666 = vpack.c.b16 %v4654, %v4653
        %v4667 = vpack.c.b16 %v4656, %v4655
        %v4668 = vpack.c.b16 %v4658, %v4657
        %v4669 = vpack.c.b16 %v4660, %v4659
        %v4670 = vpack.c.b16 %v4662, %v4661
        %4679 = vmatprep.subr.bf16.mxu0 0
        %4680 = vmatpush1.bf16.msra.mxu0 %v4663
        %4681 = vmatprep.subr.bf16.mxu0 0
        %4682 = vmatpush1.bf16.msra.mxu0 %v4664
        %4683 = vmatprep.subr.bf16.mxu0 0
        %4684 = vmatpush1.bf16.msra.mxu0 %v4665
        %4685 = vmatprep.subr.bf16.mxu0 0
        %4686 = vmatpush1.bf16.msra.mxu0 %v4666
        %4687 = vmatprep.subr.bf16.mxu0 0
        %4688 = vmatpush1.bf16.msra.mxu0 %v4667
        %4689 = vmatprep.subr.bf16.mxu0 0
        %4690 = vmatpush1.bf16.msra.mxu0 %v4668
        %4691 = vmatprep.subr.bf16.mxu0 0
        %4692 = vmatpush1.bf16.msra.mxu0 %v4669
        %4693 = vmatprep.subr.bf16.mxu0 0
        %4694 = vmatpush1.bf16.msra.mxu0 %v4670
        %4695 = vmatprep.subr.bf16.mxu0 0
        %4696 = vmatpush1.bf16.msra.mxu0 0
        %4697 = vmatprep.subr.bf16.mxu0 0
        %4698 = vmatpush1.bf16.msra.mxu0 0
        %4699 = vmatprep.subr.bf16.mxu0 0
        %4700 = vmatpush1.bf16.msra.mxu0 0
        %4701 = vmatprep.subr.bf16.mxu0 0
        %4702 = vmatpush1.bf16.msra.mxu0 0
        %4703 = vmatprep.subr.bf16.mxu0 0
        %4704 = vmatpush1.bf16.msra.mxu0 0
        %4705 = vmatprep.subr.bf16.mxu0 0
        %4706 = vmatpush1.bf16.msra.mxu0 0
        %4707 = vmatprep.subr.bf16.mxu0 0
        %4708 = vmatpush1.bf16.msra.mxu0 0
        %4709 = vmatprep.subr.bf16.mxu0 0
        %4710 = vmatpush1.bf16.msra.mxu0 0
        %4711 = vmatprep.mubr.bf16.mxu0 0
        %4712 = vmatmul.mubr.bf16.gmra.mrb[0].mxu0 %v4613
        %v4713 = vpop.f32.mrb[0].mxu0
        %v4714 = vadd.f32 0.0, %v4713
        %v4715 = vpop.f32.mrb[0].mxu0
        %v4716 = vpop.f32.mrb[0].mxu0
        %v4717 = vpop.f32.mrb[0].mxu0
        %4718 = vdwg.mxu0
        %v4719 = vadd.f32 %v4611, %v4714
        %v4720 = vld [vmem:[%s10] sm:$0x1]
        %v4721 = vadd.f32 %v4719, %v4720
        %v4722 = vmax.f32 %v4721, 0.0
        %v4723 = vld [vmem:[%s11] sm:$0xff]
        %v4724 = vld [vmem:[%s11 + $0x8] sm:$0xff]
        %v4725 = vld [vmem:[%s11 + $0x10] sm:$0xff]
        %v4726 = vld [vmem:[%s11 + $0x18] sm:$0xff]
        %v4727 = vld [vmem:[%s11 + $0x20] sm:$0xff]
        %v4728 = vld [vmem:[%s11 + $0x28] sm:$0xff]
        %v4729 = vld [vmem:[%s11 + $0x30] sm:$0xff]
        %v4730 = vld [vmem:[%s11 + $0x38] sm:$0xff]
        %v4731 = vld [vmem:[%s11 + $0x40] sm:$0xff]
        %v4732 = vld [vmem:[%s11 + $0x48] sm:$0xff]
        %v4733 = vld [vmem:[%s11 + $0x50] sm:$0xff]
        %v4734 = vld [vmem:[%s11 + $0x58] sm:$0xff]
        %v4735 = vld [vmem:[%s11 + $0x60] sm:$0xff]
        %v4736 = vld [vmem:[%s11 + $0x68] sm:$0xff]
        %v4737 = vld [vmem:[%s11 + $0x70] sm:$0xff]
        %v4738 = vld [vmem:[%s11 + $0x78] sm:$0xff]
        %v4739 = vld [vmem:[%s12] sm:$0x1]
        %4740 = vmatprep.subr.mxu0 0.0
        %4741 = vmatpush1.msra.mxu0 %v4723
        %4742 = vmatprep.subr.mxu0 0.0
        %4743 = vmatpush1.msra.mxu0 %v4724
        %4744 = vmatprep.subr.mxu0 0.0
        %4745 = vmatpush1.msra.mxu0 %v4725
        %4746 = vmatprep.subr.mxu0 0.0
        %4747 = vmatpush1.msra.mxu0 %v4726
        %4748 = vmatprep.subr.mxu0 0.0
        %4749 = vmatpush1.msra.mxu0 %v4727
        %4750 = vmatprep.subr.mxu0 0.0
        %4751 = vmatpush1.msra.mxu0 %v4728
        %4752 = vmatprep.subr.mxu0 0.0
        %4753 = vmatpush1.msra.mxu0 %v4729
        %4754 = vmatprep.subr.mxu0 0.0
        %4755 = vmatpush1.msra.mxu0 %v4730
        %4756 = vmatprep.subr.mxu0 0.0
        %4757 = vmatpush1.msra.mxu0 %v4731
        %4758 = vmatprep.subr.mxu0 0.0
        %4759 = vmatpush1.msra.mxu0 %v4732
        %4760 = vmatprep.subr.mxu0 0.0
        %4761 = vmatpush1.msra.mxu0 %v4733
        %4762 = vmatprep.subr.mxu0 0.0
        %4763 = vmatpush1.msra.mxu0 %v4734
        %4764 = vmatprep.subr.mxu0 0.0
        %4765 = vmatpush1.msra.mxu0 %v4735
        %4766 = vmatprep.subr.mxu0 0.0
        %4767 = vmatpush1.msra.mxu0 %v4736
        %4768 = vmatprep.subr.mxu0 0.0
        %4769 = vmatpush1.msra.mxu0 %v4737
        %4770 = vmatprep.subr.mxu0 0.0
        %4771 = vmatpush1.msra.mxu0 %v4738
        %4772 = vmatprep.subr.mxu0 0.0
        %4773 = vmatpush1.msra.mxu0 0.0
        %4774 = vmatprep.subr.mxu0 0.0
        %4775 = vmatpush1.msra.mxu0 0.0
        %4776 = vmatprep.subr.mxu0 0.0
        %4777 = vmatpush1.msra.mxu0 0.0
        %4778 = vmatprep.subr.mxu0 0.0
        %4779 = vmatpush1.msra.mxu0 0.0
        %4780 = vmatprep.subr.mxu0 0.0
        %4781 = vmatpush1.msra.mxu0 0.0
        %4782 = vmatprep.subr.mxu0 0.0
        %4783 = vmatpush1.msra.mxu0 0.0
        %4784 = vmatprep.subr.mxu0 0.0
        %4785 = vmatpush1.msra.mxu0 0.0
        %4786 = vmatprep.subr.mxu0 0.0
        %4787 = vmatpush1.msra.mxu0 0.0
        %4788 = vmatprep.subr.mxu0 0.0
        %4789 = vmatpush1.msra.mxu0 0.0
        %4790 = vmatprep.subr.mxu0 0.0
        %4791 = vmatpush1.msra.mxu0 0.0
        %4792 = vmatprep.subr.mxu0 0.0
        %4793 = vmatpush1.msra.mxu0 0.0
        %4794 = vmatprep.subr.mxu0 0.0
        %4795 = vmatpush1.msra.mxu0 0.0
        %4796 = vmatprep.subr.mxu0 0.0
        %4797 = vmatpush1.msra.mxu0 0.0
        %4798 = vmatprep.subr.mxu0 0.0
        %4799 = vmatpush1.msra.mxu0 0.0
        %4800 = vmatprep.subr.mxu0 0.0
        %4801 = vmatpush1.msra.mxu0 0.0
        %4802 = vmatprep.subr.mxu0 0.0
        %4803 = vmatpush1.msra.mxu0 0.0
        %4804 = vmatprep.mubr.f32.mxu0 0.0
        %4805 = vmatmul.mubr.f32.gmra.mrb[0].mxu0 %v4722
        %v4806 = vpop.f32.mrb[0].mxu0
        %v4807 = vadd.f32 %v4739, %v4806
        %v4808 = vpop.f32.mrb[0].mxu0
        %4809 = vdwg.mxu0
        %4810 = vst [vmem:[%s505] sm:$0x1] %v4807
        %s4811 = sand.u32 %s316, 1
        %s4812 = scalar_lea.sflag [#allocation5], %s4811
        %s4813 = sand.u32 %s316, 1
        %s4814 = scalar_lea.vmem [#allocation12], %s4813
        // Predicated region
        $region93: #{generator_b_forward.1} parent=71 // pred_check
          %p4815 = pneg %p326
        $region94: #{generator_b_forward.1} parent=71 // pred_check_branch
          %4817 = sbr.rel (%p4815) target = $region96
        $region95: #{generator_b_forward.1} parent=71 // pred_region
          %s4819 = ssub.s32 16, 16
          %4820 = vsyncadd %s4812, %s4819
          %s4821 = smul.addr %s30, 16
          %s4822 = scalar_lea.hbm %s13, %s4821
          %s4824 = sshll.u32 %s4814, 4
          %s4825 = int_to_ptr.vmem [resolvable:$true] %s4824
          %4827 = dma.vmem_to_hbm [thread:$0]  %s4825, 16, %s4822, %s4812
        $region96: #{generator_b_forward.1} parent=71 // pred_fallthru
          _
      $region72: #{generator_b_forward.1} parent=5 // pred_fallthru
        _
      %p4828 = scmp.le.s32.totalorder 2, %s25
      // Predicated region
      $region97: #{generator_b_forward.1} parent=5 // pred_check
        %p4829 = pneg %p4828
      $region98: #{generator_b_forward.1} parent=5 // pred_check_branch
        %4831 = sbr.rel (%p4829) target = $region100
      $region99: #{generator_b_forward.1} parent=5 // pred_region
        %s4832 = ssub.s32 %s25, 2
        // Predicated region
        $region101: #{generator_b_forward.1} parent=99 // pred_check
          %p4833 = pneg %p332
        $region102: #{generator_b_forward.1} parent=99 // pred_check_branch
          %4835 = sbr.rel (%p4833) target = $region104
        $region103: #{generator_b_forward.1} parent=99 // pred_region
          %s4836 = sand.u32 %s317, 1
          %s4837 = scalar_lea.sflag [#allocation5], %s4836
          %s4838 = sand.u32 %s317, 1
          %s4839 = scalar_lea.vmem [#allocation12], %s4838
          %4840 = dma.done %s4837, 16
        $region104: #{generator_b_forward.1} parent=99 // pred_fallthru
          _
      $region100: #{generator_b_forward.1} parent=5 // pred_fallthru
        _
    $region6: #{generator_b_forward.1} parent=1 // loop_footer
      %s29 = sadd.s32 1, %s25
    $region7: #{generator_b_forward.1} parent=1 // loop_footer_branch
      %24 = sbr.rel target = $region3
    $region8: #{generator_b_forward.1} parent=1 // loop_exit
      _
    %4841 = vsyncpa [#allocation4], 1
    %s4842 = scalar_lea.sflag [#allocation4], 1
    %4843 = vsyncpa %s4842, 1
    %4844 = vsyncpa [#allocation7], 1
    %4845 = vsyncpa [#allocation10], 1
    %4846 = vsyncpa [#allocation5], 1
    %s4847 = scalar_lea.sflag [#allocation5], 1
    %4848 = vsyncpa %s4847, 1

</llo_original>
